<compile_context>
chip_gen: v7x
topology: tpu7x:2x2x1
jax: 0.10.0
libtpu: 0.0.40
codegen_flags: <defaults>
</compile_context>

<pallas_src>
import functools
import math

import jax
import jax.numpy as jnp
from jax import lax
from jax.experimental import pallas as pl
from jax.experimental.pallas import tpu as pltpu

THRESH = 1.0   # LIF.thresh
DECAY = 0.5    # LIF.decay


def _lif_sumsq_kernel(x_ref, out_ref, *, n_tile, n_steps):
    """One N-tile: run the full LIF recurrence over T, emit per-step spike counts."""
    x = x_ref[...]                                    # (n_tile, T), element-major

    # Time-major relayout xt[t, n] = x[n, t] via identity @ x^T on the MXU.
    eye = (lax.broadcasted_iota(jnp.int32, (n_steps, n_steps), 0)
           == lax.broadcasted_iota(jnp.int32, (n_steps, n_steps), 1)
           ).astype(jnp.float32)
    xt = lax.dot_general(
        eye, x,
        dimension_numbers=(((1,), (1,)), ((), ())),
        preferred_element_type=jnp.float32,
        precision=lax.Precision.HIGHEST,
    )                                                 # (T, n_tile)

    lane = lax.broadcasted_iota(jnp.int32, (1, n_steps), 1)
    counts = jnp.zeros((1, n_steps), dtype=jnp.float32)
    mem = jnp.zeros((1, n_tile), dtype=jnp.float32)

    # T is a small static trip count -> unrolled loop, all slices static.
    # TODO(synk): for very large T, tile the time axis with an "arbitrary" grid dim
    # and carry `mem` in a VMEM scratch instead of fully unrolling here.
    for t in range(n_steps):
        x_t = xt[t:t + 1, :]                          # (1, n_tile), lane-dense row
        mem = mem * DECAY + x_t
        spk = (mem - THRESH) >= 0.0                   # bool spike mask
        spk_f = jnp.where(spk, 1.0, 0.0)
        cnt = jnp.sum(spk_f, axis=1, keepdims=True)   # (1, 1)  sum(spike^2) == count
        counts = counts + cnt * (lane == t).astype(jnp.float32)
        mem = jnp.where(spk, 0.0, mem)                # reset fired neurons

    out_ref[...] = counts.reshape(1, 1, n_steps)


@functools.partial(jax.jit, static_argnames=("n_tile",))
def lif_sum_of_sq(x, *, n_tile=1024):
    """LIFSumOfSq forward: x (..., T) float -> (T,) float32 spike counts per step."""
    t_steps = x.shape[-1]
    n = math.prod(x.shape[:-1])
    x2 = x.reshape(n, t_steps).astype(jnp.float32)    # free reshape, element-major

    n_blocks = pl.cdiv(n, n_tile)
    n_pad = n_blocks * n_tile
    if n_pad != n:
        # Zero-padded rows never reach the threshold -> contribute 0 spikes.
        x2 = jnp.pad(x2, ((0, n_pad - n), (0, 0)))

    kernel = functools.partial(_lif_sumsq_kernel, n_tile=n_tile, n_steps=t_steps)
    partial_counts = pl.pallas_call(
        kernel,
        out_shape=jax.ShapeDtypeStruct((n_blocks, 1, t_steps), jnp.float32),
        grid_spec=pltpu.PrefetchScalarGridSpec(
            num_scalar_prefetch=0,
            grid=(n_blocks,),
            in_specs=[pl.BlockSpec((n_tile, t_steps), lambda i: (i, 0))],
            out_specs=pl.BlockSpec((1, 1, t_steps), lambda i: (i, 0, 0)),
        ),
        compiler_params=pltpu.CompilerParams(
            dimension_semantics=("parallel",)),
    )(x2)

    return jnp.sum(partial_counts, axis=(0, 1))       # (T,)


def lif_sum_of_sq_ref(x):
    """Pure-JAX reference of LIFSumOfSq.forward (mirrors the torch loop)."""
    t_steps = x.shape[-1]
    x = x.astype(jnp.float32)
    mem = jnp.zeros(x.shape[:-1], jnp.float32)
    out = []
    for t in range(t_steps):
        mem = mem * DECAY + x[..., t]
        spk = ((mem - THRESH) >= 0.0).astype(jnp.float32)
        mem = mem * (1.0 - spk)
        out.append(jnp.sum(spk * spk))
    return jnp.stack(out, axis=-1)


if __name__ == "__main__":
    B, C, H, W, T = 2, 4, 16, 16, 8      # N = B*C*H*W = 2048 elements, T = 8 steps
    key = jax.random.PRNGKey(0)
    x = jax.random.normal(key, (B, C, H, W, T), dtype=jnp.float32) * 0.8
    # Snap inputs to bf16-representable values so the in-kernel MXU relayout is
    # bit-exact and the comparison against the pure-JAX reference is deterministic.
    x = x.astype(jnp.bfloat16).astype(jnp.float32)

    out = jax.block_until_ready(lif_sum_of_sq(x))
    ref = lif_sum_of_sq_ref(x)

    assert out.shape == (T,) and out.dtype == jnp.float32
    assert float(ref.sum()) > 0.0                      # the test actually spikes
    assert jnp.allclose(out, ref, atol=0.5, rtol=0.0), (out, ref)
    print("KERNEL_OK")
</pallas_src>

<mosaic_0001>
module attributes {stable_mosaic.version = 11 : i64} {
  func.func @_lif_sumsq_kernel(%arg0: i32, %arg1: memref<1024x8xf32, #tpu.memory_space<vmem>>, %arg2: memref<1x1x8xf32, #tpu.memory_space<vmem>>) attributes {dimension_semantics = [#tpu.dimension_semantics<parallel>], iteration_bounds = array<i64: 2>, scalar_prefetch = 0 : i64, scratch_operands = 0 : i64, tpu.core_type = #tpu.core_type<tc>, window_params = [{transform_indices = @transform_0, window_bounds = array<i64: 1024, 8>}, {transform_indices = @transform_1, window_bounds = array<i64: 1, 1, 8>}]} {
    %c0 = arith.constant 0 : index
    %c0_0 = arith.constant 0 : index
    %0 = vector.load %arg1[%c0, %c0_0] : memref<1024x8xf32, #tpu.memory_space<vmem>>, vector<1024x8xf32>
    %1 = tpu.iota {dimensions = array<i32: 0>} : vector<8x8xi32>
    %2 = tpu.iota {dimensions = array<i32: 1>} : vector<8x8xi32>
    %3 = arith.cmpi eq, %1, %2 : vector<8x8xi32>
    %4 = arith.extui %3 : vector<8x8xi1> to vector<8x8xi32>
    %5 = arith.sitofp %4 : vector<8x8xi32> to vector<8x8xf32>
    %cst = arith.constant dense<0.000000e+00> : vector<8x1024xf32>
    %6 = tpu.matmul %5, %0, %cst {dimension_numbers = #tpu.dot_dimension_numbers<[1], [1], [0], [0], [0, 0, 1, 0], [], []>, precision = #tpu.contract_precision<fp32>} : vector<8x8xf32>, vector<1024x8xf32>, vector<8x1024xf32> -> vector<8x1024xf32>
    %7 = tpu.iota {dimensions = array<i32: 1>} : vector<1x8xi32>
    %cst_1 = arith.constant 0.000000e+00 : f32
    %8 = vector.broadcast %cst_1 : f32 to vector<1x8xf32>
    %cst_2 = arith.constant 0.000000e+00 : f32
    %9 = vector.broadcast %cst_2 : f32 to vector<1x1024xf32>
    %10 = vector.extract_strided_slice %6 {offsets = [0, 0], sizes = [1, 1024], strides = [1, 1]} : vector<8x1024xf32> to vector<1x1024xf32>
    %cst_3 = arith.constant 5.000000e-01 : f32
    %11 = vector.broadcast %cst_3 : f32 to vector<1x1024xf32>
    %12 = arith.mulf %9, %11 : vector<1x1024xf32>
    %13 = arith.addf %12, %10 : vector<1x1024xf32>
    %cst_4 = arith.constant 1.000000e+00 : f32
    %14 = vector.broadcast %cst_4 : f32 to vector<1x1024xf32>
    %15 = arith.subf %13, %14 : vector<1x1024xf32>
    %cst_5 = arith.constant 0.000000e+00 : f32
    %16 = vector.broadcast %cst_5 : f32 to vector<1x1024xf32>
    %17 = arith.cmpf oge, %15, %16 : vector<1x1024xf32>
    %cst_6 = arith.constant 1.000000e+00 : f32
    %cst_7 = arith.constant 0.000000e+00 : f32
    %18 = vector.broadcast %cst_6 : f32 to vector<1x1024xf32>
    %19 = vector.broadcast %cst_7 : f32 to vector<1x1024xf32>
    %20 = arith.select %17, %18, %19 : vector<1x1024xi1>, vector<1x1024xf32>
    %cst_8 = arith.constant dense<0.000000e+00> : vector<1xf32>
    %21 = vector.multi_reduction <add>, %20, %cst_8 [1] : vector<1x1024xf32> to vector<1xf32>
    %22 = vector.shape_cast %21 : vector<1xf32> to vector<1x1xf32>
    %c0_i32 = arith.constant 0 : i32
    %23 = vector.broadcast %c0_i32 : i32 to vector<1x8xi32>
    %24 = arith.cmpi eq, %7, %23 : vector<1x8xi32>
    %25 = arith.extui %24 : vector<1x8xi1> to vector<1x8xi32>
    %26 = arith.sitofp %25 : vector<1x8xi32> to vector<1x8xf32>
    %27 = vector.broadcast %22 : vector<1x1xf32> to vector<1x8xf32>
    %28 = arith.mulf %27, %26 : vector<1x8xf32>
    %29 = arith.addf %8, %28 : vector<1x8xf32>
    %cst_9 = arith.constant 0.000000e+00 : f32
    %30 = vector.broadcast %cst_9 : f32 to vector<1x1024xf32>
    %31 = arith.select %17, %30, %13 : vector<1x1024xi1>, vector<1x1024xf32>
    %32 = vector.extract_strided_slice %6 {offsets = [1, 0], sizes = [1, 1024], strides = [1, 1]} : vector<8x1024xf32> to vector<1x1024xf32>
    %cst_10 = arith.constant 5.000000e-01 : f32
    %33 = vector.broadcast %cst_10 : f32 to vector<1x1024xf32>
    %34 = arith.mulf %31, %33 : vector<1x1024xf32>
    %35 = arith.addf %34, %32 : vector<1x1024xf32>
    %cst_11 = arith.constant 1.000000e+00 : f32
    %36 = vector.broadcast %cst_11 : f32 to vector<1x1024xf32>
    %37 = arith.subf %35, %36 : vector<1x1024xf32>
    %cst_12 = arith.constant 0.000000e+00 : f32
    %38 = vector.broadcast %cst_12 : f32 to vector<1x1024xf32>
    %39 = arith.cmpf oge, %37, %38 : vector<1x1024xf32>
    %cst_13 = arith.constant 1.000000e+00 : f32
    %cst_14 = arith.constant 0.000000e+00 : f32
    %40 = vector.broadcast %cst_13 : f32 to vector<1x1024xf32>
    %41 = vector.broadcast %cst_14 : f32 to vector<1x1024xf32>
    %42 = arith.select %39, %40, %41 : vector<1x1024xi1>, vector<1x1024xf32>
    %cst_15 = arith.constant dense<0.000000e+00> : vector<1xf32>
    %43 = vector.multi_reduction <add>, %42, %cst_15 [1] : vector<1x1024xf32> to vector<1xf32>
    %44 = vector.shape_cast %43 : vector<1xf32> to vector<1x1xf32>
    %c1_i32 = arith.constant 1 : i32
    %45 = vector.broadcast %c1_i32 : i32 to vector<1x8xi32>
    %46 = arith.cmpi eq, %7, %45 : vector<1x8xi32>
    %47 = arith.extui %46 : vector<1x8xi1> to vector<1x8xi32>
    %48 = arith.sitofp %47 : vector<1x8xi32> to vector<1x8xf32>
    %49 = vector.broadcast %44 : vector<1x1xf32> to vector<1x8xf32>
    %50 = arith.mulf %49, %48 : vector<1x8xf32>
    %51 = arith.addf %29, %50 : vector<1x8xf32>
    %cst_16 = arith.constant 0.000000e+00 : f32
    %52 = vector.broadcast %cst_16 : f32 to vector<1x1024xf32>
    %53 = arith.select %39, %52, %35 : vector<1x1024xi1>, vector<1x1024xf32>
    %54 = vector.extract_strided_slice %6 {offsets = [2, 0], sizes = [1, 1024], strides = [1, 1]} : vector<8x1024xf32> to vector<1x1024xf32>
    %cst_17 = arith.constant 5.000000e-01 : f32
    %55 = vector.broadcast %cst_17 : f32 to vector<1x1024xf32>
    %56 = arith.mulf %53, %55 : vector<1x1024xf32>
    %57 = arith.addf %56, %54 : vector<1x1024xf32>
    %cst_18 = arith.constant 1.000000e+00 : f32
    %58 = vector.broadcast %cst_18 : f32 to vector<1x1024xf32>
    %59 = arith.subf %57, %58 : vector<1x1024xf32>
    %cst_19 = arith.constant 0.000000e+00 : f32
    %60 = vector.broadcast %cst_19 : f32 to vector<1x1024xf32>
    %61 = arith.cmpf oge, %59, %60 : vector<1x1024xf32>
    %cst_20 = arith.constant 1.000000e+00 : f32
    %cst_21 = arith.constant 0.000000e+00 : f32
    %62 = vector.broadcast %cst_20 : f32 to vector<1x1024xf32>
    %63 = vector.broadcast %cst_21 : f32 to vector<1x1024xf32>
    %64 = arith.select %61, %62, %63 : vector<1x1024xi1>, vector<1x1024xf32>
    %cst_22 = arith.constant dense<0.000000e+00> : vector<1xf32>
    %65 = vector.multi_reduction <add>, %64, %cst_22 [1] : vector<1x1024xf32> to vector<1xf32>
    %66 = vector.shape_cast %65 : vector<1xf32> to vector<1x1xf32>
    %c2_i32 = arith.constant 2 : i32
    %67 = vector.broadcast %c2_i32 : i32 to vector<1x8xi32>
    %68 = arith.cmpi eq, %7, %67 : vector<1x8xi32>
    %69 = arith.extui %68 : vector<1x8xi1> to vector<1x8xi32>
    %70 = arith.sitofp %69 : vector<1x8xi32> to vector<1x8xf32>
    %71 = vector.broadcast %66 : vector<1x1xf32> to vector<1x8xf32>
    %72 = arith.mulf %71, %70 : vector<1x8xf32>
    %73 = arith.addf %51, %72 : vector<1x8xf32>
    %cst_23 = arith.constant 0.000000e+00 : f32
    %74 = vector.broadcast %cst_23 : f32 to vector<1x1024xf32>
    %75 = arith.select %61, %74, %57 : vector<1x1024xi1>, vector<1x1024xf32>
    %76 = vector.extract_strided_slice %6 {offsets = [3, 0], sizes = [1, 1024], strides = [1, 1]} : vector<8x1024xf32> to vector<1x1024xf32>
    %cst_24 = arith.constant 5.000000e-01 : f32
    %77 = vector.broadcast %cst_24 : f32 to vector<1x1024xf32>
    %78 = arith.mulf %75, %77 : vector<1x1024xf32>
    %79 = arith.addf %78, %76 : vector<1x1024xf32>
    %cst_25 = arith.constant 1.000000e+00 : f32
    %80 = vector.broadcast %cst_25 : f32 to vector<1x1024xf32>
    %81 = arith.subf %79, %80 : vector<1x1024xf32>
    %cst_26 = arith.constant 0.000000e+00 : f32
    %82 = vector.broadcast %cst_26 : f32 to vector<1x1024xf32>
    %83 = arith.cmpf oge, %81, %82 : vector<1x1024xf32>
    %cst_27 = arith.constant 1.000000e+00 : f32
    %cst_28 = arith.constant 0.000000e+00 : f32
    %84 = vector.broadcast %cst_27 : f32 to vector<1x1024xf32>
    %85 = vector.broadcast %cst_28 : f32 to vector<1x1024xf32>
    %86 = arith.select %83, %84, %85 : vector<1x1024xi1>, vector<1x1024xf32>
    %cst_29 = arith.constant dense<0.000000e+00> : vector<1xf32>
    %87 = vector.multi_reduction <add>, %86, %cst_29 [1] : vector<1x1024xf32> to vector<1xf32>
    %88 = vector.shape_cast %87 : vector<1xf32> to vector<1x1xf32>
    %c3_i32 = arith.constant 3 : i32
    %89 = vector.broadcast %c3_i32 : i32 to vector<1x8xi32>
    %90 = arith.cmpi eq, %7, %89 : vector<1x8xi32>
    %91 = arith.extui %90 : vector<1x8xi1> to vector<1x8xi32>
    %92 = arith.sitofp %91 : vector<1x8xi32> to vector<1x8xf32>
    %93 = vector.broadcast %88 : vector<1x1xf32> to vector<1x8xf32>
    %94 = arith.mulf %93, %92 : vector<1x8xf32>
    %95 = arith.addf %73, %94 : vector<1x8xf32>
    %cst_30 = arith.constant 0.000000e+00 : f32
    %96 = vector.broadcast %cst_30 : f32 to vector<1x1024xf32>
    %97 = arith.select %83, %96, %79 : vector<1x1024xi1>, vector<1x1024xf32>
    %98 = vector.extract_strided_slice %6 {offsets = [4, 0], sizes = [1, 1024], strides = [1, 1]} : vector<8x1024xf32> to vector<1x1024xf32>
    %cst_31 = arith.constant 5.000000e-01 : f32
    %99 = vector.broadcast %cst_31 : f32 to vector<1x1024xf32>
    %100 = arith.mulf %97, %99 : vector<1x1024xf32>
    %101 = arith.addf %100, %98 : vector<1x1024xf32>
    %cst_32 = arith.constant 1.000000e+00 : f32
    %102 = vector.broadcast %cst_32 : f32 to vector<1x1024xf32>
    %103 = arith.subf %101, %102 : vector<1x1024xf32>
    %cst_33 = arith.constant 0.000000e+00 : f32
    %104 = vector.broadcast %cst_33 : f32 to vector<1x1024xf32>
    %105 = arith.cmpf oge, %103, %104 : vector<1x1024xf32>
    %cst_34 = arith.constant 1.000000e+00 : f32
    %cst_35 = arith.constant 0.000000e+00 : f32
    %106 = vector.broadcast %cst_34 : f32 to vector<1x1024xf32>
    %107 = vector.broadcast %cst_35 : f32 to vector<1x1024xf32>
    %108 = arith.select %105, %106, %107 : vector<1x1024xi1>, vector<1x1024xf32>
    %cst_36 = arith.constant dense<0.000000e+00> : vector<1xf32>
    %109 = vector.multi_reduction <add>, %108, %cst_36 [1] : vector<1x1024xf32> to vector<1xf32>
    %110 = vector.shape_cast %109 : vector<1xf32> to vector<1x1xf32>
    %c4_i32 = arith.constant 4 : i32
    %111 = vector.broadcast %c4_i32 : i32 to vector<1x8xi32>
    %112 = arith.cmpi eq, %7, %111 : vector<1x8xi32>
    %113 = arith.extui %112 : vector<1x8xi1> to vector<1x8xi32>
    %114 = arith.sitofp %113 : vector<1x8xi32> to vector<1x8xf32>
    %115 = vector.broadcast %110 : vector<1x1xf32> to vector<1x8xf32>
    %116 = arith.mulf %115, %114 : vector<1x8xf32>
    %117 = arith.addf %95, %116 : vector<1x8xf32>
    %cst_37 = arith.constant 0.000000e+00 : f32
    %118 = vector.broadcast %cst_37 : f32 to vector<1x1024xf32>
    %119 = arith.select %105, %118, %101 : vector<1x1024xi1>, vector<1x1024xf32>
    %120 = vector.extract_strided_slice %6 {offsets = [5, 0], sizes = [1, 1024], strides = [1, 1]} : vector<8x1024xf32> to vector<1x1024xf32>
    %cst_38 = arith.constant 5.000000e-01 : f32
    %121 = vector.broadcast %cst_38 : f32 to vector<1x1024xf32>
    %122 = arith.mulf %119, %121 : vector<1x1024xf32>
    %123 = arith.addf %122, %120 : vector<1x1024xf32>
    %cst_39 = arith.constant 1.000000e+00 : f32
    %124 = vector.broadcast %cst_39 : f32 to vector<1x1024xf32>
    %125 = arith.subf %123, %124 : vector<1x1024xf32>
    %cst_40 = arith.constant 0.000000e+00 : f32
    %126 = vector.broadcast %cst_40 : f32 to vector<1x1024xf32>
    %127 = arith.cmpf oge, %125, %126 : vector<1x1024xf32>
    %cst_41 = arith.constant 1.000000e+00 : f32
    %cst_42 = arith.constant 0.000000e+00 : f32
    %128 = vector.broadcast %cst_41 : f32 to vector<1x1024xf32>
    %129 = vector.broadcast %cst_42 : f32 to vector<1x1024xf32>
    %130 = arith.select %127, %128, %129 : vector<1x1024xi1>, vector<1x1024xf32>
    %cst_43 = arith.constant dense<0.000000e+00> : vector<1xf32>
    %131 = vector.multi_reduction <add>, %130, %cst_43 [1] : vector<1x1024xf32> to vector<1xf32>
    %132 = vector.shape_cast %131 : vector<1xf32> to vector<1x1xf32>
    %c5_i32 = arith.constant 5 : i32
    %133 = vector.broadcast %c5_i32 : i32 to vector<1x8xi32>
    %134 = arith.cmpi eq, %7, %133 : vector<1x8xi32>
    %135 = arith.extui %134 : vector<1x8xi1> to vector<1x8xi32>
    %136 = arith.sitofp %135 : vector<1x8xi32> to vector<1x8xf32>
    %137 = vector.broadcast %132 : vector<1x1xf32> to vector<1x8xf32>
    %138 = arith.mulf %137, %136 : vector<1x8xf32>
    %139 = arith.addf %117, %138 : vector<1x8xf32>
    %cst_44 = arith.constant 0.000000e+00 : f32
    %140 = vector.broadcast %cst_44 : f32 to vector<1x1024xf32>
    %141 = arith.select %127, %140, %123 : vector<1x1024xi1>, vector<1x1024xf32>
    %142 = vector.extract_strided_slice %6 {offsets = [6, 0], sizes = [1, 1024], strides = [1, 1]} : vector<8x1024xf32> to vector<1x1024xf32>
    %cst_45 = arith.constant 5.000000e-01 : f32
    %143 = vector.broadcast %cst_45 : f32 to vector<1x1024xf32>
    %144 = arith.mulf %141, %143 : vector<1x1024xf32>
    %145 = arith.addf %144, %142 : vector<1x1024xf32>
    %cst_46 = arith.constant 1.000000e+00 : f32
    %146 = vector.broadcast %cst_46 : f32 to vector<1x1024xf32>
    %147 = arith.subf %145, %146 : vector<1x1024xf32>
    %cst_47 = arith.constant 0.000000e+00 : f32
    %148 = vector.broadcast %cst_47 : f32 to vector<1x1024xf32>
    %149 = arith.cmpf oge, %147, %148 : vector<1x1024xf32>
    %cst_48 = arith.constant 1.000000e+00 : f32
    %cst_49 = arith.constant 0.000000e+00 : f32
    %150 = vector.broadcast %cst_48 : f32 to vector<1x1024xf32>
    %151 = vector.broadcast %cst_49 : f32 to vector<1x1024xf32>
    %152 = arith.select %149, %150, %151 : vector<1x1024xi1>, vector<1x1024xf32>
    %cst_50 = arith.constant dense<0.000000e+00> : vector<1xf32>
    %153 = vector.multi_reduction <add>, %152, %cst_50 [1] : vector<1x1024xf32> to vector<1xf32>
    %154 = vector.shape_cast %153 : vector<1xf32> to vector<1x1xf32>
    %c6_i32 = arith.constant 6 : i32
    %155 = vector.broadcast %c6_i32 : i32 to vector<1x8xi32>
    %156 = arith.cmpi eq, %7, %155 : vector<1x8xi32>
    %157 = arith.extui %156 : vector<1x8xi1> to vector<1x8xi32>
    %158 = arith.sitofp %157 : vector<1x8xi32> to vector<1x8xf32>
    %159 = vector.broadcast %154 : vector<1x1xf32> to vector<1x8xf32>
    %160 = arith.mulf %159, %158 : vector<1x8xf32>
    %161 = arith.addf %139, %160 : vector<1x8xf32>
    %cst_51 = arith.constant 0.000000e+00 : f32
    %162 = vector.broadcast %cst_51 : f32 to vector<1x1024xf32>
    %163 = arith.select %149, %162, %145 : vector<1x1024xi1>, vector<1x1024xf32>
    %164 = vector.extract_strided_slice %6 {offsets = [7, 0], sizes = [1, 1024], strides = [1, 1]} : vector<8x1024xf32> to vector<1x1024xf32>
    %cst_52 = arith.constant 5.000000e-01 : f32
    %165 = vector.broadcast %cst_52 : f32 to vector<1x1024xf32>
    %166 = arith.mulf %163, %165 : vector<1x1024xf32>
    %167 = arith.addf %166, %164 : vector<1x1024xf32>
    %cst_53 = arith.constant 1.000000e+00 : f32
    %168 = vector.broadcast %cst_53 : f32 to vector<1x1024xf32>
    %169 = arith.subf %167, %168 : vector<1x1024xf32>
    %cst_54 = arith.constant 0.000000e+00 : f32
    %170 = vector.broadcast %cst_54 : f32 to vector<1x1024xf32>
    %171 = arith.cmpf oge, %169, %170 : vector<1x1024xf32>
    %cst_55 = arith.constant 1.000000e+00 : f32
    %cst_56 = arith.constant 0.000000e+00 : f32
    %172 = vector.broadcast %cst_55 : f32 to vector<1x1024xf32>
    %173 = vector.broadcast %cst_56 : f32 to vector<1x1024xf32>
    %174 = arith.select %171, %172, %173 : vector<1x1024xi1>, vector<1x1024xf32>
    %cst_57 = arith.constant dense<0.000000e+00> : vector<1xf32>
    %175 = vector.multi_reduction <add>, %174, %cst_57 [1] : vector<1x1024xf32> to vector<1xf32>
    %176 = vector.shape_cast %175 : vector<1xf32> to vector<1x1xf32>
    %c7_i32 = arith.constant 7 : i32
    %177 = vector.broadcast %c7_i32 : i32 to vector<1x8xi32>
    %178 = arith.cmpi eq, %7, %177 : vector<1x8xi32>
    %179 = arith.extui %178 : vector<1x8xi1> to vector<1x8xi32>
    %180 = arith.sitofp %179 : vector<1x8xi32> to vector<1x8xf32>
    %181 = vector.broadcast %176 : vector<1x1xf32> to vector<1x8xf32>
    %182 = arith.mulf %181, %180 : vector<1x8xf32>
    %183 = arith.addf %161, %182 : vector<1x8xf32>
    %184 = vector.shape_cast %183 : vector<1x8xf32> to vector<1x1x8xf32>
    %c0_58 = arith.constant 0 : index
    %c0_59 = arith.constant 0 : index
    %c0_60 = arith.constant 0 : index
    %185 = vector.load %arg2[%c0_58, %c0_59, %c0_60] : memref<1x1x8xf32, #tpu.memory_space<vmem>>, vector<1x1x8xf32>
    tpu.vector_store %arg2[%c0_58, %c0_59, %c0_60], %184 {strides = array<i32>} : memref<1x1x8xf32, #tpu.memory_space<vmem>>, vector<1x1x8xf32>,
    return
  }
  func.func @transform_0(%arg0: i32) -> (i32, i32) {
    %c0_i32 = arith.constant 0 : i32
    %c0_i32_0 = arith.constant 0 : i32
    return %arg0, %c0_i32 : i32, i32
  }
  func.func @transform_1(%arg0: i32) -> (i32, i32, i32) {
    %c0_i32 = arith.constant 0 : i32
    %c0_i32_0 = arith.constant 0 : i32
    %c0_i32_1 = arith.constant 0 : i32
    return %arg0, %c0_i32, %c0_i32_0 : i32, i32, i32
  }
}

</mosaic_0001>

<llo_original>
// kernel: lif_sum_of_sq.1
$region0: #{lif_sum_of_sq.1}
  #allocation0 [shape = 'u32[]', space=smem, size = 0x4, offset = 0x4, fixed_abs, tag = 'smem constant byte address 0x4 - core index']
  #allocation1 [shape = 'u32[144,128]{1,0:T(1,128)}', space=vmem, size = 0x12000, scoped, tag = 'internal scratch']
  %s0 = inlined_call_operand.vmem [shape: f32[2048,8], index: 0, kind: input, shape index: {}]
  %s1 = inlined_call_operand.vmem [shape: f32[2,1,8], index: 1, kind: output, shape index: {}]
  %s2 = sld [smem:[#allocation0]]
  $region37: #{lif_sum_of_sq.1} parent=0
    _
  %s4 = ssub.s32 1, %s2
  %s5 = scalar_select 0, %s4, %s2
  loop: start=0, step=1, limit=4
  $region2: #{lif_sum_of_sq.1} parent=0 // loop_pre_header
    _
  $region3: #{lif_sum_of_sq.1} parent=0 // loop_header
    %s7 = sphi 0, %s11
    %p8 = scmp.ge.s32.totalorder %s7, 4
    %s17 = sphi 0, %s19
    %s20 = sphi 0, %s17
    %s21 = sphi 0, %s20
    %s37 = sphi 0, %s21
    %s43 = sphi 0, %s45
    %s46 = sphi 0, %s43
    %s47 = sphi 0, %s46
    %s63 = sphi 0, %s47
  $region4: #{lif_sum_of_sq.1} parent=0 // loop_header_branch
    %10 = sbr.rel (%p8) target = $region8
  $region5: #{lif_sum_of_sq.1} parent=0 // loop_body
    %s12 = ssub.s32 %s7, 1
    %s13 = ssub.s32 %s7, 2
    %s14 = sadd.s32 %s7, 1
    %s15 = ssub.s32 %s7, %s14
    %p16 = scmp.eq.s32.totalorder %s15, 0
    %s18 = sadd.s32 %s17, 1
    %s19 = scalar_select %p16, %s17, %s18
    %p22 = pneg %p16
    %p23 = scmp.eq.s32.totalorder %s7, 1
    %p24 = por %p22, %p23
    %p25 = scmp.ne.s32.totalorder %s17, %s20
    %p26 = scmp.eq.s32.totalorder %s7, 0
    %p27 = por %p25, %p26
    %p28 = scmp.ne.s32.totalorder %s17, %s20
    %p29 = scmp.eq.s32.totalorder %s12, 1
    %p30 = por %p28, %p29
    %p31 = scmp.ne.s32.totalorder %s20, %s21
    %p32 = scmp.eq.s32.totalorder %s12, 0
    %p33 = por %p31, %p32
    %p34 = scmp.ne.s32.totalorder %s20, %s21
    %p35 = scmp.eq.s32.totalorder %s13, 1
    %p36 = por %p34, %p35
    %p38 = scmp.ne.s32.totalorder %s21, %s37
    %p39 = scmp.eq.s32.totalorder %s13, 0
    %p40 = por %p38, %p39
    %s41 = ssub.s32 %s7, %s14
    %p42 = scmp.eq.s32.totalorder %s41, 0
    %s44 = sadd.s32 %s43, 1
    %s45 = scalar_select %p42, %s43, %s44
    %p48 = pneg %p42
    %p49 = scmp.eq.s32.totalorder %s7, 1
    %p50 = por %p48, %p49
    %p51 = scmp.ne.s32.totalorder %s43, %s46
    %p52 = scmp.eq.s32.totalorder %s7, 0
    %p53 = por %p51, %p52
    %p54 = scmp.ne.s32.totalorder %s43, %s46
    %p55 = scmp.eq.s32.totalorder %s12, 1
    %p56 = por %p54, %p55
    %p57 = scmp.ne.s32.totalorder %s46, %s47
    %p58 = scmp.eq.s32.totalorder %s12, 0
    %p59 = por %p57, %p58
    %p60 = scmp.ne.s32.totalorder %s46, %s47
    %p61 = scmp.eq.s32.totalorder %s13, 1
    %p62 = por %p60, %p61
    %p64 = scmp.ne.s32.totalorder %s47, %s63
    %p65 = scmp.eq.s32.totalorder %s13, 0
    %p66 = por %p64, %p65
    %p67 = scmp.le.s32.totalorder 1, %s7
    %p68 = scmp.lt.s32.totalorder %s7, 3
    %p69 = pnand %p67, %p68
    %p70 = pneg %p69
    // Predicated region
    $region9: #{lif_sum_of_sq.1} parent=5 // pred_check
      _
    $region10: #{lif_sum_of_sq.1} parent=5 // pred_check_branch
      %72 = sbr.rel (%p69) target = $region12
    $region11: #{lif_sum_of_sq.1} parent=5 // pred_region
      %s73 = ssub.s32 %s7, 1
    $region12: #{lif_sum_of_sq.1} parent=5 // pred_fallthru
      _
    %p74 = scmp.lt.s32.totalorder %s7, 2
    // Predicated region
    $region13: #{lif_sum_of_sq.1} parent=5 // pred_check
      %p75 = pneg %p74
    $region14: #{lif_sum_of_sq.1} parent=5 // pred_check_branch
      %77 = sbr.rel (%p75) target = $region16
    $region15: #{lif_sum_of_sq.1} parent=5 // pred_region
      // Predicated region
      $region17: #{lif_sum_of_sq.1} parent=15 // pred_check
        %p78 = pneg %p27
      $region18: #{lif_sum_of_sq.1} parent=15 // pred_check_branch
        %80 = sbr.rel (%p78) target = $region20
      $region19: #{lif_sum_of_sq.1} parent=15 // pred_region
        %s81 = smul.u32 128, %s7
        %p82 = scmp.lt.s32.totalorder %s81, 255
        %s83 = scalar_select %p82, %s81, 255
        %s84 = smul.addr %s83, 8
        %s85 = scalar_lea.vmem %s0, %s84
        %s86 = smul.u32 128, %s7
      $region20: #{lif_sum_of_sq.1} parent=15 // pred_fallthru
        _
    $region16: #{lif_sum_of_sq.1} parent=5 // pred_fallthru
      _
    %p87 = scmp.le.s32.totalorder 1, %s7
    %p88 = scmp.lt.s32.totalorder %s7, 3
    %p89 = pnand %p87, %p88
    %p90 = pneg %p89
    // Predicated region
    $region21: #{lif_sum_of_sq.1} parent=5 // pred_check
      _
    $region22: #{lif_sum_of_sq.1} parent=5 // pred_check_branch
      %92 = sbr.rel (%p89) target = $region24
    $region23: #{lif_sum_of_sq.1} parent=5 // pred_region
      %s93 = ssub.s32 %s7, 1
      %s94 = smul.u32 128, %s12
      %p95 = scmp.lt.s32.totalorder %s94, 255
      %s96 = scalar_select %p95, %s94, 255
      %s97 = smul.addr %s96, 8
      %s98 = scalar_lea.vmem %s0, %s97
      %p99 = pneg %p33
      %p100 = pneg %p30
      %p101 = pneg %p59
      %p102 = pneg %p56
      %p103 = scmp.lt.s32.totalorder %s12, 1
      %s104 = scalar_select %p103, %s12, 1
      %s105 = scalar_lea.vmem %s1, %s104
      %s106 = smul.u32 128, %s12
      %p107 = scmp.lt.s32.totalorder %s106, 255
      %s108 = scalar_select %p107, %s106, 255
      %s109 = smul.addr %s108, 8
      %s110 = scalar_lea.vmem %s0, %s109
      %s111 = smul.u32 128, %s12
      %p112 = scmp.lt.s32.totalorder %s12, 1
      %s113 = scalar_select %p112, %s12, 1
      %s114 = scalar_lea.vmem %s1, %s113
      %v115 = vld [vmem:[%s110] sm:$0xff]
      %v116 = vld [vmem:[%s110 + $0x8] sm:$0xff]
      %v117 = vld [vmem:[%s110 + $0x10] sm:$0xff]
      %v118 = vld [vmem:[%s110 + $0x18] sm:$0xff]
      %v119 = vld [vmem:[%s110 + $0x20] sm:$0xff]
      %v120 = vld [vmem:[%s110 + $0x28] sm:$0xff]
      %v121 = vld [vmem:[%s110 + $0x30] sm:$0xff]
      %v122 = vld [vmem:[%s110 + $0x38] sm:$0xff]
      %v123 = vld [vmem:[%s110 + $0x40] sm:$0xff]
      %v124 = vld [vmem:[%s110 + $0x48] sm:$0xff]
      %v125 = vld [vmem:[%s110 + $0x50] sm:$0xff]
      %v126 = vld [vmem:[%s110 + $0x58] sm:$0xff]
      %v127 = vld [vmem:[%s110 + $0x60] sm:$0xff]
      %v128 = vld [vmem:[%s110 + $0x68] sm:$0xff]
      %v129 = vld [vmem:[%s110 + $0x70] sm:$0xff]
      %v130 = vld [vmem:[%s110 + $0x78] sm:$0xff]
      %v131 = vld [vmem:[%s110 + $0x80] sm:$0xff]
      %v132 = vld [vmem:[%s110 + $0x88] sm:$0xff]
      %v133 = vld [vmem:[%s110 + $0x90] sm:$0xff]
      %v134 = vld [vmem:[%s110 + $0x98] sm:$0xff]
      %v135 = vld [vmem:[%s110 + $0xa0] sm:$0xff]
      %v136 = vld [vmem:[%s110 + $0xa8] sm:$0xff]
      %v137 = vld [vmem:[%s110 + $0xb0] sm:$0xff]
      %v138 = vld [vmem:[%s110 + $0xb8] sm:$0xff]
      %v139 = vld [vmem:[%s110 + $0xc0] sm:$0xff]
      %v140 = vld [vmem:[%s110 + $0xc8] sm:$0xff]
      %v141 = vld [vmem:[%s110 + $0xd0] sm:$0xff]
      %v142 = vld [vmem:[%s110 + $0xd8] sm:$0xff]
      %v143 = vld [vmem:[%s110 + $0xe0] sm:$0xff]
      %v144 = vld [vmem:[%s110 + $0xe8] sm:$0xff]
      %v145 = vld [vmem:[%s110 + $0xf0] sm:$0xff]
      %v146 = vld [vmem:[%s110 + $0xf8] sm:$0xff]
      %v147 = vld [vmem:[%s110 + $0x100] sm:$0xff]
      %v148 = vld [vmem:[%s110 + $0x108] sm:$0xff]
      %v149 = vld [vmem:[%s110 + $0x110] sm:$0xff]
      %v150 = vld [vmem:[%s110 + $0x118] sm:$0xff]
      %v151 = vld [vmem:[%s110 + $0x120] sm:$0xff]
      %v152 = vld [vmem:[%s110 + $0x128] sm:$0xff]
      %v153 = vld [vmem:[%s110 + $0x130] sm:$0xff]
      %v154 = vld [vmem:[%s110 + $0x138] sm:$0xff]
      %v155 = vld [vmem:[%s110 + $0x140] sm:$0xff]
      %v156 = vld [vmem:[%s110 + $0x148] sm:$0xff]
      %v157 = vld [vmem:[%s110 + $0x150] sm:$0xff]
      %v158 = vld [vmem:[%s110 + $0x158] sm:$0xff]
      %v159 = vld [vmem:[%s110 + $0x160] sm:$0xff]
      %v160 = vld [vmem:[%s110 + $0x168] sm:$0xff]
      %v161 = vld [vmem:[%s110 + $0x170] sm:$0xff]
      %v162 = vld [vmem:[%s110 + $0x178] sm:$0xff]
      %v163 = vld [vmem:[%s110 + $0x180] sm:$0xff]
      %v164 = vld [vmem:[%s110 + $0x188] sm:$0xff]
      %v165 = vld [vmem:[%s110 + $0x190] sm:$0xff]
      %v166 = vld [vmem:[%s110 + $0x198] sm:$0xff]
      %v167 = vld [vmem:[%s110 + $0x1a0] sm:$0xff]
      %v168 = vld [vmem:[%s110 + $0x1a8] sm:$0xff]
      %v169 = vld [vmem:[%s110 + $0x1b0] sm:$0xff]
      %v170 = vld [vmem:[%s110 + $0x1b8] sm:$0xff]
      %v171 = vld [vmem:[%s110 + $0x1c0] sm:$0xff]
      %v172 = vld [vmem:[%s110 + $0x1c8] sm:$0xff]
      %v173 = vld [vmem:[%s110 + $0x1d0] sm:$0xff]
      %v174 = vld [vmem:[%s110 + $0x1d8] sm:$0xff]
      %v175 = vld [vmem:[%s110 + $0x1e0] sm:$0xff]
      %v176 = vld [vmem:[%s110 + $0x1e8] sm:$0xff]
      %v177 = vld [vmem:[%s110 + $0x1f0] sm:$0xff]
      %v178 = vld [vmem:[%s110 + $0x1f8] sm:$0xff]
      %v179 = vld [vmem:[%s110 + $0x200] sm:$0xff]
      %v180 = vld [vmem:[%s110 + $0x208] sm:$0xff]
      %v181 = vld [vmem:[%s110 + $0x210] sm:$0xff]
      %v182 = vld [vmem:[%s110 + $0x218] sm:$0xff]
      %v183 = vld [vmem:[%s110 + $0x220] sm:$0xff]
      %v184 = vld [vmem:[%s110 + $0x228] sm:$0xff]
      %v185 = vld [vmem:[%s110 + $0x230] sm:$0xff]
      %v186 = vld [vmem:[%s110 + $0x238] sm:$0xff]
      %v187 = vld [vmem:[%s110 + $0x240] sm:$0xff]
      %v188 = vld [vmem:[%s110 + $0x248] sm:$0xff]
      %v189 = vld [vmem:[%s110 + $0x250] sm:$0xff]
      %v190 = vld [vmem:[%s110 + $0x258] sm:$0xff]
      %v191 = vld [vmem:[%s110 + $0x260] sm:$0xff]
      %v192 = vld [vmem:[%s110 + $0x268] sm:$0xff]
      %v193 = vld [vmem:[%s110 + $0x270] sm:$0xff]
      %v194 = vld [vmem:[%s110 + $0x278] sm:$0xff]
      %v195 = vld [vmem:[%s110 + $0x280] sm:$0xff]
      %v196 = vld [vmem:[%s110 + $0x288] sm:$0xff]
      %v197 = vld [vmem:[%s110 + $0x290] sm:$0xff]
      %v198 = vld [vmem:[%s110 + $0x298] sm:$0xff]
      %v199 = vld [vmem:[%s110 + $0x2a0] sm:$0xff]
      %v200 = vld [vmem:[%s110 + $0x2a8] sm:$0xff]
      %v201 = vld [vmem:[%s110 + $0x2b0] sm:$0xff]
      %v202 = vld [vmem:[%s110 + $0x2b8] sm:$0xff]
      %v203 = vld [vmem:[%s110 + $0x2c0] sm:$0xff]
      %v204 = vld [vmem:[%s110 + $0x2c8] sm:$0xff]
      %v205 = vld [vmem:[%s110 + $0x2d0] sm:$0xff]
      %v206 = vld [vmem:[%s110 + $0x2d8] sm:$0xff]
      %v207 = vld [vmem:[%s110 + $0x2e0] sm:$0xff]
      %v208 = vld [vmem:[%s110 + $0x2e8] sm:$0xff]
      %v209 = vld [vmem:[%s110 + $0x2f0] sm:$0xff]
      %v210 = vld [vmem:[%s110 + $0x2f8] sm:$0xff]
      %v211 = vld [vmem:[%s110 + $0x300] sm:$0xff]
      %v212 = vld [vmem:[%s110 + $0x308] sm:$0xff]
      %v213 = vld [vmem:[%s110 + $0x310] sm:$0xff]
      %v214 = vld [vmem:[%s110 + $0x318] sm:$0xff]
      %v215 = vld [vmem:[%s110 + $0x320] sm:$0xff]
      %v216 = vld [vmem:[%s110 + $0x328] sm:$0xff]
      %v217 = vld [vmem:[%s110 + $0x330] sm:$0xff]
      %v218 = vld [vmem:[%s110 + $0x338] sm:$0xff]
      %v219 = vld [vmem:[%s110 + $0x340] sm:$0xff]
      %v220 = vld [vmem:[%s110 + $0x348] sm:$0xff]
      %v221 = vld [vmem:[%s110 + $0x350] sm:$0xff]
      %v222 = vld [vmem:[%s110 + $0x358] sm:$0xff]
      %v223 = vld [vmem:[%s110 + $0x360] sm:$0xff]
      %v224 = vld [vmem:[%s110 + $0x368] sm:$0xff]
      %v225 = vld [vmem:[%s110 + $0x370] sm:$0xff]
      %v226 = vld [vmem:[%s110 + $0x378] sm:$0xff]
      %v227 = vld [vmem:[%s110 + $0x380] sm:$0xff]
      %v228 = vld [vmem:[%s110 + $0x388] sm:$0xff]
      %v229 = vld [vmem:[%s110 + $0x390] sm:$0xff]
      %v230 = vld [vmem:[%s110 + $0x398] sm:$0xff]
      %v231 = vld [vmem:[%s110 + $0x3a0] sm:$0xff]
      %v232 = vld [vmem:[%s110 + $0x3a8] sm:$0xff]
      %v233 = vld [vmem:[%s110 + $0x3b0] sm:$0xff]
      %v234 = vld [vmem:[%s110 + $0x3b8] sm:$0xff]
      %v235 = vld [vmem:[%s110 + $0x3c0] sm:$0xff]
      %v236 = vld [vmem:[%s110 + $0x3c8] sm:$0xff]
      %v237 = vld [vmem:[%s110 + $0x3d0] sm:$0xff]
      %v238 = vld [vmem:[%s110 + $0x3d8] sm:$0xff]
      %v239 = vld [vmem:[%s110 + $0x3e0] sm:$0xff]
      %v240 = vld [vmem:[%s110 + $0x3e8] sm:$0xff]
      %v241 = vld [vmem:[%s110 + $0x3f0] sm:$0xff]
      %v242 = vld [vmem:[%s110 + $0x3f8] sm:$0xff]
      %v243 = vlaneseq
      %v244 = vshrl.u32 %v243, 7
      %v245 = vlaneseq
      %v246 = vand.u32 %v245, 127
      %vm247 = vcmp.eq.s32.totalorder %v244, %v246
      %v248 = vsel %vm247, 1, 0
      %v249 = vcvt.s32.f32 %v248
      %vm250 = vcmask 64512
      %v252 = vsel %vm250, %v249, 0
      %v255 = vsel %vm250, %v115, 0
      %v258 = vsel %vm250, %v116, 0
      %v261 = vsel %vm250, %v117, 0
      %v264 = vsel %vm250, %v118, 0
      %v267 = vsel %vm250, %v119, 0
      %v270 = vsel %vm250, %v120, 0
      %v273 = vsel %vm250, %v121, 0
      %v276 = vsel %vm250, %v122, 0
      %v279 = vsel %vm250, %v123, 0
      %v282 = vsel %vm250, %v124, 0
      %v285 = vsel %vm250, %v125, 0
      %v288 = vsel %vm250, %v126, 0
      %v291 = vsel %vm250, %v127, 0
      %v294 = vsel %vm250, %v128, 0
      %v297 = vsel %vm250, %v129, 0
      %v300 = vsel %vm250, %v130, 0
      %v303 = vsel %vm250, %v131, 0
      %v306 = vsel %vm250, %v132, 0
      %v309 = vsel %vm250, %v133, 0
      %v312 = vsel %vm250, %v134, 0
      %v315 = vsel %vm250, %v135, 0
      %v318 = vsel %vm250, %v136, 0
      %v321 = vsel %vm250, %v137, 0
      %v324 = vsel %vm250, %v138, 0
      %v327 = vsel %vm250, %v139, 0
      %v330 = vsel %vm250, %v140, 0
      %v333 = vsel %vm250, %v141, 0
      %v336 = vsel %vm250, %v142, 0
      %v339 = vsel %vm250, %v143, 0
      %v342 = vsel %vm250, %v144, 0
      %v345 = vsel %vm250, %v145, 0
      %v348 = vsel %vm250, %v146, 0
      %v351 = vsel %vm250, %v147, 0
      %v354 = vsel %vm250, %v148, 0
      %v357 = vsel %vm250, %v149, 0
      %v360 = vsel %vm250, %v150, 0
      %v363 = vsel %vm250, %v151, 0
      %v366 = vsel %vm250, %v152, 0
      %v369 = vsel %vm250, %v153, 0
      %v372 = vsel %vm250, %v154, 0
      %v375 = vsel %vm250, %v155, 0
      %v378 = vsel %vm250, %v156, 0
      %v381 = vsel %vm250, %v157, 0
      %v384 = vsel %vm250, %v158, 0
      %v387 = vsel %vm250, %v159, 0
      %v390 = vsel %vm250, %v160, 0
      %v393 = vsel %vm250, %v161, 0
      %v396 = vsel %vm250, %v162, 0
      %v399 = vsel %vm250, %v163, 0
      %v402 = vsel %vm250, %v164, 0
      %v405 = vsel %vm250, %v165, 0
      %v408 = vsel %vm250, %v166, 0
      %v411 = vsel %vm250, %v167, 0
      %v414 = vsel %vm250, %v168, 0
      %v417 = vsel %vm250, %v169, 0
      %v420 = vsel %vm250, %v170, 0
      %v423 = vsel %vm250, %v171, 0
      %v426 = vsel %vm250, %v172, 0
      %v429 = vsel %vm250, %v173, 0
      %v432 = vsel %vm250, %v174, 0
      %v435 = vsel %vm250, %v175, 0
      %v438 = vsel %vm250, %v176, 0
      %v441 = vsel %vm250, %v177, 0
      %v444 = vsel %vm250, %v178, 0
      %v447 = vsel %vm250, %v179, 0
      %v450 = vsel %vm250, %v180, 0
      %v453 = vsel %vm250, %v181, 0
      %v456 = vsel %vm250, %v182, 0
      %v459 = vsel %vm250, %v183, 0
      %v462 = vsel %vm250, %v184, 0
      %v465 = vsel %vm250, %v185, 0
      %v468 = vsel %vm250, %v186, 0
      %v471 = vsel %vm250, %v187, 0
      %v474 = vsel %vm250, %v188, 0
      %v477 = vsel %vm250, %v189, 0
      %v480 = vsel %vm250, %v190, 0
      %v483 = vsel %vm250, %v191, 0
      %v486 = vsel %vm250, %v192, 0
      %v489 = vsel %vm250, %v193, 0
      %v492 = vsel %vm250, %v194, 0
      %v495 = vsel %vm250, %v195, 0
      %v498 = vsel %vm250, %v196, 0
      %v501 = vsel %vm250, %v197, 0
      %v504 = vsel %vm250, %v198, 0
      %v507 = vsel %vm250, %v199, 0
      %v510 = vsel %vm250, %v200, 0
      %v513 = vsel %vm250, %v201, 0
      %v516 = vsel %vm250, %v202, 0
      %v519 = vsel %vm250, %v203, 0
      %v522 = vsel %vm250, %v204, 0
      %v525 = vsel %vm250, %v205, 0
      %v528 = vsel %vm250, %v206, 0
      %v531 = vsel %vm250, %v207, 0
      %v534 = vsel %vm250, %v208, 0
      %v537 = vsel %vm250, %v209, 0
      %v540 = vsel %vm250, %v210, 0
      %v543 = vsel %vm250, %v211, 0
      %v546 = vsel %vm250, %v212, 0
      %v549 = vsel %vm250, %v213, 0
      %v552 = vsel %vm250, %v214, 0
      %v555 = vsel %vm250, %v215, 0
      %v558 = vsel %vm250, %v216, 0
      %v561 = vsel %vm250, %v217, 0
      %v564 = vsel %vm250, %v218, 0
      %v567 = vsel %vm250, %v219, 0
      %v570 = vsel %vm250, %v220, 0
      %v573 = vsel %vm250, %v221, 0
      %v576 = vsel %vm250, %v222, 0
      %v579 = vsel %vm250, %v223, 0
      %v582 = vsel %vm250, %v224, 0
      %v585 = vsel %vm250, %v225, 0
      %v588 = vsel %vm250, %v226, 0
      %v591 = vsel %vm250, %v227, 0
      %v594 = vsel %vm250, %v228, 0
      %v597 = vsel %vm250, %v229, 0
      %v600 = vsel %vm250, %v230, 0
      %v603 = vsel %vm250, %v231, 0
      %v606 = vsel %vm250, %v232, 0
      %v609 = vsel %vm250, %v233, 0
      %v612 = vsel %vm250, %v234, 0
      %v615 = vsel %vm250, %v235, 0
      %v618 = vsel %vm250, %v236, 0
      %v621 = vsel %vm250, %v237, 0
      %v624 = vsel %vm250, %v238, 0
      %v627 = vsel %vm250, %v239, 0
      %v630 = vsel %vm250, %v240, 0
      %v633 = vsel %vm250, %v241, 0
      %v636 = vsel %vm250, %v242, 0
      %638 = vmatprep.subr.mxu0 0.0
      %v639 = vand.u32 %v255, 4294901760
      %640 = vmatpush1.xpose.msra.mxu0 %v639
      %641 = vmatprep.subr.mxu0 0.0
      %v642 = vand.u32 %v258, 4294901760
      %643 = vmatpush1.xpose.msra.mxu0 %v642
      %644 = vmatprep.subr.mxu0 0.0
      %v645 = vand.u32 %v261, 4294901760
      %646 = vmatpush1.xpose.msra.mxu0 %v645
      %647 = vmatprep.subr.mxu0 0.0
      %v648 = vand.u32 %v264, 4294901760
      %649 = vmatpush1.xpose.msra.mxu0 %v648
      %650 = vmatprep.subr.mxu0 0.0
      %v651 = vand.u32 %v267, 4294901760
      %652 = vmatpush1.xpose.msra.mxu0 %v651
      %653 = vmatprep.subr.mxu0 0.0
      %v654 = vand.u32 %v270, 4294901760
      %655 = vmatpush1.xpose.msra.mxu0 %v654
      %656 = vmatprep.subr.mxu0 0.0
      %v657 = vand.u32 %v273, 4294901760
      %658 = vmatpush1.xpose.msra.mxu0 %v657
      %659 = vmatprep.subr.mxu0 0.0
      %v660 = vand.u32 %v276, 4294901760
      %661 = vmatpush1.xpose.msra.mxu0 %v660
      %662 = vmatprep.subr.mxu0 0.0
      %v663 = vand.u32 %v279, 4294901760
      %664 = vmatpush1.xpose.msra.mxu0 %v663
      %665 = vmatprep.subr.mxu0 0.0
      %v666 = vand.u32 %v282, 4294901760
      %667 = vmatpush1.xpose.msra.mxu0 %v666
      %668 = vmatprep.subr.mxu0 0.0
      %v669 = vand.u32 %v285, 4294901760
      %670 = vmatpush1.xpose.msra.mxu0 %v669
      %671 = vmatprep.subr.mxu0 0.0
      %v672 = vand.u32 %v288, 4294901760
      %673 = vmatpush1.xpose.msra.mxu0 %v672
      %674 = vmatprep.subr.mxu0 0.0
      %v675 = vand.u32 %v291, 4294901760
      %676 = vmatpush1.xpose.msra.mxu0 %v675
      %677 = vmatprep.subr.mxu0 0.0
      %v678 = vand.u32 %v294, 4294901760
      %679 = vmatpush1.xpose.msra.mxu0 %v678
      %680 = vmatprep.subr.mxu0 0.0
      %v681 = vand.u32 %v297, 4294901760
      %682 = vmatpush1.xpose.msra.mxu0 %v681
      %683 = vmatprep.subr.mxu0 0.0
      %v684 = vand.u32 %v300, 4294901760
      %685 = vmatpush1.xpose.msra.mxu0 %v684
      %686 = vmatprep.subr.mxu0 0.0
      %v687 = vand.u32 %v303, 4294901760
      %688 = vmatpush1.xpose.msra.mxu0 %v687
      %689 = vmatprep.subr.mxu0 0.0
      %v690 = vand.u32 %v306, 4294901760
      %691 = vmatpush1.xpose.msra.mxu0 %v690
      %692 = vmatprep.subr.mxu0 0.0
      %v693 = vand.u32 %v309, 4294901760
      %694 = vmatpush1.xpose.msra.mxu0 %v693
      %695 = vmatprep.subr.mxu0 0.0
      %v696 = vand.u32 %v312, 4294901760
      %697 = vmatpush1.xpose.msra.mxu0 %v696
      %698 = vmatprep.subr.mxu0 0.0
      %v699 = vand.u32 %v315, 4294901760
      %700 = vmatpush1.xpose.msra.mxu0 %v699
      %701 = vmatprep.subr.mxu0 0.0
      %v702 = vand.u32 %v318, 4294901760
      %703 = vmatpush1.xpose.msra.mxu0 %v702
      %704 = vmatprep.subr.mxu0 0.0
      %v705 = vand.u32 %v321, 4294901760
      %706 = vmatpush1.xpose.msra.mxu0 %v705
      %707 = vmatprep.subr.mxu0 0.0
      %v708 = vand.u32 %v324, 4294901760
      %709 = vmatpush1.xpose.msra.mxu0 %v708
      %710 = vmatprep.subr.mxu0 0.0
      %v711 = vand.u32 %v327, 4294901760
      %712 = vmatpush1.xpose.msra.mxu0 %v711
      %713 = vmatprep.subr.mxu0 0.0
      %v714 = vand.u32 %v330, 4294901760
      %715 = vmatpush1.xpose.msra.mxu0 %v714
      %716 = vmatprep.subr.mxu0 0.0
      %v717 = vand.u32 %v333, 4294901760
      %718 = vmatpush1.xpose.msra.mxu0 %v717
      %719 = vmatprep.subr.mxu0 0.0
      %v720 = vand.u32 %v336, 4294901760
      %721 = vmatpush1.xpose.msra.mxu0 %v720
      %722 = vmatprep.subr.mxu0 0.0
      %v723 = vand.u32 %v339, 4294901760
      %724 = vmatpush1.xpose.msra.mxu0 %v723
      %725 = vmatprep.subr.mxu0 0.0
      %v726 = vand.u32 %v342, 4294901760
      %727 = vmatpush1.xpose.msra.mxu0 %v726
      %728 = vmatprep.subr.mxu0 0.0
      %v729 = vand.u32 %v345, 4294901760
      %730 = vmatpush1.xpose.msra.mxu0 %v729
      %731 = vmatprep.subr.mxu0 0.0
      %v732 = vand.u32 %v348, 4294901760
      %733 = vmatpush1.xpose.msra.mxu0 %v732
      %734 = vmatprep.mubr.f32.mxu0 0.0
      %v735 = vand.u32 %v252, 4294901760
      %v736 = vsub.f32 %v252, %v735
      %v737 = vand.u32 %v736, 4294901760
      %v738 = vsub.f32 %v736, %v737
      %v739 = vand.u32 %v738, 4294901760
      %740 = vmatmul.mubr.f32.gmra.mrb[0].mxu0 %v739
      %v741 = vpop.f32.mrb[0].mxu0
      %v742 = vadd.f32 0.0, %v741
      %v743 = vpop.f32.mrb[0].mxu0
      %v744 = vadd.f32 0.0, %v743
      %745 = vdwg.mxu0
      %746 = vmatprep.subr.mxu0 0.0
      %v747 = vand.u32 %v255, 4294901760
      %v748 = vsub.f32 %v255, %v747
      %v749 = vand.u32 %v748, 4294901760
      %v750 = vsub.f32 %v748, %v749
      %v751 = vand.u32 %v750, 4294901760
      %752 = vmatpush1.xpose.msra.mxu0 %v751
      %753 = vmatprep.subr.mxu0 0.0
      %v754 = vand.u32 %v258, 4294901760
      %v755 = vsub.f32 %v258, %v754
      %v756 = vand.u32 %v755, 4294901760
      %v757 = vsub.f32 %v755, %v756
      %v758 = vand.u32 %v757, 4294901760
      %759 = vmatpush1.xpose.msra.mxu0 %v758
      %760 = vmatprep.subr.mxu0 0.0
      %v761 = vand.u32 %v261, 4294901760
      %v762 = vsub.f32 %v261, %v761
      %v763 = vand.u32 %v762, 4294901760
      %v764 = vsub.f32 %v762, %v763
      %v765 = vand.u32 %v764, 4294901760
      %766 = vmatpush1.xpose.msra.mxu0 %v765
      %767 = vmatprep.subr.mxu0 0.0
      %v768 = vand.u32 %v264, 4294901760
      %v769 = vsub.f32 %v264, %v768
      %v770 = vand.u32 %v769, 4294901760
      %v771 = vsub.f32 %v769, %v770
      %v772 = vand.u32 %v771, 4294901760
      %773 = vmatpush1.xpose.msra.mxu0 %v772
      %774 = vmatprep.subr.mxu0 0.0
      %v775 = vand.u32 %v267, 4294901760
      %v776 = vsub.f32 %v267, %v775
      %v777 = vand.u32 %v776, 4294901760
      %v778 = vsub.f32 %v776, %v777
      %v779 = vand.u32 %v778, 4294901760
      %780 = vmatpush1.xpose.msra.mxu0 %v779
      %781 = vmatprep.subr.mxu0 0.0
      %v782 = vand.u32 %v270, 4294901760
      %v783 = vsub.f32 %v270, %v782
      %v784 = vand.u32 %v783, 4294901760
      %v785 = vsub.f32 %v783, %v784
      %v786 = vand.u32 %v785, 4294901760
      %787 = vmatpush1.xpose.msra.mxu0 %v786
      %788 = vmatprep.subr.mxu0 0.0
      %v789 = vand.u32 %v273, 4294901760
      %v790 = vsub.f32 %v273, %v789
      %v791 = vand.u32 %v790, 4294901760
      %v792 = vsub.f32 %v790, %v791
      %v793 = vand.u32 %v792, 4294901760
      %794 = vmatpush1.xpose.msra.mxu0 %v793
      %795 = vmatprep.subr.mxu0 0.0
      %v796 = vand.u32 %v276, 4294901760
      %v797 = vsub.f32 %v276, %v796
      %v798 = vand.u32 %v797, 4294901760
      %v799 = vsub.f32 %v797, %v798
      %v800 = vand.u32 %v799, 4294901760
      %801 = vmatpush1.xpose.msra.mxu0 %v800
      %802 = vmatprep.subr.mxu0 0.0
      %v803 = vand.u32 %v279, 4294901760
      %v804 = vsub.f32 %v279, %v803
      %v805 = vand.u32 %v804, 4294901760
      %v806 = vsub.f32 %v804, %v805
      %v807 = vand.u32 %v806, 4294901760
      %808 = vmatpush1.xpose.msra.mxu0 %v807
      %809 = vmatprep.subr.mxu0 0.0
      %v810 = vand.u32 %v282, 4294901760
      %v811 = vsub.f32 %v282, %v810
      %v812 = vand.u32 %v811, 4294901760
      %v813 = vsub.f32 %v811, %v812
      %v814 = vand.u32 %v813, 4294901760
      %815 = vmatpush1.xpose.msra.mxu0 %v814
      %816 = vmatprep.subr.mxu0 0.0
      %v817 = vand.u32 %v285, 4294901760
      %v818 = vsub.f32 %v285, %v817
      %v819 = vand.u32 %v818, 4294901760
      %v820 = vsub.f32 %v818, %v819
      %v821 = vand.u32 %v820, 4294901760
      %822 = vmatpush1.xpose.msra.mxu0 %v821
      %823 = vmatprep.subr.mxu0 0.0
      %v824 = vand.u32 %v288, 4294901760
      %v825 = vsub.f32 %v288, %v824
      %v826 = vand.u32 %v825, 4294901760
      %v827 = vsub.f32 %v825, %v826
      %v828 = vand.u32 %v827, 4294901760
      %829 = vmatpush1.xpose.msra.mxu0 %v828
      %830 = vmatprep.subr.mxu0 0.0
      %v831 = vand.u32 %v291, 4294901760
      %v832 = vsub.f32 %v291, %v831
      %v833 = vand.u32 %v832, 4294901760
      %v834 = vsub.f32 %v832, %v833
      %v835 = vand.u32 %v834, 4294901760
      %836 = vmatpush1.xpose.msra.mxu0 %v835
      %837 = vmatprep.subr.mxu0 0.0
      %v838 = vand.u32 %v294, 4294901760
      %v839 = vsub.f32 %v294, %v838
      %v840 = vand.u32 %v839, 4294901760
      %v841 = vsub.f32 %v839, %v840
      %v842 = vand.u32 %v841, 4294901760
      %843 = vmatpush1.xpose.msra.mxu0 %v842
      %844 = vmatprep.subr.mxu0 0.0
      %v845 = vand.u32 %v297, 4294901760
      %v846 = vsub.f32 %v297, %v845
      %v847 = vand.u32 %v846, 4294901760
      %v848 = vsub.f32 %v846, %v847
      %v849 = vand.u32 %v848, 4294901760
      %850 = vmatpush1.xpose.msra.mxu0 %v849
      %851 = vmatprep.subr.mxu0 0.0
      %v852 = vand.u32 %v300, 4294901760
      %v853 = vsub.f32 %v300, %v852
      %v854 = vand.u32 %v853, 4294901760
      %v855 = vsub.f32 %v853, %v854
      %v856 = vand.u32 %v855, 4294901760
      %857 = vmatpush1.xpose.msra.mxu0 %v856
      %858 = vmatprep.subr.mxu0 0.0
      %v859 = vand.u32 %v303, 4294901760
      %v860 = vsub.f32 %v303, %v859
      %v861 = vand.u32 %v860, 4294901760
      %v862 = vsub.f32 %v860, %v861
      %v863 = vand.u32 %v862, 4294901760
      %864 = vmatpush1.xpose.msra.mxu0 %v863
      %865 = vmatprep.subr.mxu0 0.0
      %v866 = vand.u32 %v306, 4294901760
      %v867 = vsub.f32 %v306, %v866
      %v868 = vand.u32 %v867, 4294901760
      %v869 = vsub.f32 %v867, %v868
      %v870 = vand.u32 %v869, 4294901760
      %871 = vmatpush1.xpose.msra.mxu0 %v870
      %872 = vmatprep.subr.mxu0 0.0
      %v873 = vand.u32 %v309, 4294901760
      %v874 = vsub.f32 %v309, %v873
      %v875 = vand.u32 %v874, 4294901760
      %v876 = vsub.f32 %v874, %v875
      %v877 = vand.u32 %v876, 4294901760
      %878 = vmatpush1.xpose.msra.mxu0 %v877
      %879 = vmatprep.subr.mxu0 0.0
      %v880 = vand.u32 %v312, 4294901760
      %v881 = vsub.f32 %v312, %v880
      %v882 = vand.u32 %v881, 4294901760
      %v883 = vsub.f32 %v881, %v882
      %v884 = vand.u32 %v883, 4294901760
      %885 = vmatpush1.xpose.msra.mxu0 %v884
      %886 = vmatprep.subr.mxu0 0.0
      %v887 = vand.u32 %v315, 4294901760
      %v888 = vsub.f32 %v315, %v887
      %v889 = vand.u32 %v888, 4294901760
      %v890 = vsub.f32 %v888, %v889
      %v891 = vand.u32 %v890, 4294901760
      %892 = vmatpush1.xpose.msra.mxu0 %v891
      %893 = vmatprep.subr.mxu0 0.0
      %v894 = vand.u32 %v318, 4294901760
      %v895 = vsub.f32 %v318, %v894
      %v896 = vand.u32 %v895, 4294901760
      %v897 = vsub.f32 %v895, %v896
      %v898 = vand.u32 %v897, 4294901760
      %899 = vmatpush1.xpose.msra.mxu0 %v898
      %900 = vmatprep.subr.mxu0 0.0
      %v901 = vand.u32 %v321, 4294901760
      %v902 = vsub.f32 %v321, %v901
      %v903 = vand.u32 %v902, 4294901760
      %v904 = vsub.f32 %v902, %v903
      %v905 = vand.u32 %v904, 4294901760
      %906 = vmatpush1.xpose.msra.mxu0 %v905
      %907 = vmatprep.subr.mxu0 0.0
      %v908 = vand.u32 %v324, 4294901760
      %v909 = vsub.f32 %v324, %v908
      %v910 = vand.u32 %v909, 4294901760
      %v911 = vsub.f32 %v909, %v910
      %v912 = vand.u32 %v911, 4294901760
      %913 = vmatpush1.xpose.msra.mxu0 %v912
      %914 = vmatprep.subr.mxu0 0.0
      %v915 = vand.u32 %v327, 4294901760
      %v916 = vsub.f32 %v327, %v915
      %v917 = vand.u32 %v916, 4294901760
      %v918 = vsub.f32 %v916, %v917
      %v919 = vand.u32 %v918, 4294901760
      %920 = vmatpush1.xpose.msra.mxu0 %v919
      %921 = vmatprep.subr.mxu0 0.0
      %v922 = vand.u32 %v330, 4294901760
      %v923 = vsub.f32 %v330, %v922
      %v924 = vand.u32 %v923, 4294901760
      %v925 = vsub.f32 %v923, %v924
      %v926 = vand.u32 %v925, 4294901760
      %927 = vmatpush1.xpose.msra.mxu0 %v926
      %928 = vmatprep.subr.mxu0 0.0
      %v929 = vand.u32 %v333, 4294901760
      %v930 = vsub.f32 %v333, %v929
      %v931 = vand.u32 %v930, 4294901760
      %v932 = vsub.f32 %v930, %v931
      %v933 = vand.u32 %v932, 4294901760
      %934 = vmatpush1.xpose.msra.mxu0 %v933
      %935 = vmatprep.subr.mxu0 0.0
      %v936 = vand.u32 %v336, 4294901760
      %v937 = vsub.f32 %v336, %v936
      %v938 = vand.u32 %v937, 4294901760
      %v939 = vsub.f32 %v937, %v938
      %v940 = vand.u32 %v939, 4294901760
      %941 = vmatpush1.xpose.msra.mxu0 %v940
      %942 = vmatprep.subr.mxu0 0.0
      %v943 = vand.u32 %v339, 4294901760
      %v944 = vsub.f32 %v339, %v943
      %v945 = vand.u32 %v944, 4294901760
      %v946 = vsub.f32 %v944, %v945
      %v947 = vand.u32 %v946, 4294901760
      %948 = vmatpush1.xpose.msra.mxu0 %v947
      %949 = vmatprep.subr.mxu0 0.0
      %v950 = vand.u32 %v342, 4294901760
      %v951 = vsub.f32 %v342, %v950
      %v952 = vand.u32 %v951, 4294901760
      %v953 = vsub.f32 %v951, %v952
      %v954 = vand.u32 %v953, 4294901760
      %955 = vmatpush1.xpose.msra.mxu0 %v954
      %956 = vmatprep.subr.mxu0 0.0
      %v957 = vand.u32 %v345, 4294901760
      %v958 = vsub.f32 %v345, %v957
      %v959 = vand.u32 %v958, 4294901760
      %v960 = vsub.f32 %v958, %v959
      %v961 = vand.u32 %v960, 4294901760
      %962 = vmatpush1.xpose.msra.mxu0 %v961
      %963 = vmatprep.subr.mxu0 0.0
      %v964 = vand.u32 %v348, 4294901760
      %v965 = vsub.f32 %v348, %v964
      %v966 = vand.u32 %v965, 4294901760
      %v967 = vsub.f32 %v965, %v966
      %v968 = vand.u32 %v967, 4294901760
      %969 = vmatpush1.xpose.msra.mxu0 %v968
      %970 = vmatprep.mubr.f32.mxu0 0.0
      %v971 = vand.u32 %v252, 4294901760
      %972 = vmatmul.mubr.f32.gmra.mrb[0].mxu0 %v971
      %v973 = vpop.f32.mrb[0].mxu0
      %v974 = vadd.f32 %v742, %v973
      %v975 = vpop.f32.mrb[0].mxu0
      %v976 = vadd.f32 %v744, %v975
      %977 = vdwg.mxu0
      %978 = vmatprep.subr.mxu0 0.0
      %v979 = vand.u32 %v255, 4294901760
      %v980 = vsub.f32 %v255, %v979
      %981 = vmatpush1.xpose.msra.mxu0 %v980
      %982 = vmatprep.subr.mxu0 0.0
      %v983 = vand.u32 %v258, 4294901760
      %v984 = vsub.f32 %v258, %v983
      %985 = vmatpush1.xpose.msra.mxu0 %v984
      %986 = vmatprep.subr.mxu0 0.0
      %v987 = vand.u32 %v261, 4294901760
      %v988 = vsub.f32 %v261, %v987
      %989 = vmatpush1.xpose.msra.mxu0 %v988
      %990 = vmatprep.subr.mxu0 0.0
      %v991 = vand.u32 %v264, 4294901760
      %v992 = vsub.f32 %v264, %v991
      %993 = vmatpush1.xpose.msra.mxu0 %v992
      %994 = vmatprep.subr.mxu0 0.0
      %v995 = vand.u32 %v267, 4294901760
      %v996 = vsub.f32 %v267, %v995
      %997 = vmatpush1.xpose.msra.mxu0 %v996
      %998 = vmatprep.subr.mxu0 0.0
      %v999 = vand.u32 %v270, 4294901760
      %v1000 = vsub.f32 %v270, %v999
      %1001 = vmatpush1.xpose.msra.mxu0 %v1000
      %1002 = vmatprep.subr.mxu0 0.0
      %v1003 = vand.u32 %v273, 4294901760
      %v1004 = vsub.f32 %v273, %v1003
      %1005 = vmatpush1.xpose.msra.mxu0 %v1004
      %1006 = vmatprep.subr.mxu0 0.0
      %v1007 = vand.u32 %v276, 4294901760
      %v1008 = vsub.f32 %v276, %v1007
      %1009 = vmatpush1.xpose.msra.mxu0 %v1008
      %1010 = vmatprep.subr.mxu0 0.0
      %v1011 = vand.u32 %v279, 4294901760
      %v1012 = vsub.f32 %v279, %v1011
      %1013 = vmatpush1.xpose.msra.mxu0 %v1012
      %1014 = vmatprep.subr.mxu0 0.0
      %v1015 = vand.u32 %v282, 4294901760
      %v1016 = vsub.f32 %v282, %v1015
      %1017 = vmatpush1.xpose.msra.mxu0 %v1016
      %1018 = vmatprep.subr.mxu0 0.0
      %v1019 = vand.u32 %v285, 4294901760
      %v1020 = vsub.f32 %v285, %v1019
      %1021 = vmatpush1.xpose.msra.mxu0 %v1020
      %1022 = vmatprep.subr.mxu0 0.0
      %v1023 = vand.u32 %v288, 4294901760
      %v1024 = vsub.f32 %v288, %v1023
      %1025 = vmatpush1.xpose.msra.mxu0 %v1024
      %1026 = vmatprep.subr.mxu0 0.0
      %v1027 = vand.u32 %v291, 4294901760
      %v1028 = vsub.f32 %v291, %v1027
      %1029 = vmatpush1.xpose.msra.mxu0 %v1028
      %1030 = vmatprep.subr.mxu0 0.0
      %v1031 = vand.u32 %v294, 4294901760
      %v1032 = vsub.f32 %v294, %v1031
      %1033 = vmatpush1.xpose.msra.mxu0 %v1032
      %1034 = vmatprep.subr.mxu0 0.0
      %v1035 = vand.u32 %v297, 4294901760
      %v1036 = vsub.f32 %v297, %v1035
      %1037 = vmatpush1.xpose.msra.mxu0 %v1036
      %1038 = vmatprep.subr.mxu0 0.0
      %v1039 = vand.u32 %v300, 4294901760
      %v1040 = vsub.f32 %v300, %v1039
      %1041 = vmatpush1.xpose.msra.mxu0 %v1040
      %1042 = vmatprep.subr.mxu0 0.0
      %v1043 = vand.u32 %v303, 4294901760
      %v1044 = vsub.f32 %v303, %v1043
      %1045 = vmatpush1.xpose.msra.mxu0 %v1044
      %1046 = vmatprep.subr.mxu0 0.0
      %v1047 = vand.u32 %v306, 4294901760
      %v1048 = vsub.f32 %v306, %v1047
      %1049 = vmatpush1.xpose.msra.mxu0 %v1048
      %1050 = vmatprep.subr.mxu0 0.0
      %v1051 = vand.u32 %v309, 4294901760
      %v1052 = vsub.f32 %v309, %v1051
      %1053 = vmatpush1.xpose.msra.mxu0 %v1052
      %1054 = vmatprep.subr.mxu0 0.0
      %v1055 = vand.u32 %v312, 4294901760
      %v1056 = vsub.f32 %v312, %v1055
      %1057 = vmatpush1.xpose.msra.mxu0 %v1056
      %1058 = vmatprep.subr.mxu0 0.0
      %v1059 = vand.u32 %v315, 4294901760
      %v1060 = vsub.f32 %v315, %v1059
      %1061 = vmatpush1.xpose.msra.mxu0 %v1060
      %1062 = vmatprep.subr.mxu0 0.0
      %v1063 = vand.u32 %v318, 4294901760
      %v1064 = vsub.f32 %v318, %v1063
      %1065 = vmatpush1.xpose.msra.mxu0 %v1064
      %1066 = vmatprep.subr.mxu0 0.0
      %v1067 = vand.u32 %v321, 4294901760
      %v1068 = vsub.f32 %v321, %v1067
      %1069 = vmatpush1.xpose.msra.mxu0 %v1068
      %1070 = vmatprep.subr.mxu0 0.0
      %v1071 = vand.u32 %v324, 4294901760
      %v1072 = vsub.f32 %v324, %v1071
      %1073 = vmatpush1.xpose.msra.mxu0 %v1072
      %1074 = vmatprep.subr.mxu0 0.0
      %v1075 = vand.u32 %v327, 4294901760
      %v1076 = vsub.f32 %v327, %v1075
      %1077 = vmatpush1.xpose.msra.mxu0 %v1076
      %1078 = vmatprep.subr.mxu0 0.0
      %v1079 = vand.u32 %v330, 4294901760
      %v1080 = vsub.f32 %v330, %v1079
      %1081 = vmatpush1.xpose.msra.mxu0 %v1080
      %1082 = vmatprep.subr.mxu0 0.0
      %v1083 = vand.u32 %v333, 4294901760
      %v1084 = vsub.f32 %v333, %v1083
      %1085 = vmatpush1.xpose.msra.mxu0 %v1084
      %1086 = vmatprep.subr.mxu0 0.0
      %v1087 = vand.u32 %v336, 4294901760
      %v1088 = vsub.f32 %v336, %v1087
      %1089 = vmatpush1.xpose.msra.mxu0 %v1088
      %1090 = vmatprep.subr.mxu0 0.0
      %v1091 = vand.u32 %v339, 4294901760
      %v1092 = vsub.f32 %v339, %v1091
      %1093 = vmatpush1.xpose.msra.mxu0 %v1092
      %1094 = vmatprep.subr.mxu0 0.0
      %v1095 = vand.u32 %v342, 4294901760
      %v1096 = vsub.f32 %v342, %v1095
      %1097 = vmatpush1.xpose.msra.mxu0 %v1096
      %1098 = vmatprep.subr.mxu0 0.0
      %v1099 = vand.u32 %v345, 4294901760
      %v1100 = vsub.f32 %v345, %v1099
      %1101 = vmatpush1.xpose.msra.mxu0 %v1100
      %1102 = vmatprep.subr.mxu0 0.0
      %v1103 = vand.u32 %v348, 4294901760
      %v1104 = vsub.f32 %v348, %v1103
      %1105 = vmatpush1.xpose.msra.mxu0 %v1104
      %1106 = vmatprep.mubr.f32.mxu0 0.0
      %v1107 = vand.u32 %v252, 4294901760
      %v1108 = vsub.f32 %v252, %v1107
      %1109 = vmatmul.mubr.f32.gmra.mrb[0].mxu0 %v1108
      %v1110 = vpop.f32.mrb[0].mxu0
      %v1111 = vadd.f32 %v974, %v1110
      %v1112 = vpop.f32.mrb[0].mxu0
      %v1113 = vadd.f32 %v976, %v1112
      %1114 = vdwg.mxu0
      %1115 = vmatprep.subr.mxu0 0.0
      %v1116 = vand.u32 %v255, 4294901760
      %1117 = vmatpush1.xpose.msra.mxu0 %v1116
      %1118 = vmatprep.subr.mxu0 0.0
      %v1119 = vand.u32 %v258, 4294901760
      %1120 = vmatpush1.xpose.msra.mxu0 %v1119
      %1121 = vmatprep.subr.mxu0 0.0
      %v1122 = vand.u32 %v261, 4294901760
      %1123 = vmatpush1.xpose.msra.mxu0 %v1122
      %1124 = vmatprep.subr.mxu0 0.0
      %v1125 = vand.u32 %v264, 4294901760
      %1126 = vmatpush1.xpose.msra.mxu0 %v1125
      %1127 = vmatprep.subr.mxu0 0.0
      %v1128 = vand.u32 %v267, 4294901760
      %1129 = vmatpush1.xpose.msra.mxu0 %v1128
      %1130 = vmatprep.subr.mxu0 0.0
      %v1131 = vand.u32 %v270, 4294901760
      %1132 = vmatpush1.xpose.msra.mxu0 %v1131
      %1133 = vmatprep.subr.mxu0 0.0
      %v1134 = vand.u32 %v273, 4294901760
      %1135 = vmatpush1.xpose.msra.mxu0 %v1134
      %1136 = vmatprep.subr.mxu0 0.0
      %v1137 = vand.u32 %v276, 4294901760
      %1138 = vmatpush1.xpose.msra.mxu0 %v1137
      %1139 = vmatprep.subr.mxu0 0.0
      %v1140 = vand.u32 %v279, 4294901760
      %1141 = vmatpush1.xpose.msra.mxu0 %v1140
      %1142 = vmatprep.subr.mxu0 0.0
      %v1143 = vand.u32 %v282, 4294901760
      %1144 = vmatpush1.xpose.msra.mxu0 %v1143
      %1145 = vmatprep.subr.mxu0 0.0
      %v1146 = vand.u32 %v285, 4294901760
      %1147 = vmatpush1.xpose.msra.mxu0 %v1146
      %1148 = vmatprep.subr.mxu0 0.0
      %v1149 = vand.u32 %v288, 4294901760
      %1150 = vmatpush1.xpose.msra.mxu0 %v1149
      %1151 = vmatprep.subr.mxu0 0.0
      %v1152 = vand.u32 %v291, 4294901760
      %1153 = vmatpush1.xpose.msra.mxu0 %v1152
      %1154 = vmatprep.subr.mxu0 0.0
      %v1155 = vand.u32 %v294, 4294901760
      %1156 = vmatpush1.xpose.msra.mxu0 %v1155
      %1157 = vmatprep.subr.mxu0 0.0
      %v1158 = vand.u32 %v297, 4294901760
      %1159 = vmatpush1.xpose.msra.mxu0 %v1158
      %1160 = vmatprep.subr.mxu0 0.0
      %v1161 = vand.u32 %v300, 4294901760
      %1162 = vmatpush1.xpose.msra.mxu0 %v1161
      %1163 = vmatprep.subr.mxu0 0.0
      %v1164 = vand.u32 %v303, 4294901760
      %1165 = vmatpush1.xpose.msra.mxu0 %v1164
      %1166 = vmatprep.subr.mxu0 0.0
      %v1167 = vand.u32 %v306, 4294901760
      %1168 = vmatpush1.xpose.msra.mxu0 %v1167
      %1169 = vmatprep.subr.mxu0 0.0
      %v1170 = vand.u32 %v309, 4294901760
      %1171 = vmatpush1.xpose.msra.mxu0 %v1170
      %1172 = vmatprep.subr.mxu0 0.0
      %v1173 = vand.u32 %v312, 4294901760
      %1174 = vmatpush1.xpose.msra.mxu0 %v1173
      %1175 = vmatprep.subr.mxu0 0.0
      %v1176 = vand.u32 %v315, 4294901760
      %1177 = vmatpush1.xpose.msra.mxu0 %v1176
      %1178 = vmatprep.subr.mxu0 0.0
      %v1179 = vand.u32 %v318, 4294901760
      %1180 = vmatpush1.xpose.msra.mxu0 %v1179
      %1181 = vmatprep.subr.mxu0 0.0
      %v1182 = vand.u32 %v321, 4294901760
      %1183 = vmatpush1.xpose.msra.mxu0 %v1182
      %1184 = vmatprep.subr.mxu0 0.0
      %v1185 = vand.u32 %v324, 4294901760
      %1186 = vmatpush1.xpose.msra.mxu0 %v1185
      %1187 = vmatprep.subr.mxu0 0.0
      %v1188 = vand.u32 %v327, 4294901760
      %1189 = vmatpush1.xpose.msra.mxu0 %v1188
      %1190 = vmatprep.subr.mxu0 0.0
      %v1191 = vand.u32 %v330, 4294901760
      %1192 = vmatpush1.xpose.msra.mxu0 %v1191
      %1193 = vmatprep.subr.mxu0 0.0
      %v1194 = vand.u32 %v333, 4294901760
      %1195 = vmatpush1.xpose.msra.mxu0 %v1194
      %1196 = vmatprep.subr.mxu0 0.0
      %v1197 = vand.u32 %v336, 4294901760
      %1198 = vmatpush1.xpose.msra.mxu0 %v1197
      %1199 = vmatprep.subr.mxu0 0.0
      %v1200 = vand.u32 %v339, 4294901760
      %1201 = vmatpush1.xpose.msra.mxu0 %v1200
      %1202 = vmatprep.subr.mxu0 0.0
      %v1203 = vand.u32 %v342, 4294901760
      %1204 = vmatpush1.xpose.msra.mxu0 %v1203
      %1205 = vmatprep.subr.mxu0 0.0
      %v1206 = vand.u32 %v345, 4294901760
      %1207 = vmatpush1.xpose.msra.mxu0 %v1206
      %1208 = vmatprep.subr.mxu0 0.0
      %v1209 = vand.u32 %v348, 4294901760
      %1210 = vmatpush1.xpose.msra.mxu0 %v1209
      %1211 = vmatprep.mubr.f32.mxu0 0.0
      %v1212 = vand.u32 %v252, 4294901760
      %v1213 = vsub.f32 %v252, %v1212
      %v1214 = vand.u32 %v1213, 4294901760
      %1215 = vmatmul.mubr.f32.gmra.mrb[0].mxu0 %v1214
      %v1216 = vpop.f32.mrb[0].mxu0
      %v1217 = vadd.f32 %v1111, %v1216
      %v1218 = vpop.f32.mrb[0].mxu0
      %v1219 = vadd.f32 %v1113, %v1218
      %1220 = vdwg.mxu0
      %1221 = vmatprep.subr.mxu0 0.0
      %v1222 = vand.u32 %v255, 4294901760
      %v1223 = vsub.f32 %v255, %v1222
      %v1224 = vand.u32 %v1223, 4294901760
      %1225 = vmatpush1.xpose.msra.mxu0 %v1224
      %1226 = vmatprep.subr.mxu0 0.0
      %v1227 = vand.u32 %v258, 4294901760
      %v1228 = vsub.f32 %v258, %v1227
      %v1229 = vand.u32 %v1228, 4294901760
      %1230 = vmatpush1.xpose.msra.mxu0 %v1229
      %1231 = vmatprep.subr.mxu0 0.0
      %v1232 = vand.u32 %v261, 4294901760
      %v1233 = vsub.f32 %v261, %v1232
      %v1234 = vand.u32 %v1233, 4294901760
      %1235 = vmatpush1.xpose.msra.mxu0 %v1234
      %1236 = vmatprep.subr.mxu0 0.0
      %v1237 = vand.u32 %v264, 4294901760
      %v1238 = vsub.f32 %v264, %v1237
      %v1239 = vand.u32 %v1238, 4294901760
      %1240 = vmatpush1.xpose.msra.mxu0 %v1239
      %1241 = vmatprep.subr.mxu0 0.0
      %v1242 = vand.u32 %v267, 4294901760
      %v1243 = vsub.f32 %v267, %v1242
      %v1244 = vand.u32 %v1243, 4294901760
      %1245 = vmatpush1.xpose.msra.mxu0 %v1244
      %1246 = vmatprep.subr.mxu0 0.0
      %v1247 = vand.u32 %v270, 4294901760
      %v1248 = vsub.f32 %v270, %v1247
      %v1249 = vand.u32 %v1248, 4294901760
      %1250 = vmatpush1.xpose.msra.mxu0 %v1249
      %1251 = vmatprep.subr.mxu0 0.0
      %v1252 = vand.u32 %v273, 4294901760
      %v1253 = vsub.f32 %v273, %v1252
      %v1254 = vand.u32 %v1253, 4294901760
      %1255 = vmatpush1.xpose.msra.mxu0 %v1254
      %1256 = vmatprep.subr.mxu0 0.0
      %v1257 = vand.u32 %v276, 4294901760
      %v1258 = vsub.f32 %v276, %v1257
      %v1259 = vand.u32 %v1258, 4294901760
      %1260 = vmatpush1.xpose.msra.mxu0 %v1259
      %1261 = vmatprep.subr.mxu0 0.0
      %v1262 = vand.u32 %v279, 4294901760
      %v1263 = vsub.f32 %v279, %v1262
      %v1264 = vand.u32 %v1263, 4294901760
      %1265 = vmatpush1.xpose.msra.mxu0 %v1264
      %1266 = vmatprep.subr.mxu0 0.0
      %v1267 = vand.u32 %v282, 4294901760
      %v1268 = vsub.f32 %v282, %v1267
      %v1269 = vand.u32 %v1268, 4294901760
      %1270 = vmatpush1.xpose.msra.mxu0 %v1269
      %1271 = vmatprep.subr.mxu0 0.0
      %v1272 = vand.u32 %v285, 4294901760
      %v1273 = vsub.f32 %v285, %v1272
      %v1274 = vand.u32 %v1273, 4294901760
      %1275 = vmatpush1.xpose.msra.mxu0 %v1274
      %1276 = vmatprep.subr.mxu0 0.0
      %v1277 = vand.u32 %v288, 4294901760
      %v1278 = vsub.f32 %v288, %v1277
      %v1279 = vand.u32 %v1278, 4294901760
      %1280 = vmatpush1.xpose.msra.mxu0 %v1279
      %1281 = vmatprep.subr.mxu0 0.0
      %v1282 = vand.u32 %v291, 4294901760
      %v1283 = vsub.f32 %v291, %v1282
      %v1284 = vand.u32 %v1283, 4294901760
      %1285 = vmatpush1.xpose.msra.mxu0 %v1284
      %1286 = vmatprep.subr.mxu0 0.0
      %v1287 = vand.u32 %v294, 4294901760
      %v1288 = vsub.f32 %v294, %v1287
      %v1289 = vand.u32 %v1288, 4294901760
      %1290 = vmatpush1.xpose.msra.mxu0 %v1289
      %1291 = vmatprep.subr.mxu0 0.0
      %v1292 = vand.u32 %v297, 4294901760
      %v1293 = vsub.f32 %v297, %v1292
      %v1294 = vand.u32 %v1293, 4294901760
      %1295 = vmatpush1.xpose.msra.mxu0 %v1294
      %1296 = vmatprep.subr.mxu0 0.0
      %v1297 = vand.u32 %v300, 4294901760
      %v1298 = vsub.f32 %v300, %v1297
      %v1299 = vand.u32 %v1298, 4294901760
      %1300 = vmatpush1.xpose.msra.mxu0 %v1299
      %1301 = vmatprep.subr.mxu0 0.0
      %v1302 = vand.u32 %v303, 4294901760
      %v1303 = vsub.f32 %v303, %v1302
      %v1304 = vand.u32 %v1303, 4294901760
      %1305 = vmatpush1.xpose.msra.mxu0 %v1304
      %1306 = vmatprep.subr.mxu0 0.0
      %v1307 = vand.u32 %v306, 4294901760
      %v1308 = vsub.f32 %v306, %v1307
      %v1309 = vand.u32 %v1308, 4294901760
      %1310 = vmatpush1.xpose.msra.mxu0 %v1309
      %1311 = vmatprep.subr.mxu0 0.0
      %v1312 = vand.u32 %v309, 4294901760
      %v1313 = vsub.f32 %v309, %v1312
      %v1314 = vand.u32 %v1313, 4294901760
      %1315 = vmatpush1.xpose.msra.mxu0 %v1314
      %1316 = vmatprep.subr.mxu0 0.0
      %v1317 = vand.u32 %v312, 4294901760
      %v1318 = vsub.f32 %v312, %v1317
      %v1319 = vand.u32 %v1318, 4294901760
      %1320 = vmatpush1.xpose.msra.mxu0 %v1319
      %1321 = vmatprep.subr.mxu0 0.0
      %v1322 = vand.u32 %v315, 4294901760
      %v1323 = vsub.f32 %v315, %v1322
      %v1324 = vand.u32 %v1323, 4294901760
      %1325 = vmatpush1.xpose.msra.mxu0 %v1324
      %1326 = vmatprep.subr.mxu0 0.0
      %v1327 = vand.u32 %v318, 4294901760
      %v1328 = vsub.f32 %v318, %v1327
      %v1329 = vand.u32 %v1328, 4294901760
      %1330 = vmatpush1.xpose.msra.mxu0 %v1329
      %1331 = vmatprep.subr.mxu0 0.0
      %v1332 = vand.u32 %v321, 4294901760
      %v1333 = vsub.f32 %v321, %v1332
      %v1334 = vand.u32 %v1333, 4294901760
      %1335 = vmatpush1.xpose.msra.mxu0 %v1334
      %1336 = vmatprep.subr.mxu0 0.0
      %v1337 = vand.u32 %v324, 4294901760
      %v1338 = vsub.f32 %v324, %v1337
      %v1339 = vand.u32 %v1338, 4294901760
      %1340 = vmatpush1.xpose.msra.mxu0 %v1339
      %1341 = vmatprep.subr.mxu0 0.0
      %v1342 = vand.u32 %v327, 4294901760
      %v1343 = vsub.f32 %v327, %v1342
      %v1344 = vand.u32 %v1343, 4294901760
      %1345 = vmatpush1.xpose.msra.mxu0 %v1344
      %1346 = vmatprep.subr.mxu0 0.0
      %v1347 = vand.u32 %v330, 4294901760
      %v1348 = vsub.f32 %v330, %v1347
      %v1349 = vand.u32 %v1348, 4294901760
      %1350 = vmatpush1.xpose.msra.mxu0 %v1349
      %1351 = vmatprep.subr.mxu0 0.0
      %v1352 = vand.u32 %v333, 4294901760
      %v1353 = vsub.f32 %v333, %v1352
      %v1354 = vand.u32 %v1353, 4294901760
      %1355 = vmatpush1.xpose.msra.mxu0 %v1354
      %1356 = vmatprep.subr.mxu0 0.0
      %v1357 = vand.u32 %v336, 4294901760
      %v1358 = vsub.f32 %v336, %v1357
      %v1359 = vand.u32 %v1358, 4294901760
      %1360 = vmatpush1.xpose.msra.mxu0 %v1359
      %1361 = vmatprep.subr.mxu0 0.0
      %v1362 = vand.u32 %v339, 4294901760
      %v1363 = vsub.f32 %v339, %v1362
      %v1364 = vand.u32 %v1363, 4294901760
      %1365 = vmatpush1.xpose.msra.mxu0 %v1364
      %1366 = vmatprep.subr.mxu0 0.0
      %v1367 = vand.u32 %v342, 4294901760
      %v1368 = vsub.f32 %v342, %v1367
      %v1369 = vand.u32 %v1368, 4294901760
      %1370 = vmatpush1.xpose.msra.mxu0 %v1369
      %1371 = vmatprep.subr.mxu0 0.0
      %v1372 = vand.u32 %v345, 4294901760
      %v1373 = vsub.f32 %v345, %v1372
      %v1374 = vand.u32 %v1373, 4294901760
      %1375 = vmatpush1.xpose.msra.mxu0 %v1374
      %1376 = vmatprep.subr.mxu0 0.0
      %v1377 = vand.u32 %v348, 4294901760
      %v1378 = vsub.f32 %v348, %v1377
      %v1379 = vand.u32 %v1378, 4294901760
      %1380 = vmatpush1.xpose.msra.mxu0 %v1379
      %1381 = vmatprep.mubr.f32.mxu0 0.0
      %v1382 = vand.u32 %v252, 4294901760
      %1383 = vmatmul.mubr.f32.gmra.mrb[0].mxu0 %v1382
      %v1384 = vpop.f32.mrb[0].mxu0
      %v1385 = vadd.f32 %v1217, %v1384
      %v1386 = vpop.f32.mrb[0].mxu0
      %v1387 = vadd.f32 %v1219, %v1386
      %1388 = vdwg.mxu0
      %1389 = vmatprep.subr.mxu0 0.0
      %v1390 = vand.u32 %v255, 4294901760
      %1391 = vmatpush1.xpose.msra.mxu0 %v1390
      %1392 = vmatprep.subr.mxu0 0.0
      %v1393 = vand.u32 %v258, 4294901760
      %1394 = vmatpush1.xpose.msra.mxu0 %v1393
      %1395 = vmatprep.subr.mxu0 0.0
      %v1396 = vand.u32 %v261, 4294901760
      %1397 = vmatpush1.xpose.msra.mxu0 %v1396
      %1398 = vmatprep.subr.mxu0 0.0
      %v1399 = vand.u32 %v264, 4294901760
      %1400 = vmatpush1.xpose.msra.mxu0 %v1399
      %1401 = vmatprep.subr.mxu0 0.0
      %v1402 = vand.u32 %v267, 4294901760
      %1403 = vmatpush1.xpose.msra.mxu0 %v1402
      %1404 = vmatprep.subr.mxu0 0.0
      %v1405 = vand.u32 %v270, 4294901760
      %1406 = vmatpush1.xpose.msra.mxu0 %v1405
      %1407 = vmatprep.subr.mxu0 0.0
      %v1408 = vand.u32 %v273, 4294901760
      %1409 = vmatpush1.xpose.msra.mxu0 %v1408
      %1410 = vmatprep.subr.mxu0 0.0
      %v1411 = vand.u32 %v276, 4294901760
      %1412 = vmatpush1.xpose.msra.mxu0 %v1411
      %1413 = vmatprep.subr.mxu0 0.0
      %v1414 = vand.u32 %v279, 4294901760
      %1415 = vmatpush1.xpose.msra.mxu0 %v1414
      %1416 = vmatprep.subr.mxu0 0.0
      %v1417 = vand.u32 %v282, 4294901760
      %1418 = vmatpush1.xpose.msra.mxu0 %v1417
      %1419 = vmatprep.subr.mxu0 0.0
      %v1420 = vand.u32 %v285, 4294901760
      %1421 = vmatpush1.xpose.msra.mxu0 %v1420
      %1422 = vmatprep.subr.mxu0 0.0
      %v1423 = vand.u32 %v288, 4294901760
      %1424 = vmatpush1.xpose.msra.mxu0 %v1423
      %1425 = vmatprep.subr.mxu0 0.0
      %v1426 = vand.u32 %v291, 4294901760
      %1427 = vmatpush1.xpose.msra.mxu0 %v1426
      %1428 = vmatprep.subr.mxu0 0.0
      %v1429 = vand.u32 %v294, 4294901760
      %1430 = vmatpush1.xpose.msra.mxu0 %v1429
      %1431 = vmatprep.subr.mxu0 0.0
      %v1432 = vand.u32 %v297, 4294901760
      %1433 = vmatpush1.xpose.msra.mxu0 %v1432
      %1434 = vmatprep.subr.mxu0 0.0
      %v1435 = vand.u32 %v300, 4294901760
      %1436 = vmatpush1.xpose.msra.mxu0 %v1435
      %1437 = vmatprep.subr.mxu0 0.0
      %v1438 = vand.u32 %v303, 4294901760
      %1439 = vmatpush1.xpose.msra.mxu0 %v1438
      %1440 = vmatprep.subr.mxu0 0.0
      %v1441 = vand.u32 %v306, 4294901760
      %1442 = vmatpush1.xpose.msra.mxu0 %v1441
      %1443 = vmatprep.subr.mxu0 0.0
      %v1444 = vand.u32 %v309, 4294901760
      %1445 = vmatpush1.xpose.msra.mxu0 %v1444
      %1446 = vmatprep.subr.mxu0 0.0
      %v1447 = vand.u32 %v312, 4294901760
      %1448 = vmatpush1.xpose.msra.mxu0 %v1447
      %1449 = vmatprep.subr.mxu0 0.0
      %v1450 = vand.u32 %v315, 4294901760
      %1451 = vmatpush1.xpose.msra.mxu0 %v1450
      %1452 = vmatprep.subr.mxu0 0.0
      %v1453 = vand.u32 %v318, 4294901760
      %1454 = vmatpush1.xpose.msra.mxu0 %v1453
      %1455 = vmatprep.subr.mxu0 0.0
      %v1456 = vand.u32 %v321, 4294901760
      %1457 = vmatpush1.xpose.msra.mxu0 %v1456
      %1458 = vmatprep.subr.mxu0 0.0
      %v1459 = vand.u32 %v324, 4294901760
      %1460 = vmatpush1.xpose.msra.mxu0 %v1459
      %1461 = vmatprep.subr.mxu0 0.0
      %v1462 = vand.u32 %v327, 4294901760
      %1463 = vmatpush1.xpose.msra.mxu0 %v1462
      %1464 = vmatprep.subr.mxu0 0.0
      %v1465 = vand.u32 %v330, 4294901760
      %1466 = vmatpush1.xpose.msra.mxu0 %v1465
      %1467 = vmatprep.subr.mxu0 0.0
      %v1468 = vand.u32 %v333, 4294901760
      %1469 = vmatpush1.xpose.msra.mxu0 %v1468
      %1470 = vmatprep.subr.mxu0 0.0
      %v1471 = vand.u32 %v336, 4294901760
      %1472 = vmatpush1.xpose.msra.mxu0 %v1471
      %1473 = vmatprep.subr.mxu0 0.0
      %v1474 = vand.u32 %v339, 4294901760
      %1475 = vmatpush1.xpose.msra.mxu0 %v1474
      %1476 = vmatprep.subr.mxu0 0.0
      %v1477 = vand.u32 %v342, 4294901760
      %1478 = vmatpush1.xpose.msra.mxu0 %v1477
      %1479 = vmatprep.subr.mxu0 0.0
      %v1480 = vand.u32 %v345, 4294901760
      %1481 = vmatpush1.xpose.msra.mxu0 %v1480
      %1482 = vmatprep.subr.mxu0 0.0
      %v1483 = vand.u32 %v348, 4294901760
      %1484 = vmatpush1.xpose.msra.mxu0 %v1483
      %1485 = vmatprep.mubr.f32.mxu0 0.0
      %v1486 = vand.u32 %v252, 4294901760
      %1487 = vmatmul.mubr.f32.gmra.mrb[0].mxu0 %v1486
      %v1488 = vpop.f32.mrb[0].mxu0
      %v1489 = vadd.f32 %v1385, %v1488
      %v1490 = vpop.f32.mrb[0].mxu0
      %v1491 = vadd.f32 %v1387, %v1490
      %1492 = vdwg.mxu0
      %1493 = vmatprep.subr.mxu0 0.0
      %v1494 = vand.u32 %v351, 4294901760
      %1495 = vmatpush1.xpose.msra.mxu0 %v1494
      %1496 = vmatprep.subr.mxu0 0.0
      %v1497 = vand.u32 %v354, 4294901760
      %1498 = vmatpush1.xpose.msra.mxu0 %v1497
      %1499 = vmatprep.subr.mxu0 0.0
      %v1500 = vand.u32 %v357, 4294901760
      %1501 = vmatpush1.xpose.msra.mxu0 %v1500
      %1502 = vmatprep.subr.mxu0 0.0
      %v1503 = vand.u32 %v360, 4294901760
      %1504 = vmatpush1.xpose.msra.mxu0 %v1503
      %1505 = vmatprep.subr.mxu0 0.0
      %v1506 = vand.u32 %v363, 4294901760
      %1507 = vmatpush1.xpose.msra.mxu0 %v1506
      %1508 = vmatprep.subr.mxu0 0.0
      %v1509 = vand.u32 %v366, 4294901760
      %1510 = vmatpush1.xpose.msra.mxu0 %v1509
      %1511 = vmatprep.subr.mxu0 0.0
      %v1512 = vand.u32 %v369, 4294901760
      %1513 = vmatpush1.xpose.msra.mxu0 %v1512
      %1514 = vmatprep.subr.mxu0 0.0
      %v1515 = vand.u32 %v372, 4294901760
      %1516 = vmatpush1.xpose.msra.mxu0 %v1515
      %1517 = vmatprep.subr.mxu0 0.0
      %v1518 = vand.u32 %v375, 4294901760
      %1519 = vmatpush1.xpose.msra.mxu0 %v1518
      %1520 = vmatprep.subr.mxu0 0.0
      %v1521 = vand.u32 %v378, 4294901760
      %1522 = vmatpush1.xpose.msra.mxu0 %v1521
      %1523 = vmatprep.subr.mxu0 0.0
      %v1524 = vand.u32 %v381, 4294901760
      %1525 = vmatpush1.xpose.msra.mxu0 %v1524
      %1526 = vmatprep.subr.mxu0 0.0
      %v1527 = vand.u32 %v384, 4294901760
      %1528 = vmatpush1.xpose.msra.mxu0 %v1527
      %1529 = vmatprep.subr.mxu0 0.0
      %v1530 = vand.u32 %v387, 4294901760
      %1531 = vmatpush1.xpose.msra.mxu0 %v1530
      %1532 = vmatprep.subr.mxu0 0.0
      %v1533 = vand.u32 %v390, 4294901760
      %1534 = vmatpush1.xpose.msra.mxu0 %v1533
      %1535 = vmatprep.subr.mxu0 0.0
      %v1536 = vand.u32 %v393, 4294901760
      %1537 = vmatpush1.xpose.msra.mxu0 %v1536
      %1538 = vmatprep.subr.mxu0 0.0
      %v1539 = vand.u32 %v396, 4294901760
      %1540 = vmatpush1.xpose.msra.mxu0 %v1539
      %1541 = vmatprep.subr.mxu0 0.0
      %v1542 = vand.u32 %v399, 4294901760
      %1543 = vmatpush1.xpose.msra.mxu0 %v1542
      %1544 = vmatprep.subr.mxu0 0.0
      %v1545 = vand.u32 %v402, 4294901760
      %1546 = vmatpush1.xpose.msra.mxu0 %v1545
      %1547 = vmatprep.subr.mxu0 0.0
      %v1548 = vand.u32 %v405, 4294901760
      %1549 = vmatpush1.xpose.msra.mxu0 %v1548
      %1550 = vmatprep.subr.mxu0 0.0
      %v1551 = vand.u32 %v408, 4294901760
      %1552 = vmatpush1.xpose.msra.mxu0 %v1551
      %1553 = vmatprep.subr.mxu0 0.0
      %v1554 = vand.u32 %v411, 4294901760
      %1555 = vmatpush1.xpose.msra.mxu0 %v1554
      %1556 = vmatprep.subr.mxu0 0.0
      %v1557 = vand.u32 %v414, 4294901760
      %1558 = vmatpush1.xpose.msra.mxu0 %v1557
      %1559 = vmatprep.subr.mxu0 0.0
      %v1560 = vand.u32 %v417, 4294901760
      %1561 = vmatpush1.xpose.msra.mxu0 %v1560
      %1562 = vmatprep.subr.mxu0 0.0
      %v1563 = vand.u32 %v420, 4294901760
      %1564 = vmatpush1.xpose.msra.mxu0 %v1563
      %1565 = vmatprep.subr.mxu0 0.0
      %v1566 = vand.u32 %v423, 4294901760
      %1567 = vmatpush1.xpose.msra.mxu0 %v1566
      %1568 = vmatprep.subr.mxu0 0.0
      %v1569 = vand.u32 %v426, 4294901760
      %1570 = vmatpush1.xpose.msra.mxu0 %v1569
      %1571 = vmatprep.subr.mxu0 0.0
      %v1572 = vand.u32 %v429, 4294901760
      %1573 = vmatpush1.xpose.msra.mxu0 %v1572
      %1574 = vmatprep.subr.mxu0 0.0
      %v1575 = vand.u32 %v432, 4294901760
      %1576 = vmatpush1.xpose.msra.mxu0 %v1575
      %1577 = vmatprep.subr.mxu0 0.0
      %v1578 = vand.u32 %v435, 4294901760
      %1579 = vmatpush1.xpose.msra.mxu0 %v1578
      %1580 = vmatprep.subr.mxu0 0.0
      %v1581 = vand.u32 %v438, 4294901760
      %1582 = vmatpush1.xpose.msra.mxu0 %v1581
      %1583 = vmatprep.subr.mxu0 0.0
      %v1584 = vand.u32 %v441, 4294901760
      %1585 = vmatpush1.xpose.msra.mxu0 %v1584
      %1586 = vmatprep.subr.mxu0 0.0
      %v1587 = vand.u32 %v444, 4294901760
      %1588 = vmatpush1.xpose.msra.mxu0 %v1587
      %1589 = vmatprep.mubr.f32.mxu0 0.0
      %v1590 = vand.u32 %v252, 4294901760
      %v1591 = vsub.f32 %v252, %v1590
      %v1592 = vand.u32 %v1591, 4294901760
      %v1593 = vsub.f32 %v1591, %v1592
      %v1594 = vand.u32 %v1593, 4294901760
      %1595 = vmatmul.mubr.f32.gmra.mrb[0].mxu0 %v1594
      %v1596 = vpop.f32.mrb[0].mxu0
      %v1597 = vadd.f32 0.0, %v1596
      %v1598 = vpop.f32.mrb[0].mxu0
      %v1599 = vadd.f32 0.0, %v1598
      %1600 = vdwg.mxu0
      %1601 = vmatprep.subr.mxu0 0.0
      %v1602 = vand.u32 %v351, 4294901760
      %v1603 = vsub.f32 %v351, %v1602
      %v1604 = vand.u32 %v1603, 4294901760
      %v1605 = vsub.f32 %v1603, %v1604
      %v1606 = vand.u32 %v1605, 4294901760
      %1607 = vmatpush1.xpose.msra.mxu0 %v1606
      %1608 = vmatprep.subr.mxu0 0.0
      %v1609 = vand.u32 %v354, 4294901760
      %v1610 = vsub.f32 %v354, %v1609
      %v1611 = vand.u32 %v1610, 4294901760
      %v1612 = vsub.f32 %v1610, %v1611
      %v1613 = vand.u32 %v1612, 4294901760
      %1614 = vmatpush1.xpose.msra.mxu0 %v1613
      %1615 = vmatprep.subr.mxu0 0.0
      %v1616 = vand.u32 %v357, 4294901760
      %v1617 = vsub.f32 %v357, %v1616
      %v1618 = vand.u32 %v1617, 4294901760
      %v1619 = vsub.f32 %v1617, %v1618
      %v1620 = vand.u32 %v1619, 4294901760
      %1621 = vmatpush1.xpose.msra.mxu0 %v1620
      %1622 = vmatprep.subr.mxu0 0.0
      %v1623 = vand.u32 %v360, 4294901760
      %v1624 = vsub.f32 %v360, %v1623
      %v1625 = vand.u32 %v1624, 4294901760
      %v1626 = vsub.f32 %v1624, %v1625
      %v1627 = vand.u32 %v1626, 4294901760
      %1628 = vmatpush1.xpose.msra.mxu0 %v1627
      %1629 = vmatprep.subr.mxu0 0.0
      %v1630 = vand.u32 %v363, 4294901760
      %v1631 = vsub.f32 %v363, %v1630
      %v1632 = vand.u32 %v1631, 4294901760
      %v1633 = vsub.f32 %v1631, %v1632
      %v1634 = vand.u32 %v1633, 4294901760
      %1635 = vmatpush1.xpose.msra.mxu0 %v1634
      %1636 = vmatprep.subr.mxu0 0.0
      %v1637 = vand.u32 %v366, 4294901760
      %v1638 = vsub.f32 %v366, %v1637
      %v1639 = vand.u32 %v1638, 4294901760
      %v1640 = vsub.f32 %v1638, %v1639
      %v1641 = vand.u32 %v1640, 4294901760
      %1642 = vmatpush1.xpose.msra.mxu0 %v1641
      %1643 = vmatprep.subr.mxu0 0.0
      %v1644 = vand.u32 %v369, 4294901760
      %v1645 = vsub.f32 %v369, %v1644
      %v1646 = vand.u32 %v1645, 4294901760
      %v1647 = vsub.f32 %v1645, %v1646
      %v1648 = vand.u32 %v1647, 4294901760
      %1649 = vmatpush1.xpose.msra.mxu0 %v1648
      %1650 = vmatprep.subr.mxu0 0.0
      %v1651 = vand.u32 %v372, 4294901760
      %v1652 = vsub.f32 %v372, %v1651
      %v1653 = vand.u32 %v1652, 4294901760
      %v1654 = vsub.f32 %v1652, %v1653
      %v1655 = vand.u32 %v1654, 4294901760
      %1656 = vmatpush1.xpose.msra.mxu0 %v1655
      %1657 = vmatprep.subr.mxu0 0.0
      %v1658 = vand.u32 %v375, 4294901760
      %v1659 = vsub.f32 %v375, %v1658
      %v1660 = vand.u32 %v1659, 4294901760
      %v1661 = vsub.f32 %v1659, %v1660
      %v1662 = vand.u32 %v1661, 4294901760
      %1663 = vmatpush1.xpose.msra.mxu0 %v1662
      %1664 = vmatprep.subr.mxu0 0.0
      %v1665 = vand.u32 %v378, 4294901760
      %v1666 = vsub.f32 %v378, %v1665
      %v1667 = vand.u32 %v1666, 4294901760
      %v1668 = vsub.f32 %v1666, %v1667
      %v1669 = vand.u32 %v1668, 4294901760
      %1670 = vmatpush1.xpose.msra.mxu0 %v1669
      %1671 = vmatprep.subr.mxu0 0.0
      %v1672 = vand.u32 %v381, 4294901760
      %v1673 = vsub.f32 %v381, %v1672
      %v1674 = vand.u32 %v1673, 4294901760
      %v1675 = vsub.f32 %v1673, %v1674
      %v1676 = vand.u32 %v1675, 4294901760
      %1677 = vmatpush1.xpose.msra.mxu0 %v1676
      %1678 = vmatprep.subr.mxu0 0.0
      %v1679 = vand.u32 %v384, 4294901760
      %v1680 = vsub.f32 %v384, %v1679
      %v1681 = vand.u32 %v1680, 4294901760
      %v1682 = vsub.f32 %v1680, %v1681
      %v1683 = vand.u32 %v1682, 4294901760
      %1684 = vmatpush1.xpose.msra.mxu0 %v1683
      %1685 = vmatprep.subr.mxu0 0.0
      %v1686 = vand.u32 %v387, 4294901760
      %v1687 = vsub.f32 %v387, %v1686
      %v1688 = vand.u32 %v1687, 4294901760
      %v1689 = vsub.f32 %v1687, %v1688
      %v1690 = vand.u32 %v1689, 4294901760
      %1691 = vmatpush1.xpose.msra.mxu0 %v1690
      %1692 = vmatprep.subr.mxu0 0.0
      %v1693 = vand.u32 %v390, 4294901760
      %v1694 = vsub.f32 %v390, %v1693
      %v1695 = vand.u32 %v1694, 4294901760
      %v1696 = vsub.f32 %v1694, %v1695
      %v1697 = vand.u32 %v1696, 4294901760
      %1698 = vmatpush1.xpose.msra.mxu0 %v1697
      %1699 = vmatprep.subr.mxu0 0.0
      %v1700 = vand.u32 %v393, 4294901760
      %v1701 = vsub.f32 %v393, %v1700
      %v1702 = vand.u32 %v1701, 4294901760
      %v1703 = vsub.f32 %v1701, %v1702
      %v1704 = vand.u32 %v1703, 4294901760
      %1705 = vmatpush1.xpose.msra.mxu0 %v1704
      %1706 = vmatprep.subr.mxu0 0.0
      %v1707 = vand.u32 %v396, 4294901760
      %v1708 = vsub.f32 %v396, %v1707
      %v1709 = vand.u32 %v1708, 4294901760
      %v1710 = vsub.f32 %v1708, %v1709
      %v1711 = vand.u32 %v1710, 4294901760
      %1712 = vmatpush1.xpose.msra.mxu0 %v1711
      %1713 = vmatprep.subr.mxu0 0.0
      %v1714 = vand.u32 %v399, 4294901760
      %v1715 = vsub.f32 %v399, %v1714
      %v1716 = vand.u32 %v1715, 4294901760
      %v1717 = vsub.f32 %v1715, %v1716
      %v1718 = vand.u32 %v1717, 4294901760
      %1719 = vmatpush1.xpose.msra.mxu0 %v1718
      %1720 = vmatprep.subr.mxu0 0.0
      %v1721 = vand.u32 %v402, 4294901760
      %v1722 = vsub.f32 %v402, %v1721
      %v1723 = vand.u32 %v1722, 4294901760
      %v1724 = vsub.f32 %v1722, %v1723
      %v1725 = vand.u32 %v1724, 4294901760
      %1726 = vmatpush1.xpose.msra.mxu0 %v1725
      %1727 = vmatprep.subr.mxu0 0.0
      %v1728 = vand.u32 %v405, 4294901760
      %v1729 = vsub.f32 %v405, %v1728
      %v1730 = vand.u32 %v1729, 4294901760
      %v1731 = vsub.f32 %v1729, %v1730
      %v1732 = vand.u32 %v1731, 4294901760
      %1733 = vmatpush1.xpose.msra.mxu0 %v1732
      %1734 = vmatprep.subr.mxu0 0.0
      %v1735 = vand.u32 %v408, 4294901760
      %v1736 = vsub.f32 %v408, %v1735
      %v1737 = vand.u32 %v1736, 4294901760
      %v1738 = vsub.f32 %v1736, %v1737
      %v1739 = vand.u32 %v1738, 4294901760
      %1740 = vmatpush1.xpose.msra.mxu0 %v1739
      %1741 = vmatprep.subr.mxu0 0.0
      %v1742 = vand.u32 %v411, 4294901760
      %v1743 = vsub.f32 %v411, %v1742
      %v1744 = vand.u32 %v1743, 4294901760
      %v1745 = vsub.f32 %v1743, %v1744
      %v1746 = vand.u32 %v1745, 4294901760
      %1747 = vmatpush1.xpose.msra.mxu0 %v1746
      %1748 = vmatprep.subr.mxu0 0.0
      %v1749 = vand.u32 %v414, 4294901760
      %v1750 = vsub.f32 %v414, %v1749
      %v1751 = vand.u32 %v1750, 4294901760
      %v1752 = vsub.f32 %v1750, %v1751
      %v1753 = vand.u32 %v1752, 4294901760
      %1754 = vmatpush1.xpose.msra.mxu0 %v1753
      %1755 = vmatprep.subr.mxu0 0.0
      %v1756 = vand.u32 %v417, 4294901760
      %v1757 = vsub.f32 %v417, %v1756
      %v1758 = vand.u32 %v1757, 4294901760
      %v1759 = vsub.f32 %v1757, %v1758
      %v1760 = vand.u32 %v1759, 4294901760
      %1761 = vmatpush1.xpose.msra.mxu0 %v1760
      %1762 = vmatprep.subr.mxu0 0.0
      %v1763 = vand.u32 %v420, 4294901760
      %v1764 = vsub.f32 %v420, %v1763
      %v1765 = vand.u32 %v1764, 4294901760
      %v1766 = vsub.f32 %v1764, %v1765
      %v1767 = vand.u32 %v1766, 4294901760
      %1768 = vmatpush1.xpose.msra.mxu0 %v1767
      %1769 = vmatprep.subr.mxu0 0.0
      %v1770 = vand.u32 %v423, 4294901760
      %v1771 = vsub.f32 %v423, %v1770
      %v1772 = vand.u32 %v1771, 4294901760
      %v1773 = vsub.f32 %v1771, %v1772
      %v1774 = vand.u32 %v1773, 4294901760
      %1775 = vmatpush1.xpose.msra.mxu0 %v1774
      %1776 = vmatprep.subr.mxu0 0.0
      %v1777 = vand.u32 %v426, 4294901760
      %v1778 = vsub.f32 %v426, %v1777
      %v1779 = vand.u32 %v1778, 4294901760
      %v1780 = vsub.f32 %v1778, %v1779
      %v1781 = vand.u32 %v1780, 4294901760
      %1782 = vmatpush1.xpose.msra.mxu0 %v1781
      %1783 = vmatprep.subr.mxu0 0.0
      %v1784 = vand.u32 %v429, 4294901760
      %v1785 = vsub.f32 %v429, %v1784
      %v1786 = vand.u32 %v1785, 4294901760
      %v1787 = vsub.f32 %v1785, %v1786
      %v1788 = vand.u32 %v1787, 4294901760
      %1789 = vmatpush1.xpose.msra.mxu0 %v1788
      %1790 = vmatprep.subr.mxu0 0.0
      %v1791 = vand.u32 %v432, 4294901760
      %v1792 = vsub.f32 %v432, %v1791
      %v1793 = vand.u32 %v1792, 4294901760
      %v1794 = vsub.f32 %v1792, %v1793
      %v1795 = vand.u32 %v1794, 4294901760
      %1796 = vmatpush1.xpose.msra.mxu0 %v1795
      %1797 = vmatprep.subr.mxu0 0.0
      %v1798 = vand.u32 %v435, 4294901760
      %v1799 = vsub.f32 %v435, %v1798
      %v1800 = vand.u32 %v1799, 4294901760
      %v1801 = vsub.f32 %v1799, %v1800
      %v1802 = vand.u32 %v1801, 4294901760
      %1803 = vmatpush1.xpose.msra.mxu0 %v1802
      %1804 = vmatprep.subr.mxu0 0.0
      %v1805 = vand.u32 %v438, 4294901760
      %v1806 = vsub.f32 %v438, %v1805
      %v1807 = vand.u32 %v1806, 4294901760
      %v1808 = vsub.f32 %v1806, %v1807
      %v1809 = vand.u32 %v1808, 4294901760
      %1810 = vmatpush1.xpose.msra.mxu0 %v1809
      %1811 = vmatprep.subr.mxu0 0.0
      %v1812 = vand.u32 %v441, 4294901760
      %v1813 = vsub.f32 %v441, %v1812
      %v1814 = vand.u32 %v1813, 4294901760
      %v1815 = vsub.f32 %v1813, %v1814
      %v1816 = vand.u32 %v1815, 4294901760
      %1817 = vmatpush1.xpose.msra.mxu0 %v1816
      %1818 = vmatprep.subr.mxu0 0.0
      %v1819 = vand.u32 %v444, 4294901760
      %v1820 = vsub.f32 %v444, %v1819
      %v1821 = vand.u32 %v1820, 4294901760
      %v1822 = vsub.f32 %v1820, %v1821
      %v1823 = vand.u32 %v1822, 4294901760
      %1824 = vmatpush1.xpose.msra.mxu0 %v1823
      %1825 = vmatprep.mubr.f32.mxu0 0.0
      %v1826 = vand.u32 %v252, 4294901760
      %1827 = vmatmul.mubr.f32.gmra.mrb[0].mxu0 %v1826
      %v1828 = vpop.f32.mrb[0].mxu0
      %v1829 = vadd.f32 %v1597, %v1828
      %v1830 = vpop.f32.mrb[0].mxu0
      %v1831 = vadd.f32 %v1599, %v1830
      %1832 = vdwg.mxu0
      %1833 = vmatprep.subr.mxu0 0.0
      %v1834 = vand.u32 %v351, 4294901760
      %v1835 = vsub.f32 %v351, %v1834
      %1836 = vmatpush1.xpose.msra.mxu0 %v1835
      %1837 = vmatprep.subr.mxu0 0.0
      %v1838 = vand.u32 %v354, 4294901760
      %v1839 = vsub.f32 %v354, %v1838
      %1840 = vmatpush1.xpose.msra.mxu0 %v1839
      %1841 = vmatprep.subr.mxu0 0.0
      %v1842 = vand.u32 %v357, 4294901760
      %v1843 = vsub.f32 %v357, %v1842
      %1844 = vmatpush1.xpose.msra.mxu0 %v1843
      %1845 = vmatprep.subr.mxu0 0.0
      %v1846 = vand.u32 %v360, 4294901760
      %v1847 = vsub.f32 %v360, %v1846
      %1848 = vmatpush1.xpose.msra.mxu0 %v1847
      %1849 = vmatprep.subr.mxu0 0.0
      %v1850 = vand.u32 %v363, 4294901760
      %v1851 = vsub.f32 %v363, %v1850
      %1852 = vmatpush1.xpose.msra.mxu0 %v1851
      %1853 = vmatprep.subr.mxu0 0.0
      %v1854 = vand.u32 %v366, 4294901760
      %v1855 = vsub.f32 %v366, %v1854
      %1856 = vmatpush1.xpose.msra.mxu0 %v1855
      %1857 = vmatprep.subr.mxu0 0.0
      %v1858 = vand.u32 %v369, 4294901760
      %v1859 = vsub.f32 %v369, %v1858
      %1860 = vmatpush1.xpose.msra.mxu0 %v1859
      %1861 = vmatprep.subr.mxu0 0.0
      %v1862 = vand.u32 %v372, 4294901760
      %v1863 = vsub.f32 %v372, %v1862
      %1864 = vmatpush1.xpose.msra.mxu0 %v1863
      %1865 = vmatprep.subr.mxu0 0.0
      %v1866 = vand.u32 %v375, 4294901760
      %v1867 = vsub.f32 %v375, %v1866
      %1868 = vmatpush1.xpose.msra.mxu0 %v1867
      %1869 = vmatprep.subr.mxu0 0.0
      %v1870 = vand.u32 %v378, 4294901760
      %v1871 = vsub.f32 %v378, %v1870
      %1872 = vmatpush1.xpose.msra.mxu0 %v1871
      %1873 = vmatprep.subr.mxu0 0.0
      %v1874 = vand.u32 %v381, 4294901760
      %v1875 = vsub.f32 %v381, %v1874
      %1876 = vmatpush1.xpose.msra.mxu0 %v1875
      %1877 = vmatprep.subr.mxu0 0.0
      %v1878 = vand.u32 %v384, 4294901760
      %v1879 = vsub.f32 %v384, %v1878
      %1880 = vmatpush1.xpose.msra.mxu0 %v1879
      %1881 = vmatprep.subr.mxu0 0.0
      %v1882 = vand.u32 %v387, 4294901760
      %v1883 = vsub.f32 %v387, %v1882
      %1884 = vmatpush1.xpose.msra.mxu0 %v1883
      %1885 = vmatprep.subr.mxu0 0.0
      %v1886 = vand.u32 %v390, 4294901760
      %v1887 = vsub.f32 %v390, %v1886
      %1888 = vmatpush1.xpose.msra.mxu0 %v1887
      %1889 = vmatprep.subr.mxu0 0.0
      %v1890 = vand.u32 %v393, 4294901760
      %v1891 = vsub.f32 %v393, %v1890
      %1892 = vmatpush1.xpose.msra.mxu0 %v1891
      %1893 = vmatprep.subr.mxu0 0.0
      %v1894 = vand.u32 %v396, 4294901760
      %v1895 = vsub.f32 %v396, %v1894
      %1896 = vmatpush1.xpose.msra.mxu0 %v1895
      %1897 = vmatprep.subr.mxu0 0.0
      %v1898 = vand.u32 %v399, 4294901760
      %v1899 = vsub.f32 %v399, %v1898
      %1900 = vmatpush1.xpose.msra.mxu0 %v1899
      %1901 = vmatprep.subr.mxu0 0.0
      %v1902 = vand.u32 %v402, 4294901760
      %v1903 = vsub.f32 %v402, %v1902
      %1904 = vmatpush1.xpose.msra.mxu0 %v1903
      %1905 = vmatprep.subr.mxu0 0.0
      %v1906 = vand.u32 %v405, 4294901760
      %v1907 = vsub.f32 %v405, %v1906
      %1908 = vmatpush1.xpose.msra.mxu0 %v1907
      %1909 = vmatprep.subr.mxu0 0.0
      %v1910 = vand.u32 %v408, 4294901760
      %v1911 = vsub.f32 %v408, %v1910
      %1912 = vmatpush1.xpose.msra.mxu0 %v1911
      %1913 = vmatprep.subr.mxu0 0.0
      %v1914 = vand.u32 %v411, 4294901760
      %v1915 = vsub.f32 %v411, %v1914
      %1916 = vmatpush1.xpose.msra.mxu0 %v1915
      %1917 = vmatprep.subr.mxu0 0.0
      %v1918 = vand.u32 %v414, 4294901760
      %v1919 = vsub.f32 %v414, %v1918
      %1920 = vmatpush1.xpose.msra.mxu0 %v1919
      %1921 = vmatprep.subr.mxu0 0.0
      %v1922 = vand.u32 %v417, 4294901760
      %v1923 = vsub.f32 %v417, %v1922
      %1924 = vmatpush1.xpose.msra.mxu0 %v1923
      %1925 = vmatprep.subr.mxu0 0.0
      %v1926 = vand.u32 %v420, 4294901760
      %v1927 = vsub.f32 %v420, %v1926
      %1928 = vmatpush1.xpose.msra.mxu0 %v1927
      %1929 = vmatprep.subr.mxu0 0.0
      %v1930 = vand.u32 %v423, 4294901760
      %v1931 = vsub.f32 %v423, %v1930
      %1932 = vmatpush1.xpose.msra.mxu0 %v1931
      %1933 = vmatprep.subr.mxu0 0.0
      %v1934 = vand.u32 %v426, 4294901760
      %v1935 = vsub.f32 %v426, %v1934
      %1936 = vmatpush1.xpose.msra.mxu0 %v1935
      %1937 = vmatprep.subr.mxu0 0.0
      %v1938 = vand.u32 %v429, 4294901760
      %v1939 = vsub.f32 %v429, %v1938
      %1940 = vmatpush1.xpose.msra.mxu0 %v1939
      %1941 = vmatprep.subr.mxu0 0.0
      %v1942 = vand.u32 %v432, 4294901760
      %v1943 = vsub.f32 %v432, %v1942
      %1944 = vmatpush1.xpose.msra.mxu0 %v1943
      %1945 = vmatprep.subr.mxu0 0.0
      %v1946 = vand.u32 %v435, 4294901760
      %v1947 = vsub.f32 %v435, %v1946
      %1948 = vmatpush1.xpose.msra.mxu0 %v1947
      %1949 = vmatprep.subr.mxu0 0.0
      %v1950 = vand.u32 %v438, 4294901760
      %v1951 = vsub.f32 %v438, %v1950
      %1952 = vmatpush1.xpose.msra.mxu0 %v1951
      %1953 = vmatprep.subr.mxu0 0.0
      %v1954 = vand.u32 %v441, 4294901760
      %v1955 = vsub.f32 %v441, %v1954
      %1956 = vmatpush1.xpose.msra.mxu0 %v1955
      %1957 = vmatprep.subr.mxu0 0.0
      %v1958 = vand.u32 %v444, 4294901760
      %v1959 = vsub.f32 %v444, %v1958
      %1960 = vmatpush1.xpose.msra.mxu0 %v1959
      %1961 = vmatprep.mubr.f32.mxu0 0.0
      %v1962 = vand.u32 %v252, 4294901760
      %v1963 = vsub.f32 %v252, %v1962
      %1964 = vmatmul.mubr.f32.gmra.mrb[0].mxu0 %v1963
      %v1965 = vpop.f32.mrb[0].mxu0
      %v1966 = vadd.f32 %v1829, %v1965
      %v1967 = vpop.f32.mrb[0].mxu0
      %v1968 = vadd.f32 %v1831, %v1967
      %1969 = vdwg.mxu0
      %1970 = vmatprep.subr.mxu0 0.0
      %v1971 = vand.u32 %v351, 4294901760
      %1972 = vmatpush1.xpose.msra.mxu0 %v1971
      %1973 = vmatprep.subr.mxu0 0.0
      %v1974 = vand.u32 %v354, 4294901760
      %1975 = vmatpush1.xpose.msra.mxu0 %v1974
      %1976 = vmatprep.subr.mxu0 0.0
      %v1977 = vand.u32 %v357, 4294901760
      %1978 = vmatpush1.xpose.msra.mxu0 %v1977
      %1979 = vmatprep.subr.mxu0 0.0
      %v1980 = vand.u32 %v360, 4294901760
      %1981 = vmatpush1.xpose.msra.mxu0 %v1980
      %1982 = vmatprep.subr.mxu0 0.0
      %v1983 = vand.u32 %v363, 4294901760
      %1984 = vmatpush1.xpose.msra.mxu0 %v1983
      %1985 = vmatprep.subr.mxu0 0.0
      %v1986 = vand.u32 %v366, 4294901760
      %1987 = vmatpush1.xpose.msra.mxu0 %v1986
      %1988 = vmatprep.subr.mxu0 0.0
      %v1989 = vand.u32 %v369, 4294901760
      %1990 = vmatpush1.xpose.msra.mxu0 %v1989
      %1991 = vmatprep.subr.mxu0 0.0
      %v1992 = vand.u32 %v372, 4294901760
      %1993 = vmatpush1.xpose.msra.mxu0 %v1992
      %1994 = vmatprep.subr.mxu0 0.0
      %v1995 = vand.u32 %v375, 4294901760
      %1996 = vmatpush1.xpose.msra.mxu0 %v1995
      %1997 = vmatprep.subr.mxu0 0.0
      %v1998 = vand.u32 %v378, 4294901760
      %1999 = vmatpush1.xpose.msra.mxu0 %v1998
      %2000 = vmatprep.subr.mxu0 0.0
      %v2001 = vand.u32 %v381, 4294901760
      %2002 = vmatpush1.xpose.msra.mxu0 %v2001
      %2003 = vmatprep.subr.mxu0 0.0
      %v2004 = vand.u32 %v384, 4294901760
      %2005 = vmatpush1.xpose.msra.mxu0 %v2004
      %2006 = vmatprep.subr.mxu0 0.0
      %v2007 = vand.u32 %v387, 4294901760
      %2008 = vmatpush1.xpose.msra.mxu0 %v2007
      %2009 = vmatprep.subr.mxu0 0.0
      %v2010 = vand.u32 %v390, 4294901760
      %2011 = vmatpush1.xpose.msra.mxu0 %v2010
      %2012 = vmatprep.subr.mxu0 0.0
      %v2013 = vand.u32 %v393, 4294901760
      %2014 = vmatpush1.xpose.msra.mxu0 %v2013
      %2015 = vmatprep.subr.mxu0 0.0
      %v2016 = vand.u32 %v396, 4294901760
      %2017 = vmatpush1.xpose.msra.mxu0 %v2016
      %2018 = vmatprep.subr.mxu0 0.0
      %v2019 = vand.u32 %v399, 4294901760
      %2020 = vmatpush1.xpose.msra.mxu0 %v2019
      %2021 = vmatprep.subr.mxu0 0.0
      %v2022 = vand.u32 %v402, 4294901760
      %2023 = vmatpush1.xpose.msra.mxu0 %v2022
      %2024 = vmatprep.subr.mxu0 0.0
      %v2025 = vand.u32 %v405, 4294901760
      %2026 = vmatpush1.xpose.msra.mxu0 %v2025
      %2027 = vmatprep.subr.mxu0 0.0
      %v2028 = vand.u32 %v408, 4294901760
      %2029 = vmatpush1.xpose.msra.mxu0 %v2028
      %2030 = vmatprep.subr.mxu0 0.0
      %v2031 = vand.u32 %v411, 4294901760
      %2032 = vmatpush1.xpose.msra.mxu0 %v2031
      %2033 = vmatprep.subr.mxu0 0.0
      %v2034 = vand.u32 %v414, 4294901760
      %2035 = vmatpush1.xpose.msra.mxu0 %v2034
      %2036 = vmatprep.subr.mxu0 0.0
      %v2037 = vand.u32 %v417, 4294901760
      %2038 = vmatpush1.xpose.msra.mxu0 %v2037
      %2039 = vmatprep.subr.mxu0 0.0
      %v2040 = vand.u32 %v420, 4294901760
      %2041 = vmatpush1.xpose.msra.mxu0 %v2040
      %2042 = vmatprep.subr.mxu0 0.0
      %v2043 = vand.u32 %v423, 4294901760
      %2044 = vmatpush1.xpose.msra.mxu0 %v2043
      %2045 = vmatprep.subr.mxu0 0.0
      %v2046 = vand.u32 %v426, 4294901760
      %2047 = vmatpush1.xpose.msra.mxu0 %v2046
      %2048 = vmatprep.subr.mxu0 0.0
      %v2049 = vand.u32 %v429, 4294901760
      %2050 = vmatpush1.xpose.msra.mxu0 %v2049
      %2051 = vmatprep.subr.mxu0 0.0
      %v2052 = vand.u32 %v432, 4294901760
      %2053 = vmatpush1.xpose.msra.mxu0 %v2052
      %2054 = vmatprep.subr.mxu0 0.0
      %v2055 = vand.u32 %v435, 4294901760
      %2056 = vmatpush1.xpose.msra.mxu0 %v2055
      %2057 = vmatprep.subr.mxu0 0.0
      %v2058 = vand.u32 %v438, 4294901760
      %2059 = vmatpush1.xpose.msra.mxu0 %v2058
      %2060 = vmatprep.subr.mxu0 0.0
      %v2061 = vand.u32 %v441, 4294901760
      %2062 = vmatpush1.xpose.msra.mxu0 %v2061
      %2063 = vmatprep.subr.mxu0 0.0
      %v2064 = vand.u32 %v444, 4294901760
      %2065 = vmatpush1.xpose.msra.mxu0 %v2064
      %2066 = vmatprep.mubr.f32.mxu0 0.0
      %v2067 = vand.u32 %v252, 4294901760
      %v2068 = vsub.f32 %v252, %v2067
      %v2069 = vand.u32 %v2068, 4294901760
      %2070 = vmatmul.mubr.f32.gmra.mrb[0].mxu0 %v2069
      %v2071 = vpop.f32.mrb[0].mxu0
      %v2072 = vadd.f32 %v1966, %v2071
      %v2073 = vpop.f32.mrb[0].mxu0
      %v2074 = vadd.f32 %v1968, %v2073
      %2075 = vdwg.mxu0
      %2076 = vmatprep.subr.mxu0 0.0
      %v2077 = vand.u32 %v351, 4294901760
      %v2078 = vsub.f32 %v351, %v2077
      %v2079 = vand.u32 %v2078, 4294901760
      %2080 = vmatpush1.xpose.msra.mxu0 %v2079
      %2081 = vmatprep.subr.mxu0 0.0
      %v2082 = vand.u32 %v354, 4294901760
      %v2083 = vsub.f32 %v354, %v2082
      %v2084 = vand.u32 %v2083, 4294901760
      %2085 = vmatpush1.xpose.msra.mxu0 %v2084
      %2086 = vmatprep.subr.mxu0 0.0
      %v2087 = vand.u32 %v357, 4294901760
      %v2088 = vsub.f32 %v357, %v2087
      %v2089 = vand.u32 %v2088, 4294901760
      %2090 = vmatpush1.xpose.msra.mxu0 %v2089
      %2091 = vmatprep.subr.mxu0 0.0
      %v2092 = vand.u32 %v360, 4294901760
      %v2093 = vsub.f32 %v360, %v2092
      %v2094 = vand.u32 %v2093, 4294901760
      %2095 = vmatpush1.xpose.msra.mxu0 %v2094
      %2096 = vmatprep.subr.mxu0 0.0
      %v2097 = vand.u32 %v363, 4294901760
      %v2098 = vsub.f32 %v363, %v2097
      %v2099 = vand.u32 %v2098, 4294901760
      %2100 = vmatpush1.xpose.msra.mxu0 %v2099
      %2101 = vmatprep.subr.mxu0 0.0
      %v2102 = vand.u32 %v366, 4294901760
      %v2103 = vsub.f32 %v366, %v2102
      %v2104 = vand.u32 %v2103, 4294901760
      %2105 = vmatpush1.xpose.msra.mxu0 %v2104
      %2106 = vmatprep.subr.mxu0 0.0
      %v2107 = vand.u32 %v369, 4294901760
      %v2108 = vsub.f32 %v369, %v2107
      %v2109 = vand.u32 %v2108, 4294901760
      %2110 = vmatpush1.xpose.msra.mxu0 %v2109
      %2111 = vmatprep.subr.mxu0 0.0
      %v2112 = vand.u32 %v372, 4294901760
      %v2113 = vsub.f32 %v372, %v2112
      %v2114 = vand.u32 %v2113, 4294901760
      %2115 = vmatpush1.xpose.msra.mxu0 %v2114
      %2116 = vmatprep.subr.mxu0 0.0
      %v2117 = vand.u32 %v375, 4294901760
      %v2118 = vsub.f32 %v375, %v2117
      %v2119 = vand.u32 %v2118, 4294901760
      %2120 = vmatpush1.xpose.msra.mxu0 %v2119
      %2121 = vmatprep.subr.mxu0 0.0
      %v2122 = vand.u32 %v378, 4294901760
      %v2123 = vsub.f32 %v378, %v2122
      %v2124 = vand.u32 %v2123, 4294901760
      %2125 = vmatpush1.xpose.msra.mxu0 %v2124
      %2126 = vmatprep.subr.mxu0 0.0
      %v2127 = vand.u32 %v381, 4294901760
      %v2128 = vsub.f32 %v381, %v2127
      %v2129 = vand.u32 %v2128, 4294901760
      %2130 = vmatpush1.xpose.msra.mxu0 %v2129
      %2131 = vmatprep.subr.mxu0 0.0
      %v2132 = vand.u32 %v384, 4294901760
      %v2133 = vsub.f32 %v384, %v2132
      %v2134 = vand.u32 %v2133, 4294901760
      %2135 = vmatpush1.xpose.msra.mxu0 %v2134
      %2136 = vmatprep.subr.mxu0 0.0
      %v2137 = vand.u32 %v387, 4294901760
      %v2138 = vsub.f32 %v387, %v2137
      %v2139 = vand.u32 %v2138, 4294901760
      %2140 = vmatpush1.xpose.msra.mxu0 %v2139
      %2141 = vmatprep.subr.mxu0 0.0
      %v2142 = vand.u32 %v390, 4294901760
      %v2143 = vsub.f32 %v390, %v2142
      %v2144 = vand.u32 %v2143, 4294901760
      %2145 = vmatpush1.xpose.msra.mxu0 %v2144
      %2146 = vmatprep.subr.mxu0 0.0
      %v2147 = vand.u32 %v393, 4294901760
      %v2148 = vsub.f32 %v393, %v2147
      %v2149 = vand.u32 %v2148, 4294901760
      %2150 = vmatpush1.xpose.msra.mxu0 %v2149
      %2151 = vmatprep.subr.mxu0 0.0
      %v2152 = vand.u32 %v396, 4294901760
      %v2153 = vsub.f32 %v396, %v2152
      %v2154 = vand.u32 %v2153, 4294901760
      %2155 = vmatpush1.xpose.msra.mxu0 %v2154
      %2156 = vmatprep.subr.mxu0 0.0
      %v2157 = vand.u32 %v399, 4294901760
      %v2158 = vsub.f32 %v399, %v2157
      %v2159 = vand.u32 %v2158, 4294901760
      %2160 = vmatpush1.xpose.msra.mxu0 %v2159
      %2161 = vmatprep.subr.mxu0 0.0
      %v2162 = vand.u32 %v402, 4294901760
      %v2163 = vsub.f32 %v402, %v2162
      %v2164 = vand.u32 %v2163, 4294901760
      %2165 = vmatpush1.xpose.msra.mxu0 %v2164
      %2166 = vmatprep.subr.mxu0 0.0
      %v2167 = vand.u32 %v405, 4294901760
      %v2168 = vsub.f32 %v405, %v2167
      %v2169 = vand.u32 %v2168, 4294901760
      %2170 = vmatpush1.xpose.msra.mxu0 %v2169
      %2171 = vmatprep.subr.mxu0 0.0
      %v2172 = vand.u32 %v408, 4294901760
      %v2173 = vsub.f32 %v408, %v2172
      %v2174 = vand.u32 %v2173, 4294901760
      %2175 = vmatpush1.xpose.msra.mxu0 %v2174
      %2176 = vmatprep.subr.mxu0 0.0
      %v2177 = vand.u32 %v411, 4294901760
      %v2178 = vsub.f32 %v411, %v2177
      %v2179 = vand.u32 %v2178, 4294901760
      %2180 = vmatpush1.xpose.msra.mxu0 %v2179
      %2181 = vmatprep.subr.mxu0 0.0
      %v2182 = vand.u32 %v414, 4294901760
      %v2183 = vsub.f32 %v414, %v2182
      %v2184 = vand.u32 %v2183, 4294901760
      %2185 = vmatpush1.xpose.msra.mxu0 %v2184
      %2186 = vmatprep.subr.mxu0 0.0
      %v2187 = vand.u32 %v417, 4294901760
      %v2188 = vsub.f32 %v417, %v2187
      %v2189 = vand.u32 %v2188, 4294901760
      %2190 = vmatpush1.xpose.msra.mxu0 %v2189
      %2191 = vmatprep.subr.mxu0 0.0
      %v2192 = vand.u32 %v420, 4294901760
      %v2193 = vsub.f32 %v420, %v2192
      %v2194 = vand.u32 %v2193, 4294901760
      %2195 = vmatpush1.xpose.msra.mxu0 %v2194
      %2196 = vmatprep.subr.mxu0 0.0
      %v2197 = vand.u32 %v423, 4294901760
      %v2198 = vsub.f32 %v423, %v2197
      %v2199 = vand.u32 %v2198, 4294901760
      %2200 = vmatpush1.xpose.msra.mxu0 %v2199
      %2201 = vmatprep.subr.mxu0 0.0
      %v2202 = vand.u32 %v426, 4294901760
      %v2203 = vsub.f32 %v426, %v2202
      %v2204 = vand.u32 %v2203, 4294901760
      %2205 = vmatpush1.xpose.msra.mxu0 %v2204
      %2206 = vmatprep.subr.mxu0 0.0
      %v2207 = vand.u32 %v429, 4294901760
      %v2208 = vsub.f32 %v429, %v2207
      %v2209 = vand.u32 %v2208, 4294901760
      %2210 = vmatpush1.xpose.msra.mxu0 %v2209
      %2211 = vmatprep.subr.mxu0 0.0
      %v2212 = vand.u32 %v432, 4294901760
      %v2213 = vsub.f32 %v432, %v2212
      %v2214 = vand.u32 %v2213, 4294901760
      %2215 = vmatpush1.xpose.msra.mxu0 %v2214
      %2216 = vmatprep.subr.mxu0 0.0
      %v2217 = vand.u32 %v435, 4294901760
      %v2218 = vsub.f32 %v435, %v2217
      %v2219 = vand.u32 %v2218, 4294901760
      %2220 = vmatpush1.xpose.msra.mxu0 %v2219
      %2221 = vmatprep.subr.mxu0 0.0
      %v2222 = vand.u32 %v438, 4294901760
      %v2223 = vsub.f32 %v438, %v2222
      %v2224 = vand.u32 %v2223, 4294901760
      %2225 = vmatpush1.xpose.msra.mxu0 %v2224
      %2226 = vmatprep.subr.mxu0 0.0
      %v2227 = vand.u32 %v441, 4294901760
      %v2228 = vsub.f32 %v441, %v2227
      %v2229 = vand.u32 %v2228, 4294901760
      %2230 = vmatpush1.xpose.msra.mxu0 %v2229
      %2231 = vmatprep.subr.mxu0 0.0
      %v2232 = vand.u32 %v444, 4294901760
      %v2233 = vsub.f32 %v444, %v2232
      %v2234 = vand.u32 %v2233, 4294901760
      %2235 = vmatpush1.xpose.msra.mxu0 %v2234
      %2236 = vmatprep.mubr.f32.mxu0 0.0
      %v2237 = vand.u32 %v252, 4294901760
      %2238 = vmatmul.mubr.f32.gmra.mrb[0].mxu0 %v2237
      %v2239 = vpop.f32.mrb[0].mxu0
      %v2240 = vadd.f32 %v2072, %v2239
      %v2241 = vpop.f32.mrb[0].mxu0
      %v2242 = vadd.f32 %v2074, %v2241
      %2243 = vdwg.mxu0
      %2244 = vmatprep.subr.mxu0 0.0
      %v2245 = vand.u32 %v351, 4294901760
      %2246 = vmatpush1.xpose.msra.mxu0 %v2245
      %2247 = vmatprep.subr.mxu0 0.0
      %v2248 = vand.u32 %v354, 4294901760
      %2249 = vmatpush1.xpose.msra.mxu0 %v2248
      %2250 = vmatprep.subr.mxu0 0.0
      %v2251 = vand.u32 %v357, 4294901760
      %2252 = vmatpush1.xpose.msra.mxu0 %v2251
      %2253 = vmatprep.subr.mxu0 0.0
      %v2254 = vand.u32 %v360, 4294901760
      %2255 = vmatpush1.xpose.msra.mxu0 %v2254
      %2256 = vmatprep.subr.mxu0 0.0
      %v2257 = vand.u32 %v363, 4294901760
      %2258 = vmatpush1.xpose.msra.mxu0 %v2257
      %2259 = vmatprep.subr.mxu0 0.0
      %v2260 = vand.u32 %v366, 4294901760
      %2261 = vmatpush1.xpose.msra.mxu0 %v2260
      %2262 = vmatprep.subr.mxu0 0.0
      %v2263 = vand.u32 %v369, 4294901760
      %2264 = vmatpush1.xpose.msra.mxu0 %v2263
      %2265 = vmatprep.subr.mxu0 0.0
      %v2266 = vand.u32 %v372, 4294901760
      %2267 = vmatpush1.xpose.msra.mxu0 %v2266
      %2268 = vmatprep.subr.mxu0 0.0
      %v2269 = vand.u32 %v375, 4294901760
      %2270 = vmatpush1.xpose.msra.mxu0 %v2269
      %2271 = vmatprep.subr.mxu0 0.0
      %v2272 = vand.u32 %v378, 4294901760
      %2273 = vmatpush1.xpose.msra.mxu0 %v2272
      %2274 = vmatprep.subr.mxu0 0.0
      %v2275 = vand.u32 %v381, 4294901760
      %2276 = vmatpush1.xpose.msra.mxu0 %v2275
      %2277 = vmatprep.subr.mxu0 0.0
      %v2278 = vand.u32 %v384, 4294901760
      %2279 = vmatpush1.xpose.msra.mxu0 %v2278
      %2280 = vmatprep.subr.mxu0 0.0
      %v2281 = vand.u32 %v387, 4294901760
      %2282 = vmatpush1.xpose.msra.mxu0 %v2281
      %2283 = vmatprep.subr.mxu0 0.0
      %v2284 = vand.u32 %v390, 4294901760
      %2285 = vmatpush1.xpose.msra.mxu0 %v2284
      %2286 = vmatprep.subr.mxu0 0.0
      %v2287 = vand.u32 %v393, 4294901760
      %2288 = vmatpush1.xpose.msra.mxu0 %v2287
      %2289 = vmatprep.subr.mxu0 0.0
      %v2290 = vand.u32 %v396, 4294901760
      %2291 = vmatpush1.xpose.msra.mxu0 %v2290
      %2292 = vmatprep.subr.mxu0 0.0
      %v2293 = vand.u32 %v399, 4294901760
      %2294 = vmatpush1.xpose.msra.mxu0 %v2293
      %2295 = vmatprep.subr.mxu0 0.0
      %v2296 = vand.u32 %v402, 4294901760
      %2297 = vmatpush1.xpose.msra.mxu0 %v2296
      %2298 = vmatprep.subr.mxu0 0.0
      %v2299 = vand.u32 %v405, 4294901760
      %2300 = vmatpush1.xpose.msra.mxu0 %v2299
      %2301 = vmatprep.subr.mxu0 0.0
      %v2302 = vand.u32 %v408, 4294901760
      %2303 = vmatpush1.xpose.msra.mxu0 %v2302
      %2304 = vmatprep.subr.mxu0 0.0
      %v2305 = vand.u32 %v411, 4294901760
      %2306 = vmatpush1.xpose.msra.mxu0 %v2305
      %2307 = vmatprep.subr.mxu0 0.0
      %v2308 = vand.u32 %v414, 4294901760
      %2309 = vmatpush1.xpose.msra.mxu0 %v2308
      %2310 = vmatprep.subr.mxu0 0.0
      %v2311 = vand.u32 %v417, 4294901760
      %2312 = vmatpush1.xpose.msra.mxu0 %v2311
      %2313 = vmatprep.subr.mxu0 0.0
      %v2314 = vand.u32 %v420, 4294901760
      %2315 = vmatpush1.xpose.msra.mxu0 %v2314
      %2316 = vmatprep.subr.mxu0 0.0
      %v2317 = vand.u32 %v423, 4294901760
      %2318 = vmatpush1.xpose.msra.mxu0 %v2317
      %2319 = vmatprep.subr.mxu0 0.0
      %v2320 = vand.u32 %v426, 4294901760
      %2321 = vmatpush1.xpose.msra.mxu0 %v2320
      %2322 = vmatprep.subr.mxu0 0.0
      %v2323 = vand.u32 %v429, 4294901760
      %2324 = vmatpush1.xpose.msra.mxu0 %v2323
      %2325 = vmatprep.subr.mxu0 0.0
      %v2326 = vand.u32 %v432, 4294901760
      %2327 = vmatpush1.xpose.msra.mxu0 %v2326
      %2328 = vmatprep.subr.mxu0 0.0
      %v2329 = vand.u32 %v435, 4294901760
      %2330 = vmatpush1.xpose.msra.mxu0 %v2329
      %2331 = vmatprep.subr.mxu0 0.0
      %v2332 = vand.u32 %v438, 4294901760
      %2333 = vmatpush1.xpose.msra.mxu0 %v2332
      %2334 = vmatprep.subr.mxu0 0.0
      %v2335 = vand.u32 %v441, 4294901760
      %2336 = vmatpush1.xpose.msra.mxu0 %v2335
      %2337 = vmatprep.subr.mxu0 0.0
      %v2338 = vand.u32 %v444, 4294901760
      %2339 = vmatpush1.xpose.msra.mxu0 %v2338
      %2340 = vmatprep.mubr.f32.mxu0 0.0
      %v2341 = vand.u32 %v252, 4294901760
      %2342 = vmatmul.mubr.f32.gmra.mrb[0].mxu0 %v2341
      %v2343 = vpop.f32.mrb[0].mxu0
      %v2344 = vadd.f32 %v2240, %v2343
      %v2345 = vpop.f32.mrb[0].mxu0
      %v2346 = vadd.f32 %v2242, %v2345
      %2347 = vdwg.mxu0
      %2348 = vmatprep.subr.mxu0 0.0
      %v2349 = vand.u32 %v447, 4294901760
      %2350 = vmatpush1.xpose.msra.mxu0 %v2349
      %2351 = vmatprep.subr.mxu0 0.0
      %v2352 = vand.u32 %v450, 4294901760
      %2353 = vmatpush1.xpose.msra.mxu0 %v2352
      %2354 = vmatprep.subr.mxu0 0.0
      %v2355 = vand.u32 %v453, 4294901760
      %2356 = vmatpush1.xpose.msra.mxu0 %v2355
      %2357 = vmatprep.subr.mxu0 0.0
      %v2358 = vand.u32 %v456, 4294901760
      %2359 = vmatpush1.xpose.msra.mxu0 %v2358
      %2360 = vmatprep.subr.mxu0 0.0
      %v2361 = vand.u32 %v459, 4294901760
      %2362 = vmatpush1.xpose.msra.mxu0 %v2361
      %2363 = vmatprep.subr.mxu0 0.0
      %v2364 = vand.u32 %v462, 4294901760
      %2365 = vmatpush1.xpose.msra.mxu0 %v2364
      %2366 = vmatprep.subr.mxu0 0.0
      %v2367 = vand.u32 %v465, 4294901760
      %2368 = vmatpush1.xpose.msra.mxu0 %v2367
      %2369 = vmatprep.subr.mxu0 0.0
      %v2370 = vand.u32 %v468, 4294901760
      %2371 = vmatpush1.xpose.msra.mxu0 %v2370
      %2372 = vmatprep.subr.mxu0 0.0
      %v2373 = vand.u32 %v471, 4294901760
      %2374 = vmatpush1.xpose.msra.mxu0 %v2373
      %2375 = vmatprep.subr.mxu0 0.0
      %v2376 = vand.u32 %v474, 4294901760
      %2377 = vmatpush1.xpose.msra.mxu0 %v2376
      %2378 = vmatprep.subr.mxu0 0.0
      %v2379 = vand.u32 %v477, 4294901760
      %2380 = vmatpush1.xpose.msra.mxu0 %v2379
      %2381 = vmatprep.subr.mxu0 0.0
      %v2382 = vand.u32 %v480, 4294901760
      %2383 = vmatpush1.xpose.msra.mxu0 %v2382
      %2384 = vmatprep.subr.mxu0 0.0
      %v2385 = vand.u32 %v483, 4294901760
      %2386 = vmatpush1.xpose.msra.mxu0 %v2385
      %2387 = vmatprep.subr.mxu0 0.0
      %v2388 = vand.u32 %v486, 4294901760
      %2389 = vmatpush1.xpose.msra.mxu0 %v2388
      %2390 = vmatprep.subr.mxu0 0.0
      %v2391 = vand.u32 %v489, 4294901760
      %2392 = vmatpush1.xpose.msra.mxu0 %v2391
      %2393 = vmatprep.subr.mxu0 0.0
      %v2394 = vand.u32 %v492, 4294901760
      %2395 = vmatpush1.xpose.msra.mxu0 %v2394
      %2396 = vmatprep.subr.mxu0 0.0
      %v2397 = vand.u32 %v495, 4294901760
      %2398 = vmatpush1.xpose.msra.mxu0 %v2397
      %2399 = vmatprep.subr.mxu0 0.0
      %v2400 = vand.u32 %v498, 4294901760
      %2401 = vmatpush1.xpose.msra.mxu0 %v2400
      %2402 = vmatprep.subr.mxu0 0.0
      %v2403 = vand.u32 %v501, 4294901760
      %2404 = vmatpush1.xpose.msra.mxu0 %v2403
      %2405 = vmatprep.subr.mxu0 0.0
      %v2406 = vand.u32 %v504, 4294901760
      %2407 = vmatpush1.xpose.msra.mxu0 %v2406
      %2408 = vmatprep.subr.mxu0 0.0
      %v2409 = vand.u32 %v507, 4294901760
      %2410 = vmatpush1.xpose.msra.mxu0 %v2409
      %2411 = vmatprep.subr.mxu0 0.0
      %v2412 = vand.u32 %v510, 4294901760
      %2413 = vmatpush1.xpose.msra.mxu0 %v2412
      %2414 = vmatprep.subr.mxu0 0.0
      %v2415 = vand.u32 %v513, 4294901760
      %2416 = vmatpush1.xpose.msra.mxu0 %v2415
      %2417 = vmatprep.subr.mxu0 0.0
      %v2418 = vand.u32 %v516, 4294901760
      %2419 = vmatpush1.xpose.msra.mxu0 %v2418
      %2420 = vmatprep.subr.mxu0 0.0
      %v2421 = vand.u32 %v519, 4294901760
      %2422 = vmatpush1.xpose.msra.mxu0 %v2421
      %2423 = vmatprep.subr.mxu0 0.0
      %v2424 = vand.u32 %v522, 4294901760
      %2425 = vmatpush1.xpose.msra.mxu0 %v2424
      %2426 = vmatprep.subr.mxu0 0.0
      %v2427 = vand.u32 %v525, 4294901760
      %2428 = vmatpush1.xpose.msra.mxu0 %v2427
      %2429 = vmatprep.subr.mxu0 0.0
      %v2430 = vand.u32 %v528, 4294901760
      %2431 = vmatpush1.xpose.msra.mxu0 %v2430
      %2432 = vmatprep.subr.mxu0 0.0
      %v2433 = vand.u32 %v531, 4294901760
      %2434 = vmatpush1.xpose.msra.mxu0 %v2433
      %2435 = vmatprep.subr.mxu0 0.0
      %v2436 = vand.u32 %v534, 4294901760
      %2437 = vmatpush1.xpose.msra.mxu0 %v2436
      %2438 = vmatprep.subr.mxu0 0.0
      %v2439 = vand.u32 %v537, 4294901760
      %2440 = vmatpush1.xpose.msra.mxu0 %v2439
      %2441 = vmatprep.subr.mxu0 0.0
      %v2442 = vand.u32 %v540, 4294901760
      %2443 = vmatpush1.xpose.msra.mxu0 %v2442
      %2444 = vmatprep.mubr.f32.mxu0 0.0
      %v2445 = vand.u32 %v252, 4294901760
      %v2446 = vsub.f32 %v252, %v2445
      %v2447 = vand.u32 %v2446, 4294901760
      %v2448 = vsub.f32 %v2446, %v2447
      %v2449 = vand.u32 %v2448, 4294901760
      %2450 = vmatmul.mubr.f32.gmra.mrb[0].mxu0 %v2449
      %v2451 = vpop.f32.mrb[0].mxu0
      %v2452 = vadd.f32 0.0, %v2451
      %v2453 = vpop.f32.mrb[0].mxu0
      %v2454 = vadd.f32 0.0, %v2453
      %2455 = vdwg.mxu0
      %2456 = vmatprep.subr.mxu0 0.0
      %v2457 = vand.u32 %v447, 4294901760
      %v2458 = vsub.f32 %v447, %v2457
      %v2459 = vand.u32 %v2458, 4294901760
      %v2460 = vsub.f32 %v2458, %v2459
      %v2461 = vand.u32 %v2460, 4294901760
      %2462 = vmatpush1.xpose.msra.mxu0 %v2461
      %2463 = vmatprep.subr.mxu0 0.0
      %v2464 = vand.u32 %v450, 4294901760
      %v2465 = vsub.f32 %v450, %v2464
      %v2466 = vand.u32 %v2465, 4294901760
      %v2467 = vsub.f32 %v2465, %v2466
      %v2468 = vand.u32 %v2467, 4294901760
      %2469 = vmatpush1.xpose.msra.mxu0 %v2468
      %2470 = vmatprep.subr.mxu0 0.0
      %v2471 = vand.u32 %v453, 4294901760
      %v2472 = vsub.f32 %v453, %v2471
      %v2473 = vand.u32 %v2472, 4294901760
      %v2474 = vsub.f32 %v2472, %v2473
      %v2475 = vand.u32 %v2474, 4294901760
      %2476 = vmatpush1.xpose.msra.mxu0 %v2475
      %2477 = vmatprep.subr.mxu0 0.0
      %v2478 = vand.u32 %v456, 4294901760
      %v2479 = vsub.f32 %v456, %v2478
      %v2480 = vand.u32 %v2479, 4294901760
      %v2481 = vsub.f32 %v2479, %v2480
      %v2482 = vand.u32 %v2481, 4294901760
      %2483 = vmatpush1.xpose.msra.mxu0 %v2482
      %2484 = vmatprep.subr.mxu0 0.0
      %v2485 = vand.u32 %v459, 4294901760
      %v2486 = vsub.f32 %v459, %v2485
      %v2487 = vand.u32 %v2486, 4294901760
      %v2488 = vsub.f32 %v2486, %v2487
      %v2489 = vand.u32 %v2488, 4294901760
      %2490 = vmatpush1.xpose.msra.mxu0 %v2489
      %2491 = vmatprep.subr.mxu0 0.0
      %v2492 = vand.u32 %v462, 4294901760
      %v2493 = vsub.f32 %v462, %v2492
      %v2494 = vand.u32 %v2493, 4294901760
      %v2495 = vsub.f32 %v2493, %v2494
      %v2496 = vand.u32 %v2495, 4294901760
      %2497 = vmatpush1.xpose.msra.mxu0 %v2496
      %2498 = vmatprep.subr.mxu0 0.0
      %v2499 = vand.u32 %v465, 4294901760
      %v2500 = vsub.f32 %v465, %v2499
      %v2501 = vand.u32 %v2500, 4294901760
      %v2502 = vsub.f32 %v2500, %v2501
      %v2503 = vand.u32 %v2502, 4294901760
      %2504 = vmatpush1.xpose.msra.mxu0 %v2503
      %2505 = vmatprep.subr.mxu0 0.0
      %v2506 = vand.u32 %v468, 4294901760
      %v2507 = vsub.f32 %v468, %v2506
      %v2508 = vand.u32 %v2507, 4294901760
      %v2509 = vsub.f32 %v2507, %v2508
      %v2510 = vand.u32 %v2509, 4294901760
      %2511 = vmatpush1.xpose.msra.mxu0 %v2510
      %2512 = vmatprep.subr.mxu0 0.0
      %v2513 = vand.u32 %v471, 4294901760
      %v2514 = vsub.f32 %v471, %v2513
      %v2515 = vand.u32 %v2514, 4294901760
      %v2516 = vsub.f32 %v2514, %v2515
      %v2517 = vand.u32 %v2516, 4294901760
      %2518 = vmatpush1.xpose.msra.mxu0 %v2517
      %2519 = vmatprep.subr.mxu0 0.0
      %v2520 = vand.u32 %v474, 4294901760
      %v2521 = vsub.f32 %v474, %v2520
      %v2522 = vand.u32 %v2521, 4294901760
      %v2523 = vsub.f32 %v2521, %v2522
      %v2524 = vand.u32 %v2523, 4294901760
      %2525 = vmatpush1.xpose.msra.mxu0 %v2524
      %2526 = vmatprep.subr.mxu0 0.0
      %v2527 = vand.u32 %v477, 4294901760
      %v2528 = vsub.f32 %v477, %v2527
      %v2529 = vand.u32 %v2528, 4294901760
      %v2530 = vsub.f32 %v2528, %v2529
      %v2531 = vand.u32 %v2530, 4294901760
      %2532 = vmatpush1.xpose.msra.mxu0 %v2531
      %2533 = vmatprep.subr.mxu0 0.0
      %v2534 = vand.u32 %v480, 4294901760
      %v2535 = vsub.f32 %v480, %v2534
      %v2536 = vand.u32 %v2535, 4294901760
      %v2537 = vsub.f32 %v2535, %v2536
      %v2538 = vand.u32 %v2537, 4294901760
      %2539 = vmatpush1.xpose.msra.mxu0 %v2538
      %2540 = vmatprep.subr.mxu0 0.0
      %v2541 = vand.u32 %v483, 4294901760
      %v2542 = vsub.f32 %v483, %v2541
      %v2543 = vand.u32 %v2542, 4294901760
      %v2544 = vsub.f32 %v2542, %v2543
      %v2545 = vand.u32 %v2544, 4294901760
      %2546 = vmatpush1.xpose.msra.mxu0 %v2545
      %2547 = vmatprep.subr.mxu0 0.0
      %v2548 = vand.u32 %v486, 4294901760
      %v2549 = vsub.f32 %v486, %v2548
      %v2550 = vand.u32 %v2549, 4294901760
      %v2551 = vsub.f32 %v2549, %v2550
      %v2552 = vand.u32 %v2551, 4294901760
      %2553 = vmatpush1.xpose.msra.mxu0 %v2552
      %2554 = vmatprep.subr.mxu0 0.0
      %v2555 = vand.u32 %v489, 4294901760
      %v2556 = vsub.f32 %v489, %v2555
      %v2557 = vand.u32 %v2556, 4294901760
      %v2558 = vsub.f32 %v2556, %v2557
      %v2559 = vand.u32 %v2558, 4294901760
      %2560 = vmatpush1.xpose.msra.mxu0 %v2559
      %2561 = vmatprep.subr.mxu0 0.0
      %v2562 = vand.u32 %v492, 4294901760
      %v2563 = vsub.f32 %v492, %v2562
      %v2564 = vand.u32 %v2563, 4294901760
      %v2565 = vsub.f32 %v2563, %v2564
      %v2566 = vand.u32 %v2565, 4294901760
      %2567 = vmatpush1.xpose.msra.mxu0 %v2566
      %2568 = vmatprep.subr.mxu0 0.0
      %v2569 = vand.u32 %v495, 4294901760
      %v2570 = vsub.f32 %v495, %v2569
      %v2571 = vand.u32 %v2570, 4294901760
      %v2572 = vsub.f32 %v2570, %v2571
      %v2573 = vand.u32 %v2572, 4294901760
      %2574 = vmatpush1.xpose.msra.mxu0 %v2573
      %2575 = vmatprep.subr.mxu0 0.0
      %v2576 = vand.u32 %v498, 4294901760
      %v2577 = vsub.f32 %v498, %v2576
      %v2578 = vand.u32 %v2577, 4294901760
      %v2579 = vsub.f32 %v2577, %v2578
      %v2580 = vand.u32 %v2579, 4294901760
      %2581 = vmatpush1.xpose.msra.mxu0 %v2580
      %2582 = vmatprep.subr.mxu0 0.0
      %v2583 = vand.u32 %v501, 4294901760
      %v2584 = vsub.f32 %v501, %v2583
      %v2585 = vand.u32 %v2584, 4294901760
      %v2586 = vsub.f32 %v2584, %v2585
      %v2587 = vand.u32 %v2586, 4294901760
      %2588 = vmatpush1.xpose.msra.mxu0 %v2587
      %2589 = vmatprep.subr.mxu0 0.0
      %v2590 = vand.u32 %v504, 4294901760
      %v2591 = vsub.f32 %v504, %v2590
      %v2592 = vand.u32 %v2591, 4294901760
      %v2593 = vsub.f32 %v2591, %v2592
      %v2594 = vand.u32 %v2593, 4294901760
      %2595 = vmatpush1.xpose.msra.mxu0 %v2594
      %2596 = vmatprep.subr.mxu0 0.0
      %v2597 = vand.u32 %v507, 4294901760
      %v2598 = vsub.f32 %v507, %v2597
      %v2599 = vand.u32 %v2598, 4294901760
      %v2600 = vsub.f32 %v2598, %v2599
      %v2601 = vand.u32 %v2600, 4294901760
      %2602 = vmatpush1.xpose.msra.mxu0 %v2601
      %2603 = vmatprep.subr.mxu0 0.0
      %v2604 = vand.u32 %v510, 4294901760
      %v2605 = vsub.f32 %v510, %v2604
      %v2606 = vand.u32 %v2605, 4294901760
      %v2607 = vsub.f32 %v2605, %v2606
      %v2608 = vand.u32 %v2607, 4294901760
      %2609 = vmatpush1.xpose.msra.mxu0 %v2608
      %2610 = vmatprep.subr.mxu0 0.0
      %v2611 = vand.u32 %v513, 4294901760
      %v2612 = vsub.f32 %v513, %v2611
      %v2613 = vand.u32 %v2612, 4294901760
      %v2614 = vsub.f32 %v2612, %v2613
      %v2615 = vand.u32 %v2614, 4294901760
      %2616 = vmatpush1.xpose.msra.mxu0 %v2615
      %2617 = vmatprep.subr.mxu0 0.0
      %v2618 = vand.u32 %v516, 4294901760
      %v2619 = vsub.f32 %v516, %v2618
      %v2620 = vand.u32 %v2619, 4294901760
      %v2621 = vsub.f32 %v2619, %v2620
      %v2622 = vand.u32 %v2621, 4294901760
      %2623 = vmatpush1.xpose.msra.mxu0 %v2622
      %2624 = vmatprep.subr.mxu0 0.0
      %v2625 = vand.u32 %v519, 4294901760
      %v2626 = vsub.f32 %v519, %v2625
      %v2627 = vand.u32 %v2626, 4294901760
      %v2628 = vsub.f32 %v2626, %v2627
      %v2629 = vand.u32 %v2628, 4294901760
      %2630 = vmatpush1.xpose.msra.mxu0 %v2629
      %2631 = vmatprep.subr.mxu0 0.0
      %v2632 = vand.u32 %v522, 4294901760
      %v2633 = vsub.f32 %v522, %v2632
      %v2634 = vand.u32 %v2633, 4294901760
      %v2635 = vsub.f32 %v2633, %v2634
      %v2636 = vand.u32 %v2635, 4294901760
      %2637 = vmatpush1.xpose.msra.mxu0 %v2636
      %2638 = vmatprep.subr.mxu0 0.0
      %v2639 = vand.u32 %v525, 4294901760
      %v2640 = vsub.f32 %v525, %v2639
      %v2641 = vand.u32 %v2640, 4294901760
      %v2642 = vsub.f32 %v2640, %v2641
      %v2643 = vand.u32 %v2642, 4294901760
      %2644 = vmatpush1.xpose.msra.mxu0 %v2643
      %2645 = vmatprep.subr.mxu0 0.0
      %v2646 = vand.u32 %v528, 4294901760
      %v2647 = vsub.f32 %v528, %v2646
      %v2648 = vand.u32 %v2647, 4294901760
      %v2649 = vsub.f32 %v2647, %v2648
      %v2650 = vand.u32 %v2649, 4294901760
      %2651 = vmatpush1.xpose.msra.mxu0 %v2650
      %2652 = vmatprep.subr.mxu0 0.0
      %v2653 = vand.u32 %v531, 4294901760
      %v2654 = vsub.f32 %v531, %v2653
      %v2655 = vand.u32 %v2654, 4294901760
      %v2656 = vsub.f32 %v2654, %v2655
      %v2657 = vand.u32 %v2656, 4294901760
      %2658 = vmatpush1.xpose.msra.mxu0 %v2657
      %2659 = vmatprep.subr.mxu0 0.0
      %v2660 = vand.u32 %v534, 4294901760
      %v2661 = vsub.f32 %v534, %v2660
      %v2662 = vand.u32 %v2661, 4294901760
      %v2663 = vsub.f32 %v2661, %v2662
      %v2664 = vand.u32 %v2663, 4294901760
      %2665 = vmatpush1.xpose.msra.mxu0 %v2664
      %2666 = vmatprep.subr.mxu0 0.0
      %v2667 = vand.u32 %v537, 4294901760
      %v2668 = vsub.f32 %v537, %v2667
      %v2669 = vand.u32 %v2668, 4294901760
      %v2670 = vsub.f32 %v2668, %v2669
      %v2671 = vand.u32 %v2670, 4294901760
      %2672 = vmatpush1.xpose.msra.mxu0 %v2671
      %2673 = vmatprep.subr.mxu0 0.0
      %v2674 = vand.u32 %v540, 4294901760
      %v2675 = vsub.f32 %v540, %v2674
      %v2676 = vand.u32 %v2675, 4294901760
      %v2677 = vsub.f32 %v2675, %v2676
      %v2678 = vand.u32 %v2677, 4294901760
      %2679 = vmatpush1.xpose.msra.mxu0 %v2678
      %2680 = vmatprep.mubr.f32.mxu0 0.0
      %v2681 = vand.u32 %v252, 4294901760
      %2682 = vmatmul.mubr.f32.gmra.mrb[0].mxu0 %v2681
      %v2683 = vpop.f32.mrb[0].mxu0
      %v2684 = vadd.f32 %v2452, %v2683
      %v2685 = vpop.f32.mrb[0].mxu0
      %v2686 = vadd.f32 %v2454, %v2685
      %2687 = vdwg.mxu0
      %2688 = vmatprep.subr.mxu0 0.0
      %v2689 = vand.u32 %v447, 4294901760
      %v2690 = vsub.f32 %v447, %v2689
      %2691 = vmatpush1.xpose.msra.mxu0 %v2690
      %2692 = vmatprep.subr.mxu0 0.0
      %v2693 = vand.u32 %v450, 4294901760
      %v2694 = vsub.f32 %v450, %v2693
      %2695 = vmatpush1.xpose.msra.mxu0 %v2694
      %2696 = vmatprep.subr.mxu0 0.0
      %v2697 = vand.u32 %v453, 4294901760
      %v2698 = vsub.f32 %v453, %v2697
      %2699 = vmatpush1.xpose.msra.mxu0 %v2698
      %2700 = vmatprep.subr.mxu0 0.0
      %v2701 = vand.u32 %v456, 4294901760
      %v2702 = vsub.f32 %v456, %v2701
      %2703 = vmatpush1.xpose.msra.mxu0 %v2702
      %2704 = vmatprep.subr.mxu0 0.0
      %v2705 = vand.u32 %v459, 4294901760
      %v2706 = vsub.f32 %v459, %v2705
      %2707 = vmatpush1.xpose.msra.mxu0 %v2706
      %2708 = vmatprep.subr.mxu0 0.0
      %v2709 = vand.u32 %v462, 4294901760
      %v2710 = vsub.f32 %v462, %v2709
      %2711 = vmatpush1.xpose.msra.mxu0 %v2710
      %2712 = vmatprep.subr.mxu0 0.0
      %v2713 = vand.u32 %v465, 4294901760
      %v2714 = vsub.f32 %v465, %v2713
      %2715 = vmatpush1.xpose.msra.mxu0 %v2714
      %2716 = vmatprep.subr.mxu0 0.0
      %v2717 = vand.u32 %v468, 4294901760
      %v2718 = vsub.f32 %v468, %v2717
      %2719 = vmatpush1.xpose.msra.mxu0 %v2718
      %2720 = vmatprep.subr.mxu0 0.0
      %v2721 = vand.u32 %v471, 4294901760
      %v2722 = vsub.f32 %v471, %v2721
      %2723 = vmatpush1.xpose.msra.mxu0 %v2722
      %2724 = vmatprep.subr.mxu0 0.0
      %v2725 = vand.u32 %v474, 4294901760
      %v2726 = vsub.f32 %v474, %v2725
      %2727 = vmatpush1.xpose.msra.mxu0 %v2726
      %2728 = vmatprep.subr.mxu0 0.0
      %v2729 = vand.u32 %v477, 4294901760
      %v2730 = vsub.f32 %v477, %v2729
      %2731 = vmatpush1.xpose.msra.mxu0 %v2730
      %2732 = vmatprep.subr.mxu0 0.0
      %v2733 = vand.u32 %v480, 4294901760
      %v2734 = vsub.f32 %v480, %v2733
      %2735 = vmatpush1.xpose.msra.mxu0 %v2734
      %2736 = vmatprep.subr.mxu0 0.0
      %v2737 = vand.u32 %v483, 4294901760
      %v2738 = vsub.f32 %v483, %v2737
      %2739 = vmatpush1.xpose.msra.mxu0 %v2738
      %2740 = vmatprep.subr.mxu0 0.0
      %v2741 = vand.u32 %v486, 4294901760
      %v2742 = vsub.f32 %v486, %v2741
      %2743 = vmatpush1.xpose.msra.mxu0 %v2742
      %2744 = vmatprep.subr.mxu0 0.0
      %v2745 = vand.u32 %v489, 4294901760
      %v2746 = vsub.f32 %v489, %v2745
      %2747 = vmatpush1.xpose.msra.mxu0 %v2746
      %2748 = vmatprep.subr.mxu0 0.0
      %v2749 = vand.u32 %v492, 4294901760
      %v2750 = vsub.f32 %v492, %v2749
      %2751 = vmatpush1.xpose.msra.mxu0 %v2750
      %2752 = vmatprep.subr.mxu0 0.0
      %v2753 = vand.u32 %v495, 4294901760
      %v2754 = vsub.f32 %v495, %v2753
      %2755 = vmatpush1.xpose.msra.mxu0 %v2754
      %2756 = vmatprep.subr.mxu0 0.0
      %v2757 = vand.u32 %v498, 4294901760
      %v2758 = vsub.f32 %v498, %v2757
      %2759 = vmatpush1.xpose.msra.mxu0 %v2758
      %2760 = vmatprep.subr.mxu0 0.0
      %v2761 = vand.u32 %v501, 4294901760
      %v2762 = vsub.f32 %v501, %v2761
      %2763 = vmatpush1.xpose.msra.mxu0 %v2762
      %2764 = vmatprep.subr.mxu0 0.0
      %v2765 = vand.u32 %v504, 4294901760
      %v2766 = vsub.f32 %v504, %v2765
      %2767 = vmatpush1.xpose.msra.mxu0 %v2766
      %2768 = vmatprep.subr.mxu0 0.0
      %v2769 = vand.u32 %v507, 4294901760
      %v2770 = vsub.f32 %v507, %v2769
      %2771 = vmatpush1.xpose.msra.mxu0 %v2770
      %2772 = vmatprep.subr.mxu0 0.0
      %v2773 = vand.u32 %v510, 4294901760
      %v2774 = vsub.f32 %v510, %v2773
      %2775 = vmatpush1.xpose.msra.mxu0 %v2774
      %2776 = vmatprep.subr.mxu0 0.0
      %v2777 = vand.u32 %v513, 4294901760
      %v2778 = vsub.f32 %v513, %v2777
      %2779 = vmatpush1.xpose.msra.mxu0 %v2778
      %2780 = vmatprep.subr.mxu0 0.0
      %v2781 = vand.u32 %v516, 4294901760
      %v2782 = vsub.f32 %v516, %v2781
      %2783 = vmatpush1.xpose.msra.mxu0 %v2782
      %2784 = vmatprep.subr.mxu0 0.0
      %v2785 = vand.u32 %v519, 4294901760
      %v2786 = vsub.f32 %v519, %v2785
      %2787 = vmatpush1.xpose.msra.mxu0 %v2786
      %2788 = vmatprep.subr.mxu0 0.0
      %v2789 = vand.u32 %v522, 4294901760
      %v2790 = vsub.f32 %v522, %v2789
      %2791 = vmatpush1.xpose.msra.mxu0 %v2790
      %2792 = vmatprep.subr.mxu0 0.0
      %v2793 = vand.u32 %v525, 4294901760
      %v2794 = vsub.f32 %v525, %v2793
      %2795 = vmatpush1.xpose.msra.mxu0 %v2794
      %2796 = vmatprep.subr.mxu0 0.0
      %v2797 = vand.u32 %v528, 4294901760
      %v2798 = vsub.f32 %v528, %v2797
      %2799 = vmatpush1.xpose.msra.mxu0 %v2798
      %2800 = vmatprep.subr.mxu0 0.0
      %v2801 = vand.u32 %v531, 4294901760
      %v2802 = vsub.f32 %v531, %v2801
      %2803 = vmatpush1.xpose.msra.mxu0 %v2802
      %2804 = vmatprep.subr.mxu0 0.0
      %v2805 = vand.u32 %v534, 4294901760
      %v2806 = vsub.f32 %v534, %v2805
      %2807 = vmatpush1.xpose.msra.mxu0 %v2806
      %2808 = vmatprep.subr.mxu0 0.0
      %v2809 = vand.u32 %v537, 4294901760
      %v2810 = vsub.f32 %v537, %v2809
      %2811 = vmatpush1.xpose.msra.mxu0 %v2810
      %2812 = vmatprep.subr.mxu0 0.0
      %v2813 = vand.u32 %v540, 4294901760
      %v2814 = vsub.f32 %v540, %v2813
      %2815 = vmatpush1.xpose.msra.mxu0 %v2814
      %2816 = vmatprep.mubr.f32.mxu0 0.0
      %v2817 = vand.u32 %v252, 4294901760
      %v2818 = vsub.f32 %v252, %v2817
      %2819 = vmatmul.mubr.f32.gmra.mrb[0].mxu0 %v2818
      %v2820 = vpop.f32.mrb[0].mxu0
      %v2821 = vadd.f32 %v2684, %v2820
      %v2822 = vpop.f32.mrb[0].mxu0
      %v2823 = vadd.f32 %v2686, %v2822
      %2824 = vdwg.mxu0
      %2825 = vmatprep.subr.mxu0 0.0
      %v2826 = vand.u32 %v447, 4294901760
      %2827 = vmatpush1.xpose.msra.mxu0 %v2826
      %2828 = vmatprep.subr.mxu0 0.0
      %v2829 = vand.u32 %v450, 4294901760
      %2830 = vmatpush1.xpose.msra.mxu0 %v2829
      %2831 = vmatprep.subr.mxu0 0.0
      %v2832 = vand.u32 %v453, 4294901760
      %2833 = vmatpush1.xpose.msra.mxu0 %v2832
      %2834 = vmatprep.subr.mxu0 0.0
      %v2835 = vand.u32 %v456, 4294901760
      %2836 = vmatpush1.xpose.msra.mxu0 %v2835
      %2837 = vmatprep.subr.mxu0 0.0
      %v2838 = vand.u32 %v459, 4294901760
      %2839 = vmatpush1.xpose.msra.mxu0 %v2838
      %2840 = vmatprep.subr.mxu0 0.0
      %v2841 = vand.u32 %v462, 4294901760
      %2842 = vmatpush1.xpose.msra.mxu0 %v2841
      %2843 = vmatprep.subr.mxu0 0.0
      %v2844 = vand.u32 %v465, 4294901760
      %2845 = vmatpush1.xpose.msra.mxu0 %v2844
      %2846 = vmatprep.subr.mxu0 0.0
      %v2847 = vand.u32 %v468, 4294901760
      %2848 = vmatpush1.xpose.msra.mxu0 %v2847
      %2849 = vmatprep.subr.mxu0 0.0
      %v2850 = vand.u32 %v471, 4294901760
      %2851 = vmatpush1.xpose.msra.mxu0 %v2850
      %2852 = vmatprep.subr.mxu0 0.0
      %v2853 = vand.u32 %v474, 4294901760
      %2854 = vmatpush1.xpose.msra.mxu0 %v2853
      %2855 = vmatprep.subr.mxu0 0.0
      %v2856 = vand.u32 %v477, 4294901760
      %2857 = vmatpush1.xpose.msra.mxu0 %v2856
      %2858 = vmatprep.subr.mxu0 0.0
      %v2859 = vand.u32 %v480, 4294901760
      %2860 = vmatpush1.xpose.msra.mxu0 %v2859
      %2861 = vmatprep.subr.mxu0 0.0
      %v2862 = vand.u32 %v483, 4294901760
      %2863 = vmatpush1.xpose.msra.mxu0 %v2862
      %2864 = vmatprep.subr.mxu0 0.0
      %v2865 = vand.u32 %v486, 4294901760
      %2866 = vmatpush1.xpose.msra.mxu0 %v2865
      %2867 = vmatprep.subr.mxu0 0.0
      %v2868 = vand.u32 %v489, 4294901760
      %2869 = vmatpush1.xpose.msra.mxu0 %v2868
      %2870 = vmatprep.subr.mxu0 0.0
      %v2871 = vand.u32 %v492, 4294901760
      %2872 = vmatpush1.xpose.msra.mxu0 %v2871
      %2873 = vmatprep.subr.mxu0 0.0
      %v2874 = vand.u32 %v495, 4294901760
      %2875 = vmatpush1.xpose.msra.mxu0 %v2874
      %2876 = vmatprep.subr.mxu0 0.0
      %v2877 = vand.u32 %v498, 4294901760
      %2878 = vmatpush1.xpose.msra.mxu0 %v2877
      %2879 = vmatprep.subr.mxu0 0.0
      %v2880 = vand.u32 %v501, 4294901760
      %2881 = vmatpush1.xpose.msra.mxu0 %v2880
      %2882 = vmatprep.subr.mxu0 0.0
      %v2883 = vand.u32 %v504, 4294901760
      %2884 = vmatpush1.xpose.msra.mxu0 %v2883
      %2885 = vmatprep.subr.mxu0 0.0
      %v2886 = vand.u32 %v507, 4294901760
      %2887 = vmatpush1.xpose.msra.mxu0 %v2886
      %2888 = vmatprep.subr.mxu0 0.0
      %v2889 = vand.u32 %v510, 4294901760
      %2890 = vmatpush1.xpose.msra.mxu0 %v2889
      %2891 = vmatprep.subr.mxu0 0.0
      %v2892 = vand.u32 %v513, 4294901760
      %2893 = vmatpush1.xpose.msra.mxu0 %v2892
      %2894 = vmatprep.subr.mxu0 0.0
      %v2895 = vand.u32 %v516, 4294901760
      %2896 = vmatpush1.xpose.msra.mxu0 %v2895
      %2897 = vmatprep.subr.mxu0 0.0
      %v2898 = vand.u32 %v519, 4294901760
      %2899 = vmatpush1.xpose.msra.mxu0 %v2898
      %2900 = vmatprep.subr.mxu0 0.0
      %v2901 = vand.u32 %v522, 4294901760
      %2902 = vmatpush1.xpose.msra.mxu0 %v2901
      %2903 = vmatprep.subr.mxu0 0.0
      %v2904 = vand.u32 %v525, 4294901760
      %2905 = vmatpush1.xpose.msra.mxu0 %v2904
      %2906 = vmatprep.subr.mxu0 0.0
      %v2907 = vand.u32 %v528, 4294901760
      %2908 = vmatpush1.xpose.msra.mxu0 %v2907
      %2909 = vmatprep.subr.mxu0 0.0
      %v2910 = vand.u32 %v531, 4294901760
      %2911 = vmatpush1.xpose.msra.mxu0 %v2910
      %2912 = vmatprep.subr.mxu0 0.0
      %v2913 = vand.u32 %v534, 4294901760
      %2914 = vmatpush1.xpose.msra.mxu0 %v2913
      %2915 = vmatprep.subr.mxu0 0.0
      %v2916 = vand.u32 %v537, 4294901760
      %2917 = vmatpush1.xpose.msra.mxu0 %v2916
      %2918 = vmatprep.subr.mxu0 0.0
      %v2919 = vand.u32 %v540, 4294901760
      %2920 = vmatpush1.xpose.msra.mxu0 %v2919
      %2921 = vmatprep.mubr.f32.mxu0 0.0
      %v2922 = vand.u32 %v252, 4294901760
      %v2923 = vsub.f32 %v252, %v2922
      %v2924 = vand.u32 %v2923, 4294901760
      %2925 = vmatmul.mubr.f32.gmra.mrb[0].mxu0 %v2924
      %v2926 = vpop.f32.mrb[0].mxu0
      %v2927 = vadd.f32 %v2821, %v2926
      %v2928 = vpop.f32.mrb[0].mxu0
      %v2929 = vadd.f32 %v2823, %v2928
      %2930 = vdwg.mxu0
      %2931 = vmatprep.subr.mxu0 0.0
      %v2932 = vand.u32 %v447, 4294901760
      %v2933 = vsub.f32 %v447, %v2932
      %v2934 = vand.u32 %v2933, 4294901760
      %2935 = vmatpush1.xpose.msra.mxu0 %v2934
      %2936 = vmatprep.subr.mxu0 0.0
      %v2937 = vand.u32 %v450, 4294901760
      %v2938 = vsub.f32 %v450, %v2937
      %v2939 = vand.u32 %v2938, 4294901760
      %2940 = vmatpush1.xpose.msra.mxu0 %v2939
      %2941 = vmatprep.subr.mxu0 0.0
      %v2942 = vand.u32 %v453, 4294901760
      %v2943 = vsub.f32 %v453, %v2942
      %v2944 = vand.u32 %v2943, 4294901760
      %2945 = vmatpush1.xpose.msra.mxu0 %v2944
      %2946 = vmatprep.subr.mxu0 0.0
      %v2947 = vand.u32 %v456, 4294901760
      %v2948 = vsub.f32 %v456, %v2947
      %v2949 = vand.u32 %v2948, 4294901760
      %2950 = vmatpush1.xpose.msra.mxu0 %v2949
      %2951 = vmatprep.subr.mxu0 0.0
      %v2952 = vand.u32 %v459, 4294901760
      %v2953 = vsub.f32 %v459, %v2952
      %v2954 = vand.u32 %v2953, 4294901760
      %2955 = vmatpush1.xpose.msra.mxu0 %v2954
      %2956 = vmatprep.subr.mxu0 0.0
      %v2957 = vand.u32 %v462, 4294901760
      %v2958 = vsub.f32 %v462, %v2957
      %v2959 = vand.u32 %v2958, 4294901760
      %2960 = vmatpush1.xpose.msra.mxu0 %v2959
      %2961 = vmatprep.subr.mxu0 0.0
      %v2962 = vand.u32 %v465, 4294901760
      %v2963 = vsub.f32 %v465, %v2962
      %v2964 = vand.u32 %v2963, 4294901760
      %2965 = vmatpush1.xpose.msra.mxu0 %v2964
      %2966 = vmatprep.subr.mxu0 0.0
      %v2967 = vand.u32 %v468, 4294901760
      %v2968 = vsub.f32 %v468, %v2967
      %v2969 = vand.u32 %v2968, 4294901760
      %2970 = vmatpush1.xpose.msra.mxu0 %v2969
      %2971 = vmatprep.subr.mxu0 0.0
      %v2972 = vand.u32 %v471, 4294901760
      %v2973 = vsub.f32 %v471, %v2972
      %v2974 = vand.u32 %v2973, 4294901760
      %2975 = vmatpush1.xpose.msra.mxu0 %v2974
      %2976 = vmatprep.subr.mxu0 0.0
      %v2977 = vand.u32 %v474, 4294901760
      %v2978 = vsub.f32 %v474, %v2977
      %v2979 = vand.u32 %v2978, 4294901760
      %2980 = vmatpush1.xpose.msra.mxu0 %v2979
      %2981 = vmatprep.subr.mxu0 0.0
      %v2982 = vand.u32 %v477, 4294901760
      %v2983 = vsub.f32 %v477, %v2982
      %v2984 = vand.u32 %v2983, 4294901760
      %2985 = vmatpush1.xpose.msra.mxu0 %v2984
      %2986 = vmatprep.subr.mxu0 0.0
      %v2987 = vand.u32 %v480, 4294901760
      %v2988 = vsub.f32 %v480, %v2987
      %v2989 = vand.u32 %v2988, 4294901760
      %2990 = vmatpush1.xpose.msra.mxu0 %v2989
      %2991 = vmatprep.subr.mxu0 0.0
      %v2992 = vand.u32 %v483, 4294901760
      %v2993 = vsub.f32 %v483, %v2992
      %v2994 = vand.u32 %v2993, 4294901760
      %2995 = vmatpush1.xpose.msra.mxu0 %v2994
      %2996 = vmatprep.subr.mxu0 0.0
      %v2997 = vand.u32 %v486, 4294901760
      %v2998 = vsub.f32 %v486, %v2997
      %v2999 = vand.u32 %v2998, 4294901760
      %3000 = vmatpush1.xpose.msra.mxu0 %v2999
      %3001 = vmatprep.subr.mxu0 0.0
      %v3002 = vand.u32 %v489, 4294901760
      %v3003 = vsub.f32 %v489, %v3002
      %v3004 = vand.u32 %v3003, 4294901760
      %3005 = vmatpush1.xpose.msra.mxu0 %v3004
      %3006 = vmatprep.subr.mxu0 0.0
      %v3007 = vand.u32 %v492, 4294901760
      %v3008 = vsub.f32 %v492, %v3007
      %v3009 = vand.u32 %v3008, 4294901760
      %3010 = vmatpush1.xpose.msra.mxu0 %v3009
      %3011 = vmatprep.subr.mxu0 0.0
      %v3012 = vand.u32 %v495, 4294901760
      %v3013 = vsub.f32 %v495, %v3012
      %v3014 = vand.u32 %v3013, 4294901760
      %3015 = vmatpush1.xpose.msra.mxu0 %v3014
      %3016 = vmatprep.subr.mxu0 0.0
      %v3017 = vand.u32 %v498, 4294901760
      %v3018 = vsub.f32 %v498, %v3017
      %v3019 = vand.u32 %v3018, 4294901760
      %3020 = vmatpush1.xpose.msra.mxu0 %v3019
      %3021 = vmatprep.subr.mxu0 0.0
      %v3022 = vand.u32 %v501, 4294901760
      %v3023 = vsub.f32 %v501, %v3022
      %v3024 = vand.u32 %v3023, 4294901760
      %3025 = vmatpush1.xpose.msra.mxu0 %v3024
      %3026 = vmatprep.subr.mxu0 0.0
      %v3027 = vand.u32 %v504, 4294901760
      %v3028 = vsub.f32 %v504, %v3027
      %v3029 = vand.u32 %v3028, 4294901760
      %3030 = vmatpush1.xpose.msra.mxu0 %v3029
      %3031 = vmatprep.subr.mxu0 0.0
      %v3032 = vand.u32 %v507, 4294901760
      %v3033 = vsub.f32 %v507, %v3032
      %v3034 = vand.u32 %v3033, 4294901760
      %3035 = vmatpush1.xpose.msra.mxu0 %v3034
      %3036 = vmatprep.subr.mxu0 0.0
      %v3037 = vand.u32 %v510, 4294901760
      %v3038 = vsub.f32 %v510, %v3037
      %v3039 = vand.u32 %v3038, 4294901760
      %3040 = vmatpush1.xpose.msra.mxu0 %v3039
      %3041 = vmatprep.subr.mxu0 0.0
      %v3042 = vand.u32 %v513, 4294901760
      %v3043 = vsub.f32 %v513, %v3042
      %v3044 = vand.u32 %v3043, 4294901760
      %3045 = vmatpush1.xpose.msra.mxu0 %v3044
      %3046 = vmatprep.subr.mxu0 0.0
      %v3047 = vand.u32 %v516, 4294901760
      %v3048 = vsub.f32 %v516, %v3047
      %v3049 = vand.u32 %v3048, 4294901760
      %3050 = vmatpush1.xpose.msra.mxu0 %v3049
      %3051 = vmatprep.subr.mxu0 0.0
      %v3052 = vand.u32 %v519, 4294901760
      %v3053 = vsub.f32 %v519, %v3052
      %v3054 = vand.u32 %v3053, 4294901760
      %3055 = vmatpush1.xpose.msra.mxu0 %v3054
      %3056 = vmatprep.subr.mxu0 0.0
      %v3057 = vand.u32 %v522, 4294901760
      %v3058 = vsub.f32 %v522, %v3057
      %v3059 = vand.u32 %v3058, 4294901760
      %3060 = vmatpush1.xpose.msra.mxu0 %v3059
      %3061 = vmatprep.subr.mxu0 0.0
      %v3062 = vand.u32 %v525, 4294901760
      %v3063 = vsub.f32 %v525, %v3062
      %v3064 = vand.u32 %v3063, 4294901760
      %3065 = vmatpush1.xpose.msra.mxu0 %v3064
      %3066 = vmatprep.subr.mxu0 0.0
      %v3067 = vand.u32 %v528, 4294901760
      %v3068 = vsub.f32 %v528, %v3067
      %v3069 = vand.u32 %v3068, 4294901760
      %3070 = vmatpush1.xpose.msra.mxu0 %v3069
      %3071 = vmatprep.subr.mxu0 0.0
      %v3072 = vand.u32 %v531, 4294901760
      %v3073 = vsub.f32 %v531, %v3072
      %v3074 = vand.u32 %v3073, 4294901760
      %3075 = vmatpush1.xpose.msra.mxu0 %v3074
      %3076 = vmatprep.subr.mxu0 0.0
      %v3077 = vand.u32 %v534, 4294901760
      %v3078 = vsub.f32 %v534, %v3077
      %v3079 = vand.u32 %v3078, 4294901760
      %3080 = vmatpush1.xpose.msra.mxu0 %v3079
      %3081 = vmatprep.subr.mxu0 0.0
      %v3082 = vand.u32 %v537, 4294901760
      %v3083 = vsub.f32 %v537, %v3082
      %v3084 = vand.u32 %v3083, 4294901760
      %3085 = vmatpush1.xpose.msra.mxu0 %v3084
      %3086 = vmatprep.subr.mxu0 0.0
      %v3087 = vand.u32 %v540, 4294901760
      %v3088 = vsub.f32 %v540, %v3087
      %v3089 = vand.u32 %v3088, 4294901760
      %3090 = vmatpush1.xpose.msra.mxu0 %v3089
      %3091 = vmatprep.mubr.f32.mxu0 0.0
      %v3092 = vand.u32 %v252, 4294901760
      %3093 = vmatmul.mubr.f32.gmra.mrb[0].mxu0 %v3092
      %v3094 = vpop.f32.mrb[0].mxu0
      %v3095 = vadd.f32 %v2927, %v3094
      %v3096 = vpop.f32.mrb[0].mxu0
      %v3097 = vadd.f32 %v2929, %v3096
      %3098 = vdwg.mxu0
      %3099 = vmatprep.subr.mxu0 0.0
      %v3100 = vand.u32 %v447, 4294901760
      %3101 = vmatpush1.xpose.msra.mxu0 %v3100
      %3102 = vmatprep.subr.mxu0 0.0
      %v3103 = vand.u32 %v450, 4294901760
      %3104 = vmatpush1.xpose.msra.mxu0 %v3103
      %3105 = vmatprep.subr.mxu0 0.0
      %v3106 = vand.u32 %v453, 4294901760
      %3107 = vmatpush1.xpose.msra.mxu0 %v3106
      %3108 = vmatprep.subr.mxu0 0.0
      %v3109 = vand.u32 %v456, 4294901760
      %3110 = vmatpush1.xpose.msra.mxu0 %v3109
      %3111 = vmatprep.subr.mxu0 0.0
      %v3112 = vand.u32 %v459, 4294901760
      %3113 = vmatpush1.xpose.msra.mxu0 %v3112
      %3114 = vmatprep.subr.mxu0 0.0
      %v3115 = vand.u32 %v462, 4294901760
      %3116 = vmatpush1.xpose.msra.mxu0 %v3115
      %3117 = vmatprep.subr.mxu0 0.0
      %v3118 = vand.u32 %v465, 4294901760
      %3119 = vmatpush1.xpose.msra.mxu0 %v3118
      %3120 = vmatprep.subr.mxu0 0.0
      %v3121 = vand.u32 %v468, 4294901760
      %3122 = vmatpush1.xpose.msra.mxu0 %v3121
      %3123 = vmatprep.subr.mxu0 0.0
      %v3124 = vand.u32 %v471, 4294901760
      %3125 = vmatpush1.xpose.msra.mxu0 %v3124
      %3126 = vmatprep.subr.mxu0 0.0
      %v3127 = vand.u32 %v474, 4294901760
      %3128 = vmatpush1.xpose.msra.mxu0 %v3127
      %3129 = vmatprep.subr.mxu0 0.0
      %v3130 = vand.u32 %v477, 4294901760
      %3131 = vmatpush1.xpose.msra.mxu0 %v3130
      %3132 = vmatprep.subr.mxu0 0.0
      %v3133 = vand.u32 %v480, 4294901760
      %3134 = vmatpush1.xpose.msra.mxu0 %v3133
      %3135 = vmatprep.subr.mxu0 0.0
      %v3136 = vand.u32 %v483, 4294901760
      %3137 = vmatpush1.xpose.msra.mxu0 %v3136
      %3138 = vmatprep.subr.mxu0 0.0
      %v3139 = vand.u32 %v486, 4294901760
      %3140 = vmatpush1.xpose.msra.mxu0 %v3139
      %3141 = vmatprep.subr.mxu0 0.0
      %v3142 = vand.u32 %v489, 4294901760
      %3143 = vmatpush1.xpose.msra.mxu0 %v3142
      %3144 = vmatprep.subr.mxu0 0.0
      %v3145 = vand.u32 %v492, 4294901760
      %3146 = vmatpush1.xpose.msra.mxu0 %v3145
      %3147 = vmatprep.subr.mxu0 0.0
      %v3148 = vand.u32 %v495, 4294901760
      %3149 = vmatpush1.xpose.msra.mxu0 %v3148
      %3150 = vmatprep.subr.mxu0 0.0
      %v3151 = vand.u32 %v498, 4294901760
      %3152 = vmatpush1.xpose.msra.mxu0 %v3151
      %3153 = vmatprep.subr.mxu0 0.0
      %v3154 = vand.u32 %v501, 4294901760
      %3155 = vmatpush1.xpose.msra.mxu0 %v3154
      %3156 = vmatprep.subr.mxu0 0.0
      %v3157 = vand.u32 %v504, 4294901760
      %3158 = vmatpush1.xpose.msra.mxu0 %v3157
      %3159 = vmatprep.subr.mxu0 0.0
      %v3160 = vand.u32 %v507, 4294901760
      %3161 = vmatpush1.xpose.msra.mxu0 %v3160
      %3162 = vmatprep.subr.mxu0 0.0
      %v3163 = vand.u32 %v510, 4294901760
      %3164 = vmatpush1.xpose.msra.mxu0 %v3163
      %3165 = vmatprep.subr.mxu0 0.0
      %v3166 = vand.u32 %v513, 4294901760
      %3167 = vmatpush1.xpose.msra.mxu0 %v3166
      %3168 = vmatprep.subr.mxu0 0.0
      %v3169 = vand.u32 %v516, 4294901760
      %3170 = vmatpush1.xpose.msra.mxu0 %v3169
      %3171 = vmatprep.subr.mxu0 0.0
      %v3172 = vand.u32 %v519, 4294901760
      %3173 = vmatpush1.xpose.msra.mxu0 %v3172
      %3174 = vmatprep.subr.mxu0 0.0
      %v3175 = vand.u32 %v522, 4294901760
      %3176 = vmatpush1.xpose.msra.mxu0 %v3175
      %3177 = vmatprep.subr.mxu0 0.0
      %v3178 = vand.u32 %v525, 4294901760
      %3179 = vmatpush1.xpose.msra.mxu0 %v3178
      %3180 = vmatprep.subr.mxu0 0.0
      %v3181 = vand.u32 %v528, 4294901760
      %3182 = vmatpush1.xpose.msra.mxu0 %v3181
      %3183 = vmatprep.subr.mxu0 0.0
      %v3184 = vand.u32 %v531, 4294901760
      %3185 = vmatpush1.xpose.msra.mxu0 %v3184
      %3186 = vmatprep.subr.mxu0 0.0
      %v3187 = vand.u32 %v534, 4294901760
      %3188 = vmatpush1.xpose.msra.mxu0 %v3187
      %3189 = vmatprep.subr.mxu0 0.0
      %v3190 = vand.u32 %v537, 4294901760
      %3191 = vmatpush1.xpose.msra.mxu0 %v3190
      %3192 = vmatprep.subr.mxu0 0.0
      %v3193 = vand.u32 %v540, 4294901760
      %3194 = vmatpush1.xpose.msra.mxu0 %v3193
      %3195 = vmatprep.mubr.f32.mxu0 0.0
      %v3196 = vand.u32 %v252, 4294901760
      %3197 = vmatmul.mubr.f32.gmra.mrb[0].mxu0 %v3196
      %v3198 = vpop.f32.mrb[0].mxu0
      %v3199 = vadd.f32 %v3095, %v3198
      %v3200 = vpop.f32.mrb[0].mxu0
      %v3201 = vadd.f32 %v3097, %v3200
      %3202 = vdwg.mxu0
      %3203 = vmatprep.subr.mxu0 0.0
      %v3204 = vand.u32 %v543, 4294901760
      %3205 = vmatpush1.xpose.msra.mxu0 %v3204
      %3206 = vmatprep.subr.mxu0 0.0
      %v3207 = vand.u32 %v546, 4294901760
      %3208 = vmatpush1.xpose.msra.mxu0 %v3207
      %3209 = vmatprep.subr.mxu0 0.0
      %v3210 = vand.u32 %v549, 4294901760
      %3211 = vmatpush1.xpose.msra.mxu0 %v3210
      %3212 = vmatprep.subr.mxu0 0.0
      %v3213 = vand.u32 %v552, 4294901760
      %3214 = vmatpush1.xpose.msra.mxu0 %v3213
      %3215 = vmatprep.subr.mxu0 0.0
      %v3216 = vand.u32 %v555, 4294901760
      %3217 = vmatpush1.xpose.msra.mxu0 %v3216
      %3218 = vmatprep.subr.mxu0 0.0
      %v3219 = vand.u32 %v558, 4294901760
      %3220 = vmatpush1.xpose.msra.mxu0 %v3219
      %3221 = vmatprep.subr.mxu0 0.0
      %v3222 = vand.u32 %v561, 4294901760
      %3223 = vmatpush1.xpose.msra.mxu0 %v3222
      %3224 = vmatprep.subr.mxu0 0.0
      %v3225 = vand.u32 %v564, 4294901760
      %3226 = vmatpush1.xpose.msra.mxu0 %v3225
      %3227 = vmatprep.subr.mxu0 0.0
      %v3228 = vand.u32 %v567, 4294901760
      %3229 = vmatpush1.xpose.msra.mxu0 %v3228
      %3230 = vmatprep.subr.mxu0 0.0
      %v3231 = vand.u32 %v570, 4294901760
      %3232 = vmatpush1.xpose.msra.mxu0 %v3231
      %3233 = vmatprep.subr.mxu0 0.0
      %v3234 = vand.u32 %v573, 4294901760
      %3235 = vmatpush1.xpose.msra.mxu0 %v3234
      %3236 = vmatprep.subr.mxu0 0.0
      %v3237 = vand.u32 %v576, 4294901760
      %3238 = vmatpush1.xpose.msra.mxu0 %v3237
      %3239 = vmatprep.subr.mxu0 0.0
      %v3240 = vand.u32 %v579, 4294901760
      %3241 = vmatpush1.xpose.msra.mxu0 %v3240
      %3242 = vmatprep.subr.mxu0 0.0
      %v3243 = vand.u32 %v582, 4294901760
      %3244 = vmatpush1.xpose.msra.mxu0 %v3243
      %3245 = vmatprep.subr.mxu0 0.0
      %v3246 = vand.u32 %v585, 4294901760
      %3247 = vmatpush1.xpose.msra.mxu0 %v3246
      %3248 = vmatprep.subr.mxu0 0.0
      %v3249 = vand.u32 %v588, 4294901760
      %3250 = vmatpush1.xpose.msra.mxu0 %v3249
      %3251 = vmatprep.subr.mxu0 0.0
      %v3252 = vand.u32 %v591, 4294901760
      %3253 = vmatpush1.xpose.msra.mxu0 %v3252
      %3254 = vmatprep.subr.mxu0 0.0
      %v3255 = vand.u32 %v594, 4294901760
      %3256 = vmatpush1.xpose.msra.mxu0 %v3255
      %3257 = vmatprep.subr.mxu0 0.0
      %v3258 = vand.u32 %v597, 4294901760
      %3259 = vmatpush1.xpose.msra.mxu0 %v3258
      %3260 = vmatprep.subr.mxu0 0.0
      %v3261 = vand.u32 %v600, 4294901760
      %3262 = vmatpush1.xpose.msra.mxu0 %v3261
      %3263 = vmatprep.subr.mxu0 0.0
      %v3264 = vand.u32 %v603, 4294901760
      %3265 = vmatpush1.xpose.msra.mxu0 %v3264
      %3266 = vmatprep.subr.mxu0 0.0
      %v3267 = vand.u32 %v606, 4294901760
      %3268 = vmatpush1.xpose.msra.mxu0 %v3267
      %3269 = vmatprep.subr.mxu0 0.0
      %v3270 = vand.u32 %v609, 4294901760
      %3271 = vmatpush1.xpose.msra.mxu0 %v3270
      %3272 = vmatprep.subr.mxu0 0.0
      %v3273 = vand.u32 %v612, 4294901760
      %3274 = vmatpush1.xpose.msra.mxu0 %v3273
      %3275 = vmatprep.subr.mxu0 0.0
      %v3276 = vand.u32 %v615, 4294901760
      %3277 = vmatpush1.xpose.msra.mxu0 %v3276
      %3278 = vmatprep.subr.mxu0 0.0
      %v3279 = vand.u32 %v618, 4294901760
      %3280 = vmatpush1.xpose.msra.mxu0 %v3279
      %3281 = vmatprep.subr.mxu0 0.0
      %v3282 = vand.u32 %v621, 4294901760
      %3283 = vmatpush1.xpose.msra.mxu0 %v3282
      %3284 = vmatprep.subr.mxu0 0.0
      %v3285 = vand.u32 %v624, 4294901760
      %3286 = vmatpush1.xpose.msra.mxu0 %v3285
      %3287 = vmatprep.subr.mxu0 0.0
      %v3288 = vand.u32 %v627, 4294901760
      %3289 = vmatpush1.xpose.msra.mxu0 %v3288
      %3290 = vmatprep.subr.mxu0 0.0
      %v3291 = vand.u32 %v630, 4294901760
      %3292 = vmatpush1.xpose.msra.mxu0 %v3291
      %3293 = vmatprep.subr.mxu0 0.0
      %v3294 = vand.u32 %v633, 4294901760
      %3295 = vmatpush1.xpose.msra.mxu0 %v3294
      %3296 = vmatprep.subr.mxu0 0.0
      %v3297 = vand.u32 %v636, 4294901760
      %3298 = vmatpush1.xpose.msra.mxu0 %v3297
      %3299 = vmatprep.mubr.f32.mxu0 0.0
      %v3300 = vand.u32 %v252, 4294901760
      %v3301 = vsub.f32 %v252, %v3300
      %v3302 = vand.u32 %v3301, 4294901760
      %v3303 = vsub.f32 %v3301, %v3302
      %v3304 = vand.u32 %v3303, 4294901760
      %3305 = vmatmul.mubr.f32.gmra.mrb[0].mxu0 %v3304
      %v3306 = vpop.f32.mrb[0].mxu0
      %v3307 = vadd.f32 0.0, %v3306
      %v3308 = vpop.f32.mrb[0].mxu0
      %v3309 = vadd.f32 0.0, %v3308
      %3310 = vdwg.mxu0
      %3311 = vmatprep.subr.mxu0 0.0
      %v3312 = vand.u32 %v543, 4294901760
      %v3313 = vsub.f32 %v543, %v3312
      %v3314 = vand.u32 %v3313, 4294901760
      %v3315 = vsub.f32 %v3313, %v3314
      %v3316 = vand.u32 %v3315, 4294901760
      %3317 = vmatpush1.xpose.msra.mxu0 %v3316
      %3318 = vmatprep.subr.mxu0 0.0
      %v3319 = vand.u32 %v546, 4294901760
      %v3320 = vsub.f32 %v546, %v3319
      %v3321 = vand.u32 %v3320, 4294901760
      %v3322 = vsub.f32 %v3320, %v3321
      %v3323 = vand.u32 %v3322, 4294901760
      %3324 = vmatpush1.xpose.msra.mxu0 %v3323
      %3325 = vmatprep.subr.mxu0 0.0
      %v3326 = vand.u32 %v549, 4294901760
      %v3327 = vsub.f32 %v549, %v3326
      %v3328 = vand.u32 %v3327, 4294901760
      %v3329 = vsub.f32 %v3327, %v3328
      %v3330 = vand.u32 %v3329, 4294901760
      %3331 = vmatpush1.xpose.msra.mxu0 %v3330
      %3332 = vmatprep.subr.mxu0 0.0
      %v3333 = vand.u32 %v552, 4294901760
      %v3334 = vsub.f32 %v552, %v3333
      %v3335 = vand.u32 %v3334, 4294901760
      %v3336 = vsub.f32 %v3334, %v3335
      %v3337 = vand.u32 %v3336, 4294901760
      %3338 = vmatpush1.xpose.msra.mxu0 %v3337
      %3339 = vmatprep.subr.mxu0 0.0
      %v3340 = vand.u32 %v555, 4294901760
      %v3341 = vsub.f32 %v555, %v3340
      %v3342 = vand.u32 %v3341, 4294901760
      %v3343 = vsub.f32 %v3341, %v3342
      %v3344 = vand.u32 %v3343, 4294901760
      %3345 = vmatpush1.xpose.msra.mxu0 %v3344
      %3346 = vmatprep.subr.mxu0 0.0
      %v3347 = vand.u32 %v558, 4294901760
      %v3348 = vsub.f32 %v558, %v3347
      %v3349 = vand.u32 %v3348, 4294901760
      %v3350 = vsub.f32 %v3348, %v3349
      %v3351 = vand.u32 %v3350, 4294901760
      %3352 = vmatpush1.xpose.msra.mxu0 %v3351
      %3353 = vmatprep.subr.mxu0 0.0
      %v3354 = vand.u32 %v561, 4294901760
      %v3355 = vsub.f32 %v561, %v3354
      %v3356 = vand.u32 %v3355, 4294901760
      %v3357 = vsub.f32 %v3355, %v3356
      %v3358 = vand.u32 %v3357, 4294901760
      %3359 = vmatpush1.xpose.msra.mxu0 %v3358
      %3360 = vmatprep.subr.mxu0 0.0
      %v3361 = vand.u32 %v564, 4294901760
      %v3362 = vsub.f32 %v564, %v3361
      %v3363 = vand.u32 %v3362, 4294901760
      %v3364 = vsub.f32 %v3362, %v3363
      %v3365 = vand.u32 %v3364, 4294901760
      %3366 = vmatpush1.xpose.msra.mxu0 %v3365
      %3367 = vmatprep.subr.mxu0 0.0
      %v3368 = vand.u32 %v567, 4294901760
      %v3369 = vsub.f32 %v567, %v3368
      %v3370 = vand.u32 %v3369, 4294901760
      %v3371 = vsub.f32 %v3369, %v3370
      %v3372 = vand.u32 %v3371, 4294901760
      %3373 = vmatpush1.xpose.msra.mxu0 %v3372
      %3374 = vmatprep.subr.mxu0 0.0
      %v3375 = vand.u32 %v570, 4294901760
      %v3376 = vsub.f32 %v570, %v3375
      %v3377 = vand.u32 %v3376, 4294901760
      %v3378 = vsub.f32 %v3376, %v3377
      %v3379 = vand.u32 %v3378, 4294901760
      %3380 = vmatpush1.xpose.msra.mxu0 %v3379
      %3381 = vmatprep.subr.mxu0 0.0
      %v3382 = vand.u32 %v573, 4294901760
      %v3383 = vsub.f32 %v573, %v3382
      %v3384 = vand.u32 %v3383, 4294901760
      %v3385 = vsub.f32 %v3383, %v3384
      %v3386 = vand.u32 %v3385, 4294901760
      %3387 = vmatpush1.xpose.msra.mxu0 %v3386
      %3388 = vmatprep.subr.mxu0 0.0
      %v3389 = vand.u32 %v576, 4294901760
      %v3390 = vsub.f32 %v576, %v3389
      %v3391 = vand.u32 %v3390, 4294901760
      %v3392 = vsub.f32 %v3390, %v3391
      %v3393 = vand.u32 %v3392, 4294901760
      %3394 = vmatpush1.xpose.msra.mxu0 %v3393
      %3395 = vmatprep.subr.mxu0 0.0
      %v3396 = vand.u32 %v579, 4294901760
      %v3397 = vsub.f32 %v579, %v3396
      %v3398 = vand.u32 %v3397, 4294901760
      %v3399 = vsub.f32 %v3397, %v3398
      %v3400 = vand.u32 %v3399, 4294901760
      %3401 = vmatpush1.xpose.msra.mxu0 %v3400
      %3402 = vmatprep.subr.mxu0 0.0
      %v3403 = vand.u32 %v582, 4294901760
      %v3404 = vsub.f32 %v582, %v3403
      %v3405 = vand.u32 %v3404, 4294901760
      %v3406 = vsub.f32 %v3404, %v3405
      %v3407 = vand.u32 %v3406, 4294901760
      %3408 = vmatpush1.xpose.msra.mxu0 %v3407
      %3409 = vmatprep.subr.mxu0 0.0
      %v3410 = vand.u32 %v585, 4294901760
      %v3411 = vsub.f32 %v585, %v3410
      %v3412 = vand.u32 %v3411, 4294901760
      %v3413 = vsub.f32 %v3411, %v3412
      %v3414 = vand.u32 %v3413, 4294901760
      %3415 = vmatpush1.xpose.msra.mxu0 %v3414
      %3416 = vmatprep.subr.mxu0 0.0
      %v3417 = vand.u32 %v588, 4294901760
      %v3418 = vsub.f32 %v588, %v3417
      %v3419 = vand.u32 %v3418, 4294901760
      %v3420 = vsub.f32 %v3418, %v3419
      %v3421 = vand.u32 %v3420, 4294901760
      %3422 = vmatpush1.xpose.msra.mxu0 %v3421
      %3423 = vmatprep.subr.mxu0 0.0
      %v3424 = vand.u32 %v591, 4294901760
      %v3425 = vsub.f32 %v591, %v3424
      %v3426 = vand.u32 %v3425, 4294901760
      %v3427 = vsub.f32 %v3425, %v3426
      %v3428 = vand.u32 %v3427, 4294901760
      %3429 = vmatpush1.xpose.msra.mxu0 %v3428
      %3430 = vmatprep.subr.mxu0 0.0
      %v3431 = vand.u32 %v594, 4294901760
      %v3432 = vsub.f32 %v594, %v3431
      %v3433 = vand.u32 %v3432, 4294901760
      %v3434 = vsub.f32 %v3432, %v3433
      %v3435 = vand.u32 %v3434, 4294901760
      %3436 = vmatpush1.xpose.msra.mxu0 %v3435
      %3437 = vmatprep.subr.mxu0 0.0
      %v3438 = vand.u32 %v597, 4294901760
      %v3439 = vsub.f32 %v597, %v3438
      %v3440 = vand.u32 %v3439, 4294901760
      %v3441 = vsub.f32 %v3439, %v3440
      %v3442 = vand.u32 %v3441, 4294901760
      %3443 = vmatpush1.xpose.msra.mxu0 %v3442
      %3444 = vmatprep.subr.mxu0 0.0
      %v3445 = vand.u32 %v600, 4294901760
      %v3446 = vsub.f32 %v600, %v3445
      %v3447 = vand.u32 %v3446, 4294901760
      %v3448 = vsub.f32 %v3446, %v3447
      %v3449 = vand.u32 %v3448, 4294901760
      %3450 = vmatpush1.xpose.msra.mxu0 %v3449
      %3451 = vmatprep.subr.mxu0 0.0
      %v3452 = vand.u32 %v603, 4294901760
      %v3453 = vsub.f32 %v603, %v3452
      %v3454 = vand.u32 %v3453, 4294901760
      %v3455 = vsub.f32 %v3453, %v3454
      %v3456 = vand.u32 %v3455, 4294901760
      %3457 = vmatpush1.xpose.msra.mxu0 %v3456
      %3458 = vmatprep.subr.mxu0 0.0
      %v3459 = vand.u32 %v606, 4294901760
      %v3460 = vsub.f32 %v606, %v3459
      %v3461 = vand.u32 %v3460, 4294901760
      %v3462 = vsub.f32 %v3460, %v3461
      %v3463 = vand.u32 %v3462, 4294901760
      %3464 = vmatpush1.xpose.msra.mxu0 %v3463
      %3465 = vmatprep.subr.mxu0 0.0
      %v3466 = vand.u32 %v609, 4294901760
      %v3467 = vsub.f32 %v609, %v3466
      %v3468 = vand.u32 %v3467, 4294901760
      %v3469 = vsub.f32 %v3467, %v3468
      %v3470 = vand.u32 %v3469, 4294901760
      %3471 = vmatpush1.xpose.msra.mxu0 %v3470
      %3472 = vmatprep.subr.mxu0 0.0
      %v3473 = vand.u32 %v612, 4294901760
      %v3474 = vsub.f32 %v612, %v3473
      %v3475 = vand.u32 %v3474, 4294901760
      %v3476 = vsub.f32 %v3474, %v3475
      %v3477 = vand.u32 %v3476, 4294901760
      %3478 = vmatpush1.xpose.msra.mxu0 %v3477
      %3479 = vmatprep.subr.mxu0 0.0
      %v3480 = vand.u32 %v615, 4294901760
      %v3481 = vsub.f32 %v615, %v3480
      %v3482 = vand.u32 %v3481, 4294901760
      %v3483 = vsub.f32 %v3481, %v3482
      %v3484 = vand.u32 %v3483, 4294901760
      %3485 = vmatpush1.xpose.msra.mxu0 %v3484
      %3486 = vmatprep.subr.mxu0 0.0
      %v3487 = vand.u32 %v618, 4294901760
      %v3488 = vsub.f32 %v618, %v3487
      %v3489 = vand.u32 %v3488, 4294901760
      %v3490 = vsub.f32 %v3488, %v3489
      %v3491 = vand.u32 %v3490, 4294901760
      %3492 = vmatpush1.xpose.msra.mxu0 %v3491
      %3493 = vmatprep.subr.mxu0 0.0
      %v3494 = vand.u32 %v621, 4294901760
      %v3495 = vsub.f32 %v621, %v3494
      %v3496 = vand.u32 %v3495, 4294901760
      %v3497 = vsub.f32 %v3495, %v3496
      %v3498 = vand.u32 %v3497, 4294901760
      %3499 = vmatpush1.xpose.msra.mxu0 %v3498
      %3500 = vmatprep.subr.mxu0 0.0
      %v3501 = vand.u32 %v624, 4294901760
      %v3502 = vsub.f32 %v624, %v3501
      %v3503 = vand.u32 %v3502, 4294901760
      %v3504 = vsub.f32 %v3502, %v3503
      %v3505 = vand.u32 %v3504, 4294901760
      %3506 = vmatpush1.xpose.msra.mxu0 %v3505
      %3507 = vmatprep.subr.mxu0 0.0
      %v3508 = vand.u32 %v627, 4294901760
      %v3509 = vsub.f32 %v627, %v3508
      %v3510 = vand.u32 %v3509, 4294901760
      %v3511 = vsub.f32 %v3509, %v3510
      %v3512 = vand.u32 %v3511, 4294901760
      %3513 = vmatpush1.xpose.msra.mxu0 %v3512
      %3514 = vmatprep.subr.mxu0 0.0
      %v3515 = vand.u32 %v630, 4294901760
      %v3516 = vsub.f32 %v630, %v3515
      %v3517 = vand.u32 %v3516, 4294901760
      %v3518 = vsub.f32 %v3516, %v3517
      %v3519 = vand.u32 %v3518, 4294901760
      %3520 = vmatpush1.xpose.msra.mxu0 %v3519
      %3521 = vmatprep.subr.mxu0 0.0
      %v3522 = vand.u32 %v633, 4294901760
      %v3523 = vsub.f32 %v633, %v3522
      %v3524 = vand.u32 %v3523, 4294901760
      %v3525 = vsub.f32 %v3523, %v3524
      %v3526 = vand.u32 %v3525, 4294901760
      %3527 = vmatpush1.xpose.msra.mxu0 %v3526
      %3528 = vmatprep.subr.mxu0 0.0
      %v3529 = vand.u32 %v636, 4294901760
      %v3530 = vsub.f32 %v636, %v3529
      %v3531 = vand.u32 %v3530, 4294901760
      %v3532 = vsub.f32 %v3530, %v3531
      %v3533 = vand.u32 %v3532, 4294901760
      %3534 = vmatpush1.xpose.msra.mxu0 %v3533
      %3535 = vmatprep.mubr.f32.mxu0 0.0
      %v3536 = vand.u32 %v252, 4294901760
      %3537 = vmatmul.mubr.f32.gmra.mrb[0].mxu0 %v3536
      %v3538 = vpop.f32.mrb[0].mxu0
      %v3539 = vadd.f32 %v3307, %v3538
      %v3540 = vpop.f32.mrb[0].mxu0
      %v3541 = vadd.f32 %v3309, %v3540
      %3542 = vdwg.mxu0
      %3543 = vmatprep.subr.mxu0 0.0
      %v3544 = vand.u32 %v543, 4294901760
      %v3545 = vsub.f32 %v543, %v3544
      %3546 = vmatpush1.xpose.msra.mxu0 %v3545
      %3547 = vmatprep.subr.mxu0 0.0
      %v3548 = vand.u32 %v546, 4294901760
      %v3549 = vsub.f32 %v546, %v3548
      %3550 = vmatpush1.xpose.msra.mxu0 %v3549
      %3551 = vmatprep.subr.mxu0 0.0
      %v3552 = vand.u32 %v549, 4294901760
      %v3553 = vsub.f32 %v549, %v3552
      %3554 = vmatpush1.xpose.msra.mxu0 %v3553
      %3555 = vmatprep.subr.mxu0 0.0
      %v3556 = vand.u32 %v552, 4294901760
      %v3557 = vsub.f32 %v552, %v3556
      %3558 = vmatpush1.xpose.msra.mxu0 %v3557
      %3559 = vmatprep.subr.mxu0 0.0
      %v3560 = vand.u32 %v555, 4294901760
      %v3561 = vsub.f32 %v555, %v3560
      %3562 = vmatpush1.xpose.msra.mxu0 %v3561
      %3563 = vmatprep.subr.mxu0 0.0
      %v3564 = vand.u32 %v558, 4294901760
      %v3565 = vsub.f32 %v558, %v3564
      %3566 = vmatpush1.xpose.msra.mxu0 %v3565
      %3567 = vmatprep.subr.mxu0 0.0
      %v3568 = vand.u32 %v561, 4294901760
      %v3569 = vsub.f32 %v561, %v3568
      %3570 = vmatpush1.xpose.msra.mxu0 %v3569
      %3571 = vmatprep.subr.mxu0 0.0
      %v3572 = vand.u32 %v564, 4294901760
      %v3573 = vsub.f32 %v564, %v3572
      %3574 = vmatpush1.xpose.msra.mxu0 %v3573
      %3575 = vmatprep.subr.mxu0 0.0
      %v3576 = vand.u32 %v567, 4294901760
      %v3577 = vsub.f32 %v567, %v3576
      %3578 = vmatpush1.xpose.msra.mxu0 %v3577
      %3579 = vmatprep.subr.mxu0 0.0
      %v3580 = vand.u32 %v570, 4294901760
      %v3581 = vsub.f32 %v570, %v3580
      %3582 = vmatpush1.xpose.msra.mxu0 %v3581
      %3583 = vmatprep.subr.mxu0 0.0
      %v3584 = vand.u32 %v573, 4294901760
      %v3585 = vsub.f32 %v573, %v3584
      %3586 = vmatpush1.xpose.msra.mxu0 %v3585
      %3587 = vmatprep.subr.mxu0 0.0
      %v3588 = vand.u32 %v576, 4294901760
      %v3589 = vsub.f32 %v576, %v3588
      %3590 = vmatpush1.xpose.msra.mxu0 %v3589
      %3591 = vmatprep.subr.mxu0 0.0
      %v3592 = vand.u32 %v579, 4294901760
      %v3593 = vsub.f32 %v579, %v3592
      %3594 = vmatpush1.xpose.msra.mxu0 %v3593
      %3595 = vmatprep.subr.mxu0 0.0
      %v3596 = vand.u32 %v582, 4294901760
      %v3597 = vsub.f32 %v582, %v3596
      %3598 = vmatpush1.xpose.msra.mxu0 %v3597
      %3599 = vmatprep.subr.mxu0 0.0
      %v3600 = vand.u32 %v585, 4294901760
      %v3601 = vsub.f32 %v585, %v3600
      %3602 = vmatpush1.xpose.msra.mxu0 %v3601
      %3603 = vmatprep.subr.mxu0 0.0
      %v3604 = vand.u32 %v588, 4294901760
      %v3605 = vsub.f32 %v588, %v3604
      %3606 = vmatpush1.xpose.msra.mxu0 %v3605
      %3607 = vmatprep.subr.mxu0 0.0
      %v3608 = vand.u32 %v591, 4294901760
      %v3609 = vsub.f32 %v591, %v3608
      %3610 = vmatpush1.xpose.msra.mxu0 %v3609
      %3611 = vmatprep.subr.mxu0 0.0
      %v3612 = vand.u32 %v594, 4294901760
      %v3613 = vsub.f32 %v594, %v3612
      %3614 = vmatpush1.xpose.msra.mxu0 %v3613
      %3615 = vmatprep.subr.mxu0 0.0
      %v3616 = vand.u32 %v597, 4294901760
      %v3617 = vsub.f32 %v597, %v3616
      %3618 = vmatpush1.xpose.msra.mxu0 %v3617
      %3619 = vmatprep.subr.mxu0 0.0
      %v3620 = vand.u32 %v600, 4294901760
      %v3621 = vsub.f32 %v600, %v3620
      %3622 = vmatpush1.xpose.msra.mxu0 %v3621
      %3623 = vmatprep.subr.mxu0 0.0
      %v3624 = vand.u32 %v603, 4294901760
      %v3625 = vsub.f32 %v603, %v3624
      %3626 = vmatpush1.xpose.msra.mxu0 %v3625
      %3627 = vmatprep.subr.mxu0 0.0
      %v3628 = vand.u32 %v606, 4294901760
      %v3629 = vsub.f32 %v606, %v3628
      %3630 = vmatpush1.xpose.msra.mxu0 %v3629
      %3631 = vmatprep.subr.mxu0 0.0
      %v3632 = vand.u32 %v609, 4294901760
      %v3633 = vsub.f32 %v609, %v3632
      %3634 = vmatpush1.xpose.msra.mxu0 %v3633
      %3635 = vmatprep.subr.mxu0 0.0
      %v3636 = vand.u32 %v612, 4294901760
      %v3637 = vsub.f32 %v612, %v3636
      %3638 = vmatpush1.xpose.msra.mxu0 %v3637
      %3639 = vmatprep.subr.mxu0 0.0
      %v3640 = vand.u32 %v615, 4294901760
      %v3641 = vsub.f32 %v615, %v3640
      %3642 = vmatpush1.xpose.msra.mxu0 %v3641
      %3643 = vmatprep.subr.mxu0 0.0
      %v3644 = vand.u32 %v618, 4294901760
      %v3645 = vsub.f32 %v618, %v3644
      %3646 = vmatpush1.xpose.msra.mxu0 %v3645
      %3647 = vmatprep.subr.mxu0 0.0
      %v3648 = vand.u32 %v621, 4294901760
      %v3649 = vsub.f32 %v621, %v3648
      %3650 = vmatpush1.xpose.msra.mxu0 %v3649
      %3651 = vmatprep.subr.mxu0 0.0
      %v3652 = vand.u32 %v624, 4294901760
      %v3653 = vsub.f32 %v624, %v3652
      %3654 = vmatpush1.xpose.msra.mxu0 %v3653
      %3655 = vmatprep.subr.mxu0 0.0
      %v3656 = vand.u32 %v627, 4294901760
      %v3657 = vsub.f32 %v627, %v3656
      %3658 = vmatpush1.xpose.msra.mxu0 %v3657
      %3659 = vmatprep.subr.mxu0 0.0
      %v3660 = vand.u32 %v630, 4294901760
      %v3661 = vsub.f32 %v630, %v3660
      %3662 = vmatpush1.xpose.msra.mxu0 %v3661
      %3663 = vmatprep.subr.mxu0 0.0
      %v3664 = vand.u32 %v633, 4294901760
      %v3665 = vsub.f32 %v633, %v3664
      %3666 = vmatpush1.xpose.msra.mxu0 %v3665
      %3667 = vmatprep.subr.mxu0 0.0
      %v3668 = vand.u32 %v636, 4294901760
      %v3669 = vsub.f32 %v636, %v3668
      %3670 = vmatpush1.xpose.msra.mxu0 %v3669
      %3671 = vmatprep.mubr.f32.mxu0 0.0
      %v3672 = vand.u32 %v252, 4294901760
      %v3673 = vsub.f32 %v252, %v3672
      %3674 = vmatmul.mubr.f32.gmra.mrb[0].mxu0 %v3673
      %v3675 = vpop.f32.mrb[0].mxu0
      %v3676 = vadd.f32 %v3539, %v3675
      %v3677 = vpop.f32.mrb[0].mxu0
      %v3678 = vadd.f32 %v3541, %v3677
      %3679 = vdwg.mxu0
      %3680 = vmatprep.subr.mxu0 0.0
      %v3681 = vand.u32 %v543, 4294901760
      %3682 = vmatpush1.xpose.msra.mxu0 %v3681
      %3683 = vmatprep.subr.mxu0 0.0
      %v3684 = vand.u32 %v546, 4294901760
      %3685 = vmatpush1.xpose.msra.mxu0 %v3684
      %3686 = vmatprep.subr.mxu0 0.0
      %v3687 = vand.u32 %v549, 4294901760
      %3688 = vmatpush1.xpose.msra.mxu0 %v3687
      %3689 = vmatprep.subr.mxu0 0.0
      %v3690 = vand.u32 %v552, 4294901760
      %3691 = vmatpush1.xpose.msra.mxu0 %v3690
      %3692 = vmatprep.subr.mxu0 0.0
      %v3693 = vand.u32 %v555, 4294901760
      %3694 = vmatpush1.xpose.msra.mxu0 %v3693
      %3695 = vmatprep.subr.mxu0 0.0
      %v3696 = vand.u32 %v558, 4294901760
      %3697 = vmatpush1.xpose.msra.mxu0 %v3696
      %3698 = vmatprep.subr.mxu0 0.0
      %v3699 = vand.u32 %v561, 4294901760
      %3700 = vmatpush1.xpose.msra.mxu0 %v3699
      %3701 = vmatprep.subr.mxu0 0.0
      %v3702 = vand.u32 %v564, 4294901760
      %3703 = vmatpush1.xpose.msra.mxu0 %v3702
      %3704 = vmatprep.subr.mxu0 0.0
      %v3705 = vand.u32 %v567, 4294901760
      %3706 = vmatpush1.xpose.msra.mxu0 %v3705
      %3707 = vmatprep.subr.mxu0 0.0
      %v3708 = vand.u32 %v570, 4294901760
      %3709 = vmatpush1.xpose.msra.mxu0 %v3708
      %3710 = vmatprep.subr.mxu0 0.0
      %v3711 = vand.u32 %v573, 4294901760
      %3712 = vmatpush1.xpose.msra.mxu0 %v3711
      %3713 = vmatprep.subr.mxu0 0.0
      %v3714 = vand.u32 %v576, 4294901760
      %3715 = vmatpush1.xpose.msra.mxu0 %v3714
      %3716 = vmatprep.subr.mxu0 0.0
      %v3717 = vand.u32 %v579, 4294901760
      %3718 = vmatpush1.xpose.msra.mxu0 %v3717
      %3719 = vmatprep.subr.mxu0 0.0
      %v3720 = vand.u32 %v582, 4294901760
      %3721 = vmatpush1.xpose.msra.mxu0 %v3720
      %3722 = vmatprep.subr.mxu0 0.0
      %v3723 = vand.u32 %v585, 4294901760
      %3724 = vmatpush1.xpose.msra.mxu0 %v3723
      %3725 = vmatprep.subr.mxu0 0.0
      %v3726 = vand.u32 %v588, 4294901760
      %3727 = vmatpush1.xpose.msra.mxu0 %v3726
      %3728 = vmatprep.subr.mxu0 0.0
      %v3729 = vand.u32 %v591, 4294901760
      %3730 = vmatpush1.xpose.msra.mxu0 %v3729
      %3731 = vmatprep.subr.mxu0 0.0
      %v3732 = vand.u32 %v594, 4294901760
      %3733 = vmatpush1.xpose.msra.mxu0 %v3732
      %3734 = vmatprep.subr.mxu0 0.0
      %v3735 = vand.u32 %v597, 4294901760
      %3736 = vmatpush1.xpose.msra.mxu0 %v3735
      %3737 = vmatprep.subr.mxu0 0.0
      %v3738 = vand.u32 %v600, 4294901760
      %3739 = vmatpush1.xpose.msra.mxu0 %v3738
      %3740 = vmatprep.subr.mxu0 0.0
      %v3741 = vand.u32 %v603, 4294901760
      %3742 = vmatpush1.xpose.msra.mxu0 %v3741
      %3743 = vmatprep.subr.mxu0 0.0
      %v3744 = vand.u32 %v606, 4294901760
      %3745 = vmatpush1.xpose.msra.mxu0 %v3744
      %3746 = vmatprep.subr.mxu0 0.0
      %v3747 = vand.u32 %v609, 4294901760
      %3748 = vmatpush1.xpose.msra.mxu0 %v3747
      %3749 = vmatprep.subr.mxu0 0.0
      %v3750 = vand.u32 %v612, 4294901760
      %3751 = vmatpush1.xpose.msra.mxu0 %v3750
      %3752 = vmatprep.subr.mxu0 0.0
      %v3753 = vand.u32 %v615, 4294901760
      %3754 = vmatpush1.xpose.msra.mxu0 %v3753
      %3755 = vmatprep.subr.mxu0 0.0
      %v3756 = vand.u32 %v618, 4294901760
      %3757 = vmatpush1.xpose.msra.mxu0 %v3756
      %3758 = vmatprep.subr.mxu0 0.0
      %v3759 = vand.u32 %v621, 4294901760
      %3760 = vmatpush1.xpose.msra.mxu0 %v3759
      %3761 = vmatprep.subr.mxu0 0.0
      %v3762 = vand.u32 %v624, 4294901760
      %3763 = vmatpush1.xpose.msra.mxu0 %v3762
      %3764 = vmatprep.subr.mxu0 0.0
      %v3765 = vand.u32 %v627, 4294901760
      %3766 = vmatpush1.xpose.msra.mxu0 %v3765
      %3767 = vmatprep.subr.mxu0 0.0
      %v3768 = vand.u32 %v630, 4294901760
      %3769 = vmatpush1.xpose.msra.mxu0 %v3768
      %3770 = vmatprep.subr.mxu0 0.0
      %v3771 = vand.u32 %v633, 4294901760
      %3772 = vmatpush1.xpose.msra.mxu0 %v3771
      %3773 = vmatprep.subr.mxu0 0.0
      %v3774 = vand.u32 %v636, 4294901760
      %3775 = vmatpush1.xpose.msra.mxu0 %v3774
      %3776 = vmatprep.mubr.f32.mxu0 0.0
      %v3777 = vand.u32 %v252, 4294901760
      %v3778 = vsub.f32 %v252, %v3777
      %v3779 = vand.u32 %v3778, 4294901760
      %3780 = vmatmul.mubr.f32.gmra.mrb[0].mxu0 %v3779
      %v3781 = vpop.f32.mrb[0].mxu0
      %v3782 = vadd.f32 %v3676, %v3781
      %v3783 = vpop.f32.mrb[0].mxu0
      %v3784 = vadd.f32 %v3678, %v3783
      %3785 = vdwg.mxu0
      %3786 = vmatprep.subr.mxu0 0.0
      %v3787 = vand.u32 %v543, 4294901760
      %v3788 = vsub.f32 %v543, %v3787
      %v3789 = vand.u32 %v3788, 4294901760
      %3790 = vmatpush1.xpose.msra.mxu0 %v3789
      %3791 = vmatprep.subr.mxu0 0.0
      %v3792 = vand.u32 %v546, 4294901760
      %v3793 = vsub.f32 %v546, %v3792
      %v3794 = vand.u32 %v3793, 4294901760
      %3795 = vmatpush1.xpose.msra.mxu0 %v3794
      %3796 = vmatprep.subr.mxu0 0.0
      %v3797 = vand.u32 %v549, 4294901760
      %v3798 = vsub.f32 %v549, %v3797
      %v3799 = vand.u32 %v3798, 4294901760
      %3800 = vmatpush1.xpose.msra.mxu0 %v3799
      %3801 = vmatprep.subr.mxu0 0.0
      %v3802 = vand.u32 %v552, 4294901760
      %v3803 = vsub.f32 %v552, %v3802
      %v3804 = vand.u32 %v3803, 4294901760
      %3805 = vmatpush1.xpose.msra.mxu0 %v3804
      %3806 = vmatprep.subr.mxu0 0.0
      %v3807 = vand.u32 %v555, 4294901760
      %v3808 = vsub.f32 %v555, %v3807
      %v3809 = vand.u32 %v3808, 4294901760
      %3810 = vmatpush1.xpose.msra.mxu0 %v3809
      %3811 = vmatprep.subr.mxu0 0.0
      %v3812 = vand.u32 %v558, 4294901760
      %v3813 = vsub.f32 %v558, %v3812
      %v3814 = vand.u32 %v3813, 4294901760
      %3815 = vmatpush1.xpose.msra.mxu0 %v3814
      %3816 = vmatprep.subr.mxu0 0.0
      %v3817 = vand.u32 %v561, 4294901760
      %v3818 = vsub.f32 %v561, %v3817
      %v3819 = vand.u32 %v3818, 4294901760
      %3820 = vmatpush1.xpose.msra.mxu0 %v3819
      %3821 = vmatprep.subr.mxu0 0.0
      %v3822 = vand.u32 %v564, 4294901760
      %v3823 = vsub.f32 %v564, %v3822
      %v3824 = vand.u32 %v3823, 4294901760
      %3825 = vmatpush1.xpose.msra.mxu0 %v3824
      %3826 = vmatprep.subr.mxu0 0.0
      %v3827 = vand.u32 %v567, 4294901760
      %v3828 = vsub.f32 %v567, %v3827
      %v3829 = vand.u32 %v3828, 4294901760
      %3830 = vmatpush1.xpose.msra.mxu0 %v3829
      %3831 = vmatprep.subr.mxu0 0.0
      %v3832 = vand.u32 %v570, 4294901760
      %v3833 = vsub.f32 %v570, %v3832
      %v3834 = vand.u32 %v3833, 4294901760
      %3835 = vmatpush1.xpose.msra.mxu0 %v3834
      %3836 = vmatprep.subr.mxu0 0.0
      %v3837 = vand.u32 %v573, 4294901760
      %v3838 = vsub.f32 %v573, %v3837
      %v3839 = vand.u32 %v3838, 4294901760
      %3840 = vmatpush1.xpose.msra.mxu0 %v3839
      %3841 = vmatprep.subr.mxu0 0.0
      %v3842 = vand.u32 %v576, 4294901760
      %v3843 = vsub.f32 %v576, %v3842
      %v3844 = vand.u32 %v3843, 4294901760
      %3845 = vmatpush1.xpose.msra.mxu0 %v3844
      %3846 = vmatprep.subr.mxu0 0.0
      %v3847 = vand.u32 %v579, 4294901760
      %v3848 = vsub.f32 %v579, %v3847
      %v3849 = vand.u32 %v3848, 4294901760
      %3850 = vmatpush1.xpose.msra.mxu0 %v3849
      %3851 = vmatprep.subr.mxu0 0.0
      %v3852 = vand.u32 %v582, 4294901760
      %v3853 = vsub.f32 %v582, %v3852
      %v3854 = vand.u32 %v3853, 4294901760
      %3855 = vmatpush1.xpose.msra.mxu0 %v3854
      %3856 = vmatprep.subr.mxu0 0.0
      %v3857 = vand.u32 %v585, 4294901760
      %v3858 = vsub.f32 %v585, %v3857
      %v3859 = vand.u32 %v3858, 4294901760
      %3860 = vmatpush1.xpose.msra.mxu0 %v3859
      %3861 = vmatprep.subr.mxu0 0.0
      %v3862 = vand.u32 %v588, 4294901760
      %v3863 = vsub.f32 %v588, %v3862
      %v3864 = vand.u32 %v3863, 4294901760
      %3865 = vmatpush1.xpose.msra.mxu0 %v3864
      %3866 = vmatprep.subr.mxu0 0.0
      %v3867 = vand.u32 %v591, 4294901760
      %v3868 = vsub.f32 %v591, %v3867
      %v3869 = vand.u32 %v3868, 4294901760
      %3870 = vmatpush1.xpose.msra.mxu0 %v3869
      %3871 = vmatprep.subr.mxu0 0.0
      %v3872 = vand.u32 %v594, 4294901760
      %v3873 = vsub.f32 %v594, %v3872
      %v3874 = vand.u32 %v3873, 4294901760
      %3875 = vmatpush1.xpose.msra.mxu0 %v3874
      %3876 = vmatprep.subr.mxu0 0.0
      %v3877 = vand.u32 %v597, 4294901760
      %v3878 = vsub.f32 %v597, %v3877
      %v3879 = vand.u32 %v3878, 4294901760
      %3880 = vmatpush1.xpose.msra.mxu0 %v3879
      %3881 = vmatprep.subr.mxu0 0.0
      %v3882 = vand.u32 %v600, 4294901760
      %v3883 = vsub.f32 %v600, %v3882
      %v3884 = vand.u32 %v3883, 4294901760
      %3885 = vmatpush1.xpose.msra.mxu0 %v3884
      %3886 = vmatprep.subr.mxu0 0.0
      %v3887 = vand.u32 %v603, 4294901760
      %v3888 = vsub.f32 %v603, %v3887
      %v3889 = vand.u32 %v3888, 4294901760
      %3890 = vmatpush1.xpose.msra.mxu0 %v3889
      %3891 = vmatprep.subr.mxu0 0.0
      %v3892 = vand.u32 %v606, 4294901760
      %v3893 = vsub.f32 %v606, %v3892
      %v3894 = vand.u32 %v3893, 4294901760
      %3895 = vmatpush1.xpose.msra.mxu0 %v3894
      %3896 = vmatprep.subr.mxu0 0.0
      %v3897 = vand.u32 %v609, 4294901760
      %v3898 = vsub.f32 %v609, %v3897
      %v3899 = vand.u32 %v3898, 4294901760
      %3900 = vmatpush1.xpose.msra.mxu0 %v3899
      %3901 = vmatprep.subr.mxu0 0.0
      %v3902 = vand.u32 %v612, 4294901760
      %v3903 = vsub.f32 %v612, %v3902
      %v3904 = vand.u32 %v3903, 4294901760
      %3905 = vmatpush1.xpose.msra.mxu0 %v3904
      %3906 = vmatprep.subr.mxu0 0.0
      %v3907 = vand.u32 %v615, 4294901760
      %v3908 = vsub.f32 %v615, %v3907
      %v3909 = vand.u32 %v3908, 4294901760
      %3910 = vmatpush1.xpose.msra.mxu0 %v3909
      %3911 = vmatprep.subr.mxu0 0.0
      %v3912 = vand.u32 %v618, 4294901760
      %v3913 = vsub.f32 %v618, %v3912
      %v3914 = vand.u32 %v3913, 4294901760
      %3915 = vmatpush1.xpose.msra.mxu0 %v3914
      %3916 = vmatprep.subr.mxu0 0.0
      %v3917 = vand.u32 %v621, 4294901760
      %v3918 = vsub.f32 %v621, %v3917
      %v3919 = vand.u32 %v3918, 4294901760
      %3920 = vmatpush1.xpose.msra.mxu0 %v3919
      %3921 = vmatprep.subr.mxu0 0.0
      %v3922 = vand.u32 %v624, 4294901760
      %v3923 = vsub.f32 %v624, %v3922
      %v3924 = vand.u32 %v3923, 4294901760
      %3925 = vmatpush1.xpose.msra.mxu0 %v3924
      %3926 = vmatprep.subr.mxu0 0.0
      %v3927 = vand.u32 %v627, 4294901760
      %v3928 = vsub.f32 %v627, %v3927
      %v3929 = vand.u32 %v3928, 4294901760
      %3930 = vmatpush1.xpose.msra.mxu0 %v3929
      %3931 = vmatprep.subr.mxu0 0.0
      %v3932 = vand.u32 %v630, 4294901760
      %v3933 = vsub.f32 %v630, %v3932
      %v3934 = vand.u32 %v3933, 4294901760
      %3935 = vmatpush1.xpose.msra.mxu0 %v3934
      %3936 = vmatprep.subr.mxu0 0.0
      %v3937 = vand.u32 %v633, 4294901760
      %v3938 = vsub.f32 %v633, %v3937
      %v3939 = vand.u32 %v3938, 4294901760
      %3940 = vmatpush1.xpose.msra.mxu0 %v3939
      %3941 = vmatprep.subr.mxu0 0.0
      %v3942 = vand.u32 %v636, 4294901760
      %v3943 = vsub.f32 %v636, %v3942
      %v3944 = vand.u32 %v3943, 4294901760
      %3945 = vmatpush1.xpose.msra.mxu0 %v3944
      %3946 = vmatprep.mubr.f32.mxu0 0.0
      %v3947 = vand.u32 %v252, 4294901760
      %3948 = vmatmul.mubr.f32.gmra.mrb[0].mxu0 %v3947
      %v3949 = vpop.f32.mrb[0].mxu0
      %v3950 = vadd.f32 %v3782, %v3949
      %v3951 = vpop.f32.mrb[0].mxu0
      %v3952 = vadd.f32 %v3784, %v3951
      %3953 = vdwg.mxu0
      %3954 = vmatprep.subr.mxu0 0.0
      %v3955 = vand.u32 %v543, 4294901760
      %3956 = vmatpush1.xpose.msra.mxu0 %v3955
      %3957 = vmatprep.subr.mxu0 0.0
      %v3958 = vand.u32 %v546, 4294901760
      %3959 = vmatpush1.xpose.msra.mxu0 %v3958
      %3960 = vmatprep.subr.mxu0 0.0
      %v3961 = vand.u32 %v549, 4294901760
      %3962 = vmatpush1.xpose.msra.mxu0 %v3961
      %3963 = vmatprep.subr.mxu0 0.0
      %v3964 = vand.u32 %v552, 4294901760
      %3965 = vmatpush1.xpose.msra.mxu0 %v3964
      %3966 = vmatprep.subr.mxu0 0.0
      %v3967 = vand.u32 %v555, 4294901760
      %3968 = vmatpush1.xpose.msra.mxu0 %v3967
      %3969 = vmatprep.subr.mxu0 0.0
      %v3970 = vand.u32 %v558, 4294901760
      %3971 = vmatpush1.xpose.msra.mxu0 %v3970
      %3972 = vmatprep.subr.mxu0 0.0
      %v3973 = vand.u32 %v561, 4294901760
      %3974 = vmatpush1.xpose.msra.mxu0 %v3973
      %3975 = vmatprep.subr.mxu0 0.0
      %v3976 = vand.u32 %v564, 4294901760
      %3977 = vmatpush1.xpose.msra.mxu0 %v3976
      %3978 = vmatprep.subr.mxu0 0.0
      %v3979 = vand.u32 %v567, 4294901760
      %3980 = vmatpush1.xpose.msra.mxu0 %v3979
      %3981 = vmatprep.subr.mxu0 0.0
      %v3982 = vand.u32 %v570, 4294901760
      %3983 = vmatpush1.xpose.msra.mxu0 %v3982
      %3984 = vmatprep.subr.mxu0 0.0
      %v3985 = vand.u32 %v573, 4294901760
      %3986 = vmatpush1.xpose.msra.mxu0 %v3985
      %3987 = vmatprep.subr.mxu0 0.0
      %v3988 = vand.u32 %v576, 4294901760
      %3989 = vmatpush1.xpose.msra.mxu0 %v3988
      %3990 = vmatprep.subr.mxu0 0.0
      %v3991 = vand.u32 %v579, 4294901760
      %3992 = vmatpush1.xpose.msra.mxu0 %v3991
      %3993 = vmatprep.subr.mxu0 0.0
      %v3994 = vand.u32 %v582, 4294901760
      %3995 = vmatpush1.xpose.msra.mxu0 %v3994
      %3996 = vmatprep.subr.mxu0 0.0
      %v3997 = vand.u32 %v585, 4294901760
      %3998 = vmatpush1.xpose.msra.mxu0 %v3997
      %3999 = vmatprep.subr.mxu0 0.0
      %v4000 = vand.u32 %v588, 4294901760
      %4001 = vmatpush1.xpose.msra.mxu0 %v4000
      %4002 = vmatprep.subr.mxu0 0.0
      %v4003 = vand.u32 %v591, 4294901760
      %4004 = vmatpush1.xpose.msra.mxu0 %v4003
      %4005 = vmatprep.subr.mxu0 0.0
      %v4006 = vand.u32 %v594, 4294901760
      %4007 = vmatpush1.xpose.msra.mxu0 %v4006
      %4008 = vmatprep.subr.mxu0 0.0
      %v4009 = vand.u32 %v597, 4294901760
      %4010 = vmatpush1.xpose.msra.mxu0 %v4009
      %4011 = vmatprep.subr.mxu0 0.0
      %v4012 = vand.u32 %v600, 4294901760
      %4013 = vmatpush1.xpose.msra.mxu0 %v4012
      %4014 = vmatprep.subr.mxu0 0.0
      %v4015 = vand.u32 %v603, 4294901760
      %4016 = vmatpush1.xpose.msra.mxu0 %v4015
      %4017 = vmatprep.subr.mxu0 0.0
      %v4018 = vand.u32 %v606, 4294901760
      %4019 = vmatpush1.xpose.msra.mxu0 %v4018
      %4020 = vmatprep.subr.mxu0 0.0
      %v4021 = vand.u32 %v609, 4294901760
      %4022 = vmatpush1.xpose.msra.mxu0 %v4021
      %4023 = vmatprep.subr.mxu0 0.0
      %v4024 = vand.u32 %v612, 4294901760
      %4025 = vmatpush1.xpose.msra.mxu0 %v4024
      %4026 = vmatprep.subr.mxu0 0.0
      %v4027 = vand.u32 %v615, 4294901760
      %4028 = vmatpush1.xpose.msra.mxu0 %v4027
      %4029 = vmatprep.subr.mxu0 0.0
      %v4030 = vand.u32 %v618, 4294901760
      %4031 = vmatpush1.xpose.msra.mxu0 %v4030
      %4032 = vmatprep.subr.mxu0 0.0
      %v4033 = vand.u32 %v621, 4294901760
      %4034 = vmatpush1.xpose.msra.mxu0 %v4033
      %4035 = vmatprep.subr.mxu0 0.0
      %v4036 = vand.u32 %v624, 4294901760
      %4037 = vmatpush1.xpose.msra.mxu0 %v4036
      %4038 = vmatprep.subr.mxu0 0.0
      %v4039 = vand.u32 %v627, 4294901760
      %4040 = vmatpush1.xpose.msra.mxu0 %v4039
      %4041 = vmatprep.subr.mxu0 0.0
      %v4042 = vand.u32 %v630, 4294901760
      %4043 = vmatpush1.xpose.msra.mxu0 %v4042
      %4044 = vmatprep.subr.mxu0 0.0
      %v4045 = vand.u32 %v633, 4294901760
      %4046 = vmatpush1.xpose.msra.mxu0 %v4045
      %4047 = vmatprep.subr.mxu0 0.0
      %v4048 = vand.u32 %v636, 4294901760
      %4049 = vmatpush1.xpose.msra.mxu0 %v4048
      %4050 = vmatprep.mubr.f32.mxu0 0.0
      %v4051 = vand.u32 %v252, 4294901760
      %4052 = vmatmul.mubr.f32.gmra.mrb[0].mxu0 %v4051
      %v4053 = vpop.f32.mrb[0].mxu0
      %v4054 = vadd.f32 %v3950, %v4053
      %v4055 = vpop.f32.mrb[0].mxu0
      %v4056 = vadd.f32 %v3952, %v4055
      %4057 = vdwg.mxu0
      %v4058 = vadd.f32 %v1489, 0.0
      %v4059 = vadd.f32 %v1491, 0.0
      %v4060 = vadd.f32 %v2344, 0.0
      %v4061 = vadd.f32 %v2346, 0.0
      %v4062 = vadd.f32 %v3199, 0.0
      %v4063 = vadd.f32 %v3201, 0.0
      %v4064 = vadd.f32 %v4054, 0.0
      %v4065 = vadd.f32 %v4056, 0.0
      %v4066 = vsub.f32 %v4058, 1.0
      %v4067 = vsub.f32 %v4059, 1.0
      %v4068 = vsub.f32 %v4060, 1.0
      %v4069 = vsub.f32 %v4061, 1.0
      %v4070 = vsub.f32 %v4062, 1.0
      %v4071 = vsub.f32 %v4063, 1.0
      %v4072 = vsub.f32 %v4064, 1.0
      %v4073 = vsub.f32 %v4065, 1.0
      %vm4074 = vcmp.ge.f32.partialorder %v4066, 0.0
      %vm4075 = vcmp.ge.f32.partialorder %v4067, 0.0
      %vm4076 = vcmp.ge.f32.partialorder %v4068, 0.0
      %vm4077 = vcmp.ge.f32.partialorder %v4069, 0.0
      %vm4078 = vcmp.ge.f32.partialorder %v4070, 0.0
      %vm4079 = vcmp.ge.f32.partialorder %v4071, 0.0
      %vm4080 = vcmp.ge.f32.partialorder %v4072, 0.0
      %vm4081 = vcmp.ge.f32.partialorder %v4073, 0.0
      %v4082 = vsel %vm4074, 1.0, 0.0
      %v4083 = vsel %vm4075, 1.0, 0.0
      %v4084 = vsel %vm4076, 1.0, 0.0
      %v4085 = vsel %vm4077, 1.0, 0.0
      %v4086 = vsel %vm4078, 1.0, 0.0
      %v4087 = vsel %vm4079, 1.0, 0.0
      %v4088 = vsel %vm4080, 1.0, 0.0
      %v4089 = vsel %vm4081, 1.0, 0.0
      %vm4090 = vcmask 1040384
      %v4091 = vsel %vm4090, %v4082, 0.0
      %v4092 = vsel %vm4090, %v4083, 0.0
      %v4093 = vadd.f32 %v4091, %v4092
      %v4094 = vsel %vm4090, %v4084, 0.0
      %v4095 = vadd.f32 %v4093, %v4094
      %v4096 = vsel %vm4090, %v4085, 0.0
      %v4097 = vadd.f32 %v4095, %v4096
      %v4098 = vsel %vm4090, %v4086, 0.0
      %v4099 = vadd.f32 %v4097, %v4098
      %v4100 = vsel %vm4090, %v4087, 0.0
      %v4101 = vadd.f32 %v4099, %v4100
      %v4102 = vsel %vm4090, %v4088, 0.0
      %v4103 = vadd.f32 %v4101, %v4102
      %v4104 = vsel %vm4090, %v4089, 0.0
      %v4105 = vadd.f32 %v4103, %v4104
      %4106 = vadd.xlane.f32.xlu0 %v4105
      %v4107 = vpop.xlane.xlu0 %4106
      %vm4108 = vcmp.eq.s32.totalorder %v246, 0
      %v4109 = vsel %vm4108, 1, 0
      %v4110 = vcvt.s32.f32 %v4109
      %v4111 = vmul.f32 %v4107, %v4110
      %v4112 = vadd.f32 %v4111, 0.0
      %v4113 = vsel %vm4074, 0.0, %v4058
      %v4114 = vsel %vm4075, 0.0, %v4059
      %v4115 = vsel %vm4076, 0.0, %v4060
      %v4116 = vsel %vm4077, 0.0, %v4061
      %v4117 = vsel %vm4078, 0.0, %v4062
      %v4118 = vsel %vm4079, 0.0, %v4063
      %v4119 = vsel %vm4080, 0.0, %v4064
      %v4120 = vsel %vm4081, 0.0, %v4065
      %v4121 = vmul.f32 %v4113, 0.5
      %v4122 = vmul.f32 %v4114, 0.5
      %v4123 = vmul.f32 %v4115, 0.5
      %v4124 = vmul.f32 %v4116, 0.5
      %v4125 = vmul.f32 %v4117, 0.5
      %v4126 = vmul.f32 %v4118, 0.5
      %v4127 = vmul.f32 %v4119, 0.5
      %v4128 = vmul.f32 %v4120, 0.5
      %v4137 = vrot.slane %v1489, 1
      %v4138 = vrot.slane %v1491, 1
      %v4139 = vrot.slane %v2344, 1
      %v4140 = vrot.slane %v2346, 1
      %v4141 = vrot.slane %v3199, 1
      %v4142 = vrot.slane %v3201, 1
      %v4143 = vrot.slane %v4054, 1
      %v4144 = vrot.slane %v4056, 1
      %v4153 = vadd.f32 %v4121, %v4137
      %v4154 = vadd.f32 %v4122, %v4138
      %v4155 = vadd.f32 %v4123, %v4139
      %v4156 = vadd.f32 %v4124, %v4140
      %v4157 = vadd.f32 %v4125, %v4141
      %v4158 = vadd.f32 %v4126, %v4142
      %v4159 = vadd.f32 %v4127, %v4143
      %v4160 = vadd.f32 %v4128, %v4144
      %v4161 = vsub.f32 %v4153, 1.0
      %v4162 = vsub.f32 %v4154, 1.0
      %v4163 = vsub.f32 %v4155, 1.0
      %v4164 = vsub.f32 %v4156, 1.0
      %v4165 = vsub.f32 %v4157, 1.0
      %v4166 = vsub.f32 %v4158, 1.0
      %v4167 = vsub.f32 %v4159, 1.0
      %v4168 = vsub.f32 %v4160, 1.0
      %vm4169 = vcmp.ge.f32.partialorder %v4161, 0.0
      %vm4170 = vcmp.ge.f32.partialorder %v4162, 0.0
      %vm4171 = vcmp.ge.f32.partialorder %v4163, 0.0
      %vm4172 = vcmp.ge.f32.partialorder %v4164, 0.0
      %vm4173 = vcmp.ge.f32.partialorder %v4165, 0.0
      %vm4174 = vcmp.ge.f32.partialorder %v4166, 0.0
      %vm4175 = vcmp.ge.f32.partialorder %v4167, 0.0
      %vm4176 = vcmp.ge.f32.partialorder %v4168, 0.0
      %v4177 = vsel %vm4169, 1.0, 0.0
      %v4178 = vsel %vm4170, 1.0, 0.0
      %v4179 = vsel %vm4171, 1.0, 0.0
      %v4180 = vsel %vm4172, 1.0, 0.0
      %v4181 = vsel %vm4173, 1.0, 0.0
      %v4182 = vsel %vm4174, 1.0, 0.0
      %v4183 = vsel %vm4175, 1.0, 0.0
      %v4184 = vsel %vm4176, 1.0, 0.0
      %v4185 = vsel %vm4090, %v4177, 0.0
      %v4186 = vsel %vm4090, %v4178, 0.0
      %v4187 = vadd.f32 %v4185, %v4186
      %v4188 = vsel %vm4090, %v4179, 0.0
      %v4189 = vadd.f32 %v4187, %v4188
      %v4190 = vsel %vm4090, %v4180, 0.0
      %v4191 = vadd.f32 %v4189, %v4190
      %v4192 = vsel %vm4090, %v4181, 0.0
      %v4193 = vadd.f32 %v4191, %v4192
      %v4194 = vsel %vm4090, %v4182, 0.0
      %v4195 = vadd.f32 %v4193, %v4194
      %v4196 = vsel %vm4090, %v4183, 0.0
      %v4197 = vadd.f32 %v4195, %v4196
      %v4198 = vsel %vm4090, %v4184, 0.0
      %v4199 = vadd.f32 %v4197, %v4198
      %4200 = vadd.xlane.f32.xlu0 %v4199
      %v4201 = vpop.xlane.xlu0 %4200
      %vm4202 = vcmp.eq.s32.totalorder %v246, 1
      %v4203 = vsel %vm4202, 1, 0
      %v4204 = vcvt.s32.f32 %v4203
      %v4205 = vmul.f32 %v4201, %v4204
      %v4206 = vadd.f32 %v4112, %v4205
      %v4207 = vsel %vm4169, 0.0, %v4153
      %v4208 = vsel %vm4170, 0.0, %v4154
      %v4209 = vsel %vm4171, 0.0, %v4155
      %v4210 = vsel %vm4172, 0.0, %v4156
      %v4211 = vsel %vm4173, 0.0, %v4157
      %v4212 = vsel %vm4174, 0.0, %v4158
      %v4213 = vsel %vm4175, 0.0, %v4159
      %v4214 = vsel %vm4176, 0.0, %v4160
      %v4215 = vmul.f32 %v4207, 0.5
      %v4216 = vmul.f32 %v4208, 0.5
      %v4217 = vmul.f32 %v4209, 0.5
      %v4218 = vmul.f32 %v4210, 0.5
      %v4219 = vmul.f32 %v4211, 0.5
      %v4220 = vmul.f32 %v4212, 0.5
      %v4221 = vmul.f32 %v4213, 0.5
      %v4222 = vmul.f32 %v4214, 0.5
      %v4223 = vrot.slane %v1489, 2
      %v4224 = vrot.slane %v1491, 2
      %v4225 = vrot.slane %v2344, 2
      %v4226 = vrot.slane %v2346, 2
      %v4227 = vrot.slane %v3199, 2
      %v4228 = vrot.slane %v3201, 2
      %v4229 = vrot.slane %v4054, 2
      %v4230 = vrot.slane %v4056, 2
      %v4239 = vadd.f32 %v4215, %v4223
      %v4240 = vadd.f32 %v4216, %v4224
      %v4241 = vadd.f32 %v4217, %v4225
      %v4242 = vadd.f32 %v4218, %v4226
      %v4243 = vadd.f32 %v4219, %v4227
      %v4244 = vadd.f32 %v4220, %v4228
      %v4245 = vadd.f32 %v4221, %v4229
      %v4246 = vadd.f32 %v4222, %v4230
      %v4247 = vsub.f32 %v4239, 1.0
      %v4248 = vsub.f32 %v4240, 1.0
      %v4249 = vsub.f32 %v4241, 1.0
      %v4250 = vsub.f32 %v4242, 1.0
      %v4251 = vsub.f32 %v4243, 1.0
      %v4252 = vsub.f32 %v4244, 1.0
      %v4253 = vsub.f32 %v4245, 1.0
      %v4254 = vsub.f32 %v4246, 1.0
      %vm4255 = vcmp.ge.f32.partialorder %v4247, 0.0
      %vm4256 = vcmp.ge.f32.partialorder %v4248, 0.0
      %vm4257 = vcmp.ge.f32.partialorder %v4249, 0.0
      %vm4258 = vcmp.ge.f32.partialorder %v4250, 0.0
      %vm4259 = vcmp.ge.f32.partialorder %v4251, 0.0
      %vm4260 = vcmp.ge.f32.partialorder %v4252, 0.0
      %vm4261 = vcmp.ge.f32.partialorder %v4253, 0.0
      %vm4262 = vcmp.ge.f32.partialorder %v4254, 0.0
      %v4263 = vsel %vm4255, 1.0, 0.0
      %v4264 = vsel %vm4256, 1.0, 0.0
      %v4265 = vsel %vm4257, 1.0, 0.0
      %v4266 = vsel %vm4258, 1.0, 0.0
      %v4267 = vsel %vm4259, 1.0, 0.0
      %v4268 = vsel %vm4260, 1.0, 0.0
      %v4269 = vsel %vm4261, 1.0, 0.0
      %v4270 = vsel %vm4262, 1.0, 0.0
      %v4271 = vsel %vm4090, %v4263, 0.0
      %v4272 = vsel %vm4090, %v4264, 0.0
      %v4273 = vadd.f32 %v4271, %v4272
      %v4274 = vsel %vm4090, %v4265, 0.0
      %v4275 = vadd.f32 %v4273, %v4274
      %v4276 = vsel %vm4090, %v4266, 0.0
      %v4277 = vadd.f32 %v4275, %v4276
      %v4278 = vsel %vm4090, %v4267, 0.0
      %v4279 = vadd.f32 %v4277, %v4278
      %v4280 = vsel %vm4090, %v4268, 0.0
      %v4281 = vadd.f32 %v4279, %v4280
      %v4282 = vsel %vm4090, %v4269, 0.0
      %v4283 = vadd.f32 %v4281, %v4282
      %v4284 = vsel %vm4090, %v4270, 0.0
      %v4285 = vadd.f32 %v4283, %v4284
      %4286 = vadd.xlane.f32.xlu0 %v4285
      %v4287 = vpop.xlane.xlu0 %4286
      %vm4288 = vcmp.eq.s32.totalorder %v246, 2
      %v4289 = vsel %vm4288, 1, 0
      %v4290 = vcvt.s32.f32 %v4289
      %v4291 = vmul.f32 %v4287, %v4290
      %v4292 = vadd.f32 %v4206, %v4291
      %v4293 = vsel %vm4255, 0.0, %v4239
      %v4294 = vsel %vm4256, 0.0, %v4240
      %v4295 = vsel %vm4257, 0.0, %v4241
      %v4296 = vsel %vm4258, 0.0, %v4242
      %v4297 = vsel %vm4259, 0.0, %v4243
      %v4298 = vsel %vm4260, 0.0, %v4244
      %v4299 = vsel %vm4261, 0.0, %v4245
      %v4300 = vsel %vm4262, 0.0, %v4246
      %v4301 = vmul.f32 %v4293, 0.5
      %v4302 = vmul.f32 %v4294, 0.5
      %v4303 = vmul.f32 %v4295, 0.5
      %v4304 = vmul.f32 %v4296, 0.5
      %v4305 = vmul.f32 %v4297, 0.5
      %v4306 = vmul.f32 %v4298, 0.5
      %v4307 = vmul.f32 %v4299, 0.5
      %v4308 = vmul.f32 %v4300, 0.5
      %v4309 = vrot.slane %v1489, 3
      %v4310 = vrot.slane %v1491, 3
      %v4311 = vrot.slane %v2344, 3
      %v4312 = vrot.slane %v2346, 3
      %v4313 = vrot.slane %v3199, 3
      %v4314 = vrot.slane %v3201, 3
      %v4315 = vrot.slane %v4054, 3
      %v4316 = vrot.slane %v4056, 3
      %v4325 = vadd.f32 %v4301, %v4309
      %v4326 = vadd.f32 %v4302, %v4310
      %v4327 = vadd.f32 %v4303, %v4311
      %v4328 = vadd.f32 %v4304, %v4312
      %v4329 = vadd.f32 %v4305, %v4313
      %v4330 = vadd.f32 %v4306, %v4314
      %v4331 = vadd.f32 %v4307, %v4315
      %v4332 = vadd.f32 %v4308, %v4316
      %v4333 = vsub.f32 %v4325, 1.0
      %v4334 = vsub.f32 %v4326, 1.0
      %v4335 = vsub.f32 %v4327, 1.0
      %v4336 = vsub.f32 %v4328, 1.0
      %v4337 = vsub.f32 %v4329, 1.0
      %v4338 = vsub.f32 %v4330, 1.0
      %v4339 = vsub.f32 %v4331, 1.0
      %v4340 = vsub.f32 %v4332, 1.0
      %vm4341 = vcmp.ge.f32.partialorder %v4333, 0.0
      %vm4342 = vcmp.ge.f32.partialorder %v4334, 0.0
      %vm4343 = vcmp.ge.f32.partialorder %v4335, 0.0
      %vm4344 = vcmp.ge.f32.partialorder %v4336, 0.0
      %vm4345 = vcmp.ge.f32.partialorder %v4337, 0.0
      %vm4346 = vcmp.ge.f32.partialorder %v4338, 0.0
      %vm4347 = vcmp.ge.f32.partialorder %v4339, 0.0
      %vm4348 = vcmp.ge.f32.partialorder %v4340, 0.0
      %v4349 = vsel %vm4341, 1.0, 0.0
      %v4350 = vsel %vm4342, 1.0, 0.0
      %v4351 = vsel %vm4343, 1.0, 0.0
      %v4352 = vsel %vm4344, 1.0, 0.0
      %v4353 = vsel %vm4345, 1.0, 0.0
      %v4354 = vsel %vm4346, 1.0, 0.0
      %v4355 = vsel %vm4347, 1.0, 0.0
      %v4356 = vsel %vm4348, 1.0, 0.0
      %v4357 = vsel %vm4090, %v4349, 0.0
      %v4358 = vsel %vm4090, %v4350, 0.0
      %v4359 = vadd.f32 %v4357, %v4358
      %v4360 = vsel %vm4090, %v4351, 0.0
      %v4361 = vadd.f32 %v4359, %v4360
      %v4362 = vsel %vm4090, %v4352, 0.0
      %v4363 = vadd.f32 %v4361, %v4362
      %v4364 = vsel %vm4090, %v4353, 0.0
      %v4365 = vadd.f32 %v4363, %v4364
      %v4366 = vsel %vm4090, %v4354, 0.0
      %v4367 = vadd.f32 %v4365, %v4366
      %v4368 = vsel %vm4090, %v4355, 0.0
      %v4369 = vadd.f32 %v4367, %v4368
      %v4370 = vsel %vm4090, %v4356, 0.0
      %v4371 = vadd.f32 %v4369, %v4370
      %4372 = vadd.xlane.f32.xlu0 %v4371
      %v4373 = vpop.xlane.xlu0 %4372
      %vm4374 = vcmp.eq.s32.totalorder %v246, 3
      %v4375 = vsel %vm4374, 1, 0
      %v4376 = vcvt.s32.f32 %v4375
      %v4377 = vmul.f32 %v4373, %v4376
      %v4378 = vadd.f32 %v4292, %v4377
      %v4379 = vsel %vm4341, 0.0, %v4325
      %v4380 = vsel %vm4342, 0.0, %v4326
      %v4381 = vsel %vm4343, 0.0, %v4327
      %v4382 = vsel %vm4344, 0.0, %v4328
      %v4383 = vsel %vm4345, 0.0, %v4329
      %v4384 = vsel %vm4346, 0.0, %v4330
      %v4385 = vsel %vm4347, 0.0, %v4331
      %v4386 = vsel %vm4348, 0.0, %v4332
      %v4387 = vmul.f32 %v4379, 0.5
      %v4388 = vmul.f32 %v4380, 0.5
      %v4389 = vmul.f32 %v4381, 0.5
      %v4390 = vmul.f32 %v4382, 0.5
      %v4391 = vmul.f32 %v4383, 0.5
      %v4392 = vmul.f32 %v4384, 0.5
      %v4393 = vmul.f32 %v4385, 0.5
      %v4394 = vmul.f32 %v4386, 0.5
      %v4395 = vrot.slane %v1489, 4
      %v4396 = vrot.slane %v1491, 4
      %v4397 = vrot.slane %v2344, 4
      %v4398 = vrot.slane %v2346, 4
      %v4399 = vrot.slane %v3199, 4
      %v4400 = vrot.slane %v3201, 4
      %v4401 = vrot.slane %v4054, 4
      %v4402 = vrot.slane %v4056, 4
      %v4411 = vadd.f32 %v4387, %v4395
      %v4412 = vadd.f32 %v4388, %v4396
      %v4413 = vadd.f32 %v4389, %v4397
      %v4414 = vadd.f32 %v4390, %v4398
      %v4415 = vadd.f32 %v4391, %v4399
      %v4416 = vadd.f32 %v4392, %v4400
      %v4417 = vadd.f32 %v4393, %v4401
      %v4418 = vadd.f32 %v4394, %v4402
      %v4419 = vsub.f32 %v4411, 1.0
      %v4420 = vsub.f32 %v4412, 1.0
      %v4421 = vsub.f32 %v4413, 1.0
      %v4422 = vsub.f32 %v4414, 1.0
      %v4423 = vsub.f32 %v4415, 1.0
      %v4424 = vsub.f32 %v4416, 1.0
      %v4425 = vsub.f32 %v4417, 1.0
      %v4426 = vsub.f32 %v4418, 1.0
      %vm4427 = vcmp.ge.f32.partialorder %v4419, 0.0
      %vm4428 = vcmp.ge.f32.partialorder %v4420, 0.0
      %vm4429 = vcmp.ge.f32.partialorder %v4421, 0.0
      %vm4430 = vcmp.ge.f32.partialorder %v4422, 0.0
      %vm4431 = vcmp.ge.f32.partialorder %v4423, 0.0
      %vm4432 = vcmp.ge.f32.partialorder %v4424, 0.0
      %vm4433 = vcmp.ge.f32.partialorder %v4425, 0.0
      %vm4434 = vcmp.ge.f32.partialorder %v4426, 0.0
      %v4435 = vsel %vm4427, 1.0, 0.0
      %v4436 = vsel %vm4428, 1.0, 0.0
      %v4437 = vsel %vm4429, 1.0, 0.0
      %v4438 = vsel %vm4430, 1.0, 0.0
      %v4439 = vsel %vm4431, 1.0, 0.0
      %v4440 = vsel %vm4432, 1.0, 0.0
      %v4441 = vsel %vm4433, 1.0, 0.0
      %v4442 = vsel %vm4434, 1.0, 0.0
      %v4443 = vsel %vm4090, %v4435, 0.0
      %v4444 = vsel %vm4090, %v4436, 0.0
      %v4445 = vadd.f32 %v4443, %v4444
      %v4446 = vsel %vm4090, %v4437, 0.0
      %v4447 = vadd.f32 %v4445, %v4446
      %v4448 = vsel %vm4090, %v4438, 0.0
      %v4449 = vadd.f32 %v4447, %v4448
      %v4450 = vsel %vm4090, %v4439, 0.0
      %v4451 = vadd.f32 %v4449, %v4450
      %v4452 = vsel %vm4090, %v4440, 0.0
      %v4453 = vadd.f32 %v4451, %v4452
      %v4454 = vsel %vm4090, %v4441, 0.0
      %v4455 = vadd.f32 %v4453, %v4454
      %v4456 = vsel %vm4090, %v4442, 0.0
      %v4457 = vadd.f32 %v4455, %v4456
      %4458 = vadd.xlane.f32.xlu0 %v4457
      %v4459 = vpop.xlane.xlu0 %4458
      %vm4460 = vcmp.eq.s32.totalorder %v246, 4
      %v4461 = vsel %vm4460, 1, 0
      %v4462 = vcvt.s32.f32 %v4461
      %v4463 = vmul.f32 %v4459, %v4462
      %v4464 = vadd.f32 %v4378, %v4463
      %v4465 = vsel %vm4427, 0.0, %v4411
      %v4466 = vsel %vm4428, 0.0, %v4412
      %v4467 = vsel %vm4429, 0.0, %v4413
      %v4468 = vsel %vm4430, 0.0, %v4414
      %v4469 = vsel %vm4431, 0.0, %v4415
      %v4470 = vsel %vm4432, 0.0, %v4416
      %v4471 = vsel %vm4433, 0.0, %v4417
      %v4472 = vsel %vm4434, 0.0, %v4418
      %v4473 = vmul.f32 %v4465, 0.5
      %v4474 = vmul.f32 %v4466, 0.5
      %v4475 = vmul.f32 %v4467, 0.5
      %v4476 = vmul.f32 %v4468, 0.5
      %v4477 = vmul.f32 %v4469, 0.5
      %v4478 = vmul.f32 %v4470, 0.5
      %v4479 = vmul.f32 %v4471, 0.5
      %v4480 = vmul.f32 %v4472, 0.5
      %v4481 = vrot.slane %v1489, 5
      %v4482 = vrot.slane %v1491, 5
      %v4483 = vrot.slane %v2344, 5
      %v4484 = vrot.slane %v2346, 5
      %v4485 = vrot.slane %v3199, 5
      %v4486 = vrot.slane %v3201, 5
      %v4487 = vrot.slane %v4054, 5
      %v4488 = vrot.slane %v4056, 5
      %v4497 = vadd.f32 %v4473, %v4481
      %v4498 = vadd.f32 %v4474, %v4482
      %v4499 = vadd.f32 %v4475, %v4483
      %v4500 = vadd.f32 %v4476, %v4484
      %v4501 = vadd.f32 %v4477, %v4485
      %v4502 = vadd.f32 %v4478, %v4486
      %v4503 = vadd.f32 %v4479, %v4487
      %v4504 = vadd.f32 %v4480, %v4488
      %v4505 = vsub.f32 %v4497, 1.0
      %v4506 = vsub.f32 %v4498, 1.0
      %v4507 = vsub.f32 %v4499, 1.0
      %v4508 = vsub.f32 %v4500, 1.0
      %v4509 = vsub.f32 %v4501, 1.0
      %v4510 = vsub.f32 %v4502, 1.0
      %v4511 = vsub.f32 %v4503, 1.0
      %v4512 = vsub.f32 %v4504, 1.0
      %vm4513 = vcmp.ge.f32.partialorder %v4505, 0.0
      %vm4514 = vcmp.ge.f32.partialorder %v4506, 0.0
      %vm4515 = vcmp.ge.f32.partialorder %v4507, 0.0
      %vm4516 = vcmp.ge.f32.partialorder %v4508, 0.0
      %vm4517 = vcmp.ge.f32.partialorder %v4509, 0.0
      %vm4518 = vcmp.ge.f32.partialorder %v4510, 0.0
      %vm4519 = vcmp.ge.f32.partialorder %v4511, 0.0
      %vm4520 = vcmp.ge.f32.partialorder %v4512, 0.0
      %v4521 = vsel %vm4513, 1.0, 0.0
      %v4522 = vsel %vm4514, 1.0, 0.0
      %v4523 = vsel %vm4515, 1.0, 0.0
      %v4524 = vsel %vm4516, 1.0, 0.0
      %v4525 = vsel %vm4517, 1.0, 0.0
      %v4526 = vsel %vm4518, 1.0, 0.0
      %v4527 = vsel %vm4519, 1.0, 0.0
      %v4528 = vsel %vm4520, 1.0, 0.0
      %v4529 = vsel %vm4090, %v4521, 0.0
      %v4530 = vsel %vm4090, %v4522, 0.0
      %v4531 = vadd.f32 %v4529, %v4530
      %v4532 = vsel %vm4090, %v4523, 0.0
      %v4533 = vadd.f32 %v4531, %v4532
      %v4534 = vsel %vm4090, %v4524, 0.0
      %v4535 = vadd.f32 %v4533, %v4534
      %v4536 = vsel %vm4090, %v4525, 0.0
      %v4537 = vadd.f32 %v4535, %v4536
      %v4538 = vsel %vm4090, %v4526, 0.0
      %v4539 = vadd.f32 %v4537, %v4538
      %v4540 = vsel %vm4090, %v4527, 0.0
      %v4541 = vadd.f32 %v4539, %v4540
      %v4542 = vsel %vm4090, %v4528, 0.0
      %v4543 = vadd.f32 %v4541, %v4542
      %4544 = vadd.xlane.f32.xlu0 %v4543
      %v4545 = vpop.xlane.xlu0 %4544
      %vm4546 = vcmp.eq.s32.totalorder %v246, 5
      %v4547 = vsel %vm4546, 1, 0
      %v4548 = vcvt.s32.f32 %v4547
      %v4549 = vmul.f32 %v4545, %v4548
      %v4550 = vadd.f32 %v4464, %v4549
      %v4551 = vsel %vm4513, 0.0, %v4497
      %v4552 = vsel %vm4514, 0.0, %v4498
      %v4553 = vsel %vm4515, 0.0, %v4499
      %v4554 = vsel %vm4516, 0.0, %v4500
      %v4555 = vsel %vm4517, 0.0, %v4501
      %v4556 = vsel %vm4518, 0.0, %v4502
      %v4557 = vsel %vm4519, 0.0, %v4503
      %v4558 = vsel %vm4520, 0.0, %v4504
      %v4559 = vmul.f32 %v4551, 0.5
      %v4560 = vmul.f32 %v4552, 0.5
      %v4561 = vmul.f32 %v4553, 0.5
      %v4562 = vmul.f32 %v4554, 0.5
      %v4563 = vmul.f32 %v4555, 0.5
      %v4564 = vmul.f32 %v4556, 0.5
      %v4565 = vmul.f32 %v4557, 0.5
      %v4566 = vmul.f32 %v4558, 0.5
      %v4567 = vrot.slane %v1489, 6
      %v4568 = vrot.slane %v1491, 6
      %v4569 = vrot.slane %v2344, 6
      %v4570 = vrot.slane %v2346, 6
      %v4571 = vrot.slane %v3199, 6
      %v4572 = vrot.slane %v3201, 6
      %v4573 = vrot.slane %v4054, 6
      %v4574 = vrot.slane %v4056, 6
      %v4583 = vadd.f32 %v4559, %v4567
      %v4584 = vadd.f32 %v4560, %v4568
      %v4585 = vadd.f32 %v4561, %v4569
      %v4586 = vadd.f32 %v4562, %v4570
      %v4587 = vadd.f32 %v4563, %v4571
      %v4588 = vadd.f32 %v4564, %v4572
      %v4589 = vadd.f32 %v4565, %v4573
      %v4590 = vadd.f32 %v4566, %v4574
      %v4591 = vsub.f32 %v4583, 1.0
      %v4592 = vsub.f32 %v4584, 1.0
      %v4593 = vsub.f32 %v4585, 1.0
      %v4594 = vsub.f32 %v4586, 1.0
      %v4595 = vsub.f32 %v4587, 1.0
      %v4596 = vsub.f32 %v4588, 1.0
      %v4597 = vsub.f32 %v4589, 1.0
      %v4598 = vsub.f32 %v4590, 1.0
      %vm4599 = vcmp.ge.f32.partialorder %v4591, 0.0
      %vm4600 = vcmp.ge.f32.partialorder %v4592, 0.0
      %vm4601 = vcmp.ge.f32.partialorder %v4593, 0.0
      %vm4602 = vcmp.ge.f32.partialorder %v4594, 0.0
      %vm4603 = vcmp.ge.f32.partialorder %v4595, 0.0
      %vm4604 = vcmp.ge.f32.partialorder %v4596, 0.0
      %vm4605 = vcmp.ge.f32.partialorder %v4597, 0.0
      %vm4606 = vcmp.ge.f32.partialorder %v4598, 0.0
      %v4607 = vsel %vm4599, 1.0, 0.0
      %v4608 = vsel %vm4600, 1.0, 0.0
      %v4609 = vsel %vm4601, 1.0, 0.0
      %v4610 = vsel %vm4602, 1.0, 0.0
      %v4611 = vsel %vm4603, 1.0, 0.0
      %v4612 = vsel %vm4604, 1.0, 0.0
      %v4613 = vsel %vm4605, 1.0, 0.0
      %v4614 = vsel %vm4606, 1.0, 0.0
      %v4615 = vsel %vm4090, %v4607, 0.0
      %v4616 = vsel %vm4090, %v4608, 0.0
      %v4617 = vadd.f32 %v4615, %v4616
      %v4618 = vsel %vm4090, %v4609, 0.0
      %v4619 = vadd.f32 %v4617, %v4618
      %v4620 = vsel %vm4090, %v4610, 0.0
      %v4621 = vadd.f32 %v4619, %v4620
      %v4622 = vsel %vm4090, %v4611, 0.0
      %v4623 = vadd.f32 %v4621, %v4622
      %v4624 = vsel %vm4090, %v4612, 0.0
      %v4625 = vadd.f32 %v4623, %v4624
      %v4626 = vsel %vm4090, %v4613, 0.0
      %v4627 = vadd.f32 %v4625, %v4626
      %v4628 = vsel %vm4090, %v4614, 0.0
      %v4629 = vadd.f32 %v4627, %v4628
      %4630 = vadd.xlane.f32.xlu0 %v4629
      %v4631 = vpop.xlane.xlu0 %4630
      %vm4632 = vcmp.eq.s32.totalorder %v246, 6
      %v4633 = vsel %vm4632, 1, 0
      %v4634 = vcvt.s32.f32 %v4633
      %v4635 = vmul.f32 %v4631, %v4634
      %v4636 = vadd.f32 %v4550, %v4635
      %v4637 = vsel %vm4599, 0.0, %v4583
      %v4638 = vsel %vm4600, 0.0, %v4584
      %v4639 = vsel %vm4601, 0.0, %v4585
      %v4640 = vsel %vm4602, 0.0, %v4586
      %v4641 = vsel %vm4603, 0.0, %v4587
      %v4642 = vsel %vm4604, 0.0, %v4588
      %v4643 = vsel %vm4605, 0.0, %v4589
      %v4644 = vsel %vm4606, 0.0, %v4590
      %v4645 = vmul.f32 %v4637, 0.5
      %v4646 = vmul.f32 %v4638, 0.5
      %v4647 = vmul.f32 %v4639, 0.5
      %v4648 = vmul.f32 %v4640, 0.5
      %v4649 = vmul.f32 %v4641, 0.5
      %v4650 = vmul.f32 %v4642, 0.5
      %v4651 = vmul.f32 %v4643, 0.5
      %v4652 = vmul.f32 %v4644, 0.5
      %v4653 = vrot.slane %v1489, 7
      %v4654 = vrot.slane %v1491, 7
      %v4655 = vrot.slane %v2344, 7
      %v4656 = vrot.slane %v2346, 7
      %v4657 = vrot.slane %v3199, 7
      %v4658 = vrot.slane %v3201, 7
      %v4659 = vrot.slane %v4054, 7
      %v4660 = vrot.slane %v4056, 7
      %v4669 = vadd.f32 %v4645, %v4653
      %v4670 = vadd.f32 %v4646, %v4654
      %v4671 = vadd.f32 %v4647, %v4655
      %v4672 = vadd.f32 %v4648, %v4656
      %v4673 = vadd.f32 %v4649, %v4657
      %v4674 = vadd.f32 %v4650, %v4658
      %v4675 = vadd.f32 %v4651, %v4659
      %v4676 = vadd.f32 %v4652, %v4660
      %v4677 = vsub.f32 %v4669, 1.0
      %v4678 = vsub.f32 %v4670, 1.0
      %v4679 = vsub.f32 %v4671, 1.0
      %v4680 = vsub.f32 %v4672, 1.0
      %v4681 = vsub.f32 %v4673, 1.0
      %v4682 = vsub.f32 %v4674, 1.0
      %v4683 = vsub.f32 %v4675, 1.0
      %v4684 = vsub.f32 %v4676, 1.0
      %vm4685 = vcmp.ge.f32.partialorder %v4677, 0.0
      %vm4686 = vcmp.ge.f32.partialorder %v4678, 0.0
      %vm4687 = vcmp.ge.f32.partialorder %v4679, 0.0
      %vm4688 = vcmp.ge.f32.partialorder %v4680, 0.0
      %vm4689 = vcmp.ge.f32.partialorder %v4681, 0.0
      %vm4690 = vcmp.ge.f32.partialorder %v4682, 0.0
      %vm4691 = vcmp.ge.f32.partialorder %v4683, 0.0
      %vm4692 = vcmp.ge.f32.partialorder %v4684, 0.0
      %v4693 = vsel %vm4685, 1.0, 0.0
      %v4694 = vsel %vm4686, 1.0, 0.0
      %v4695 = vsel %vm4687, 1.0, 0.0
      %v4696 = vsel %vm4688, 1.0, 0.0
      %v4697 = vsel %vm4689, 1.0, 0.0
      %v4698 = vsel %vm4690, 1.0, 0.0
      %v4699 = vsel %vm4691, 1.0, 0.0
      %v4700 = vsel %vm4692, 1.0, 0.0
      %v4701 = vsel %vm4090, %v4693, 0.0
      %v4702 = vsel %vm4090, %v4694, 0.0
      %v4703 = vadd.f32 %v4701, %v4702
      %v4704 = vsel %vm4090, %v4695, 0.0
      %v4705 = vadd.f32 %v4703, %v4704
      %v4706 = vsel %vm4090, %v4696, 0.0
      %v4707 = vadd.f32 %v4705, %v4706
      %v4708 = vsel %vm4090, %v4697, 0.0
      %v4709 = vadd.f32 %v4707, %v4708
      %v4710 = vsel %vm4090, %v4698, 0.0
      %v4711 = vadd.f32 %v4709, %v4710
      %v4712 = vsel %vm4090, %v4699, 0.0
      %v4713 = vadd.f32 %v4711, %v4712
      %v4714 = vsel %vm4090, %v4700, 0.0
      %v4715 = vadd.f32 %v4713, %v4714
      %4716 = vadd.xlane.f32.xlu0 %v4715
      %v4717 = vpop.xlane.xlu0 %4716
      %vm4718 = vcmp.eq.s32.totalorder %v246, 7
      %v4719 = vsel %vm4718, 1, 0
      %v4720 = vcvt.s32.f32 %v4719
      %v4721 = vmul.f32 %v4717, %v4720
      %v4722 = vadd.f32 %v4636, %v4721
      %vm4723 = vcmask 57344
      %4724 = vst.msk [vmem:[%s114] sm:$0x1] %vm4723, %v4722
      %p4725 = scmp.lt.s32.totalorder %s12, 1
      %s4726 = scalar_select %p4725, %s12, 1
      %s4727 = scalar_lea.vmem %s1, %s4726
      // Predicated region
      $region25: #{lif_sum_of_sq.1} parent=23 // pred_check
        %p4728 = pneg %p56
      $region26: #{lif_sum_of_sq.1} parent=23 // pred_check_branch
        %4730 = sbr.rel (%p4728) target = $region28
      $region27: #{lif_sum_of_sq.1} parent=23 // pred_region
        _
      $region28: #{lif_sum_of_sq.1} parent=23 // pred_fallthru
        _
    $region24: #{lif_sum_of_sq.1} parent=5 // pred_fallthru
      _
    %p4731 = scmp.le.s32.totalorder 2, %s7
    // Predicated region
    $region29: #{lif_sum_of_sq.1} parent=5 // pred_check
      %p4732 = pneg %p4731
    $region30: #{lif_sum_of_sq.1} parent=5 // pred_check_branch
      %4734 = sbr.rel (%p4732) target = $region32
    $region31: #{lif_sum_of_sq.1} parent=5 // pred_region
      %s4735 = ssub.s32 %s7, 2
      // Predicated region
      $region33: #{lif_sum_of_sq.1} parent=31 // pred_check
        %p4736 = pneg %p62
      $region34: #{lif_sum_of_sq.1} parent=31 // pred_check_branch
        %4738 = sbr.rel (%p4736) target = $region36
      $region35: #{lif_sum_of_sq.1} parent=31 // pred_region
        %p4739 = scmp.lt.s32.totalorder %s13, 1
        %s4740 = scalar_select %p4739, %s13, 1
        %s4741 = scalar_lea.vmem %s1, %s4740
      $region36: #{lif_sum_of_sq.1} parent=31 // pred_fallthru
        _
    $region32: #{lif_sum_of_sq.1} parent=5 // pred_fallthru
      _
  $region6: #{lif_sum_of_sq.1} parent=0 // loop_footer
    %s11 = sadd.s32 1, %s7
  $region7: #{lif_sum_of_sq.1} parent=0 // loop_footer_branch
    %6 = sbr.rel target = $region3
  $region8: #{lif_sum_of_sq.1} parent=0 // loop_exit
    _

</llo_original>
